<compile_context>
chip_gen: v5e
topology: v5e:2x2
jax: 0.10.0
libtpu: 0.0.40
codegen_flags: <defaults>
</compile_context>

<pallas_src>
import functools
import math

import jax
import jax.numpy as jnp
from jax.experimental import pallas as pl
from jax.experimental.pallas import tpu as pltpu

# ----------------------- model config (small, forward-consistent) ------------
B = 2             # batch
C = 3             # input channels
IMG = 32          # spatial size (scaled down from 224)
PATCH = 16        # patch size (as in vit_base_patch16)
N_PATCH = (IMG // PATCH) ** 2            # 4 patches
SEQ = N_PATCH + 1                        # +cls token = 5
PDIM = C * PATCH * PATCH                 # 768 per-patch features
DIM = 64          # embed dim (scaled down from 768)
HEADS = 4
DHEAD = DIM // HEADS                     # 16
DEPTH = 2         # transformer blocks (scaled down from 12)
MLP = 4 * DIM     # 256
NUM_OUT_FEATS = 32                       # num_output_features
NUM_CLASSES = 8                          # num_classes
LN_EPS = 1e-6                            # timm ViT LayerNorm eps

# fp32 "vector table" layout: every bias / LN gamma / token-bias vector is one row,
# padded to VEC_W lanes.  Rows 0..SEQ-1 = per-token additive bias (cls+pos / patch_b+pos);
# then 8 rows per block; then 4 final rows (lnf_g, lnf_b, lin1_b, head_b).
VEC_W = max(MLP, 3 * DIM, NUM_OUT_FEATS, NUM_CLASSES)      # 256
ROWS_PER_BLOCK = 8
N_VEC_ROWS = SEQ + DEPTH * ROWS_PER_BLOCK + 4


# ----------------------------- fused Pallas kernel ---------------------------
def _vit_fused_kernel(x_ref, pw_ref, wattn_ref, wfc1_ref, wfc2_ref, vec_ref, head_ref,
                      o_ref, *, batch):
    f32 = jnp.float32
    bf16 = jnp.bfloat16
    nt = (((1,), (1,)), ((), ()))                       # contract last dims (no .T)

    def vrow(r, width):
        return vec_ref[r:r + 1, 0:width]                # (1, width) fp32, static slice

    def layer_norm(v, g, b):
        mu = jnp.mean(v, axis=-1, keepdims=True)
        var = jnp.mean((v - mu) * (v - mu), axis=-1, keepdims=True)
        return (v - mu) * jax.lax.rsqrt(var + LN_EPS) * g + b

    # ------------- patch embed: one bf16 matmul over the whole batch ----------------
    emb = jnp.dot(x_ref[...].astype(bf16), pw_ref[...],
                  preferred_element_type=f32)            # (B*N_PATCH, DIM) fp32
    tok_bias = vec_ref[0:SEQ, 0:DIM]                     # (SEQ, DIM): cls+pos / patch_b+pos
    rows = []
    for bb in range(batch):                              # static unroll (batch tiny)
        rows.append(tok_bias[0:1])                                         # cls token row
        rows.append(emb[bb * N_PATCH:(bb + 1) * N_PATCH] + tok_bias[1:SEQ])
    xseq = jnp.concatenate(rows, axis=0)                 # (B*SEQ, DIM) fp32 residual stream

    scale = 1.0 / math.sqrt(DHEAD)

    for d in range(DEPTH):                               # static unroll: DEPTH=2
        base = SEQ + d * ROWS_PER_BLOCK
        wa = wattn_ref[d]                                # (DIM, 4*DIM) bf16
        qkv_w = wa[:, 0:3 * DIM]                         # (DIM, 3*DIM)
        proj_w = wa[:, 3 * DIM:]                         # (DIM, DIM)

        # ---------------- attention (pre-norm), fused QKV matmul --------------------
        hN = layer_norm(xseq, vrow(base + 0, DIM), vrow(base + 1, DIM))
        qkv = jnp.dot(hN.astype(bf16), qkv_w,
                      preferred_element_type=f32) + vrow(base + 2, 3 * DIM)   # (B*SEQ, 3*DIM)
        ctx_rows = []
        for bb in range(batch):                          # per-batch only for (SEQ,SEQ) scores
            r0 = bb * SEQ
            heads = []
            for hh in range(HEADS):                      # static unroll: HEADS=4
                c0 = hh * DHEAD
                q = qkv[r0:r0 + SEQ, c0:c0 + DHEAD]
                k = qkv[r0:r0 + SEQ, DIM + c0:DIM + c0 + DHEAD]
                v = qkv[r0:r0 + SEQ, 2 * DIM + c0:2 * DIM + c0 + DHEAD]
                s = jax.lax.dot_general(q, k, nt, preferred_element_type=f32) * scale
                s = s - jnp.max(s, axis=-1, keepdims=True)
                p = jnp.exp(s)
                p = p / jnp.sum(p, axis=-1, keepdims=True)       # exact softmax
                heads.append(jnp.dot(p, v, preferred_element_type=f32))     # (SEQ, DHEAD)
            ctx_rows.append(jnp.concatenate(heads, axis=-1))                # (SEQ, DIM)
        ctx = jnp.concatenate(ctx_rows, axis=0)                              # (B*SEQ, DIM)
        # one fused output projection instead of HEADS K=16 dots
        attn = jnp.dot(ctx.astype(bf16), proj_w,
                       preferred_element_type=f32) + vrow(base + 3, DIM)
        xseq = xseq + attn

        # -------------------------------- MLP (pre-norm) ----------------------------
        hN = layer_norm(xseq, vrow(base + 4, DIM), vrow(base + 5, DIM))
        h1 = jnp.dot(hN.astype(bf16), wfc1_ref[d],
                     preferred_element_type=f32) + vrow(base + 6, MLP)       # (B*SEQ, MLP)
        # TODO(synk): timm uses exact erf GELU; tanh approximation used here (close numerics).
        cg = math.sqrt(2.0 / math.pi)
        h1 = 0.5 * h1 * (1.0 + jnp.tanh(cg * (h1 + 0.044715 * h1 * h1 * h1)))
        h2 = jnp.dot(h1.astype(bf16), wfc2_ref[d],
                     preferred_element_type=f32) + vrow(base + 7, DIM)       # (B*SEQ, DIM)
        xseq = xseq + h2

    # ------------------------- final LN + cls feature + heads -----------------------
    fin = SEQ + DEPTH * ROWS_PER_BLOCK
    xseq = layer_norm(xseq, vrow(fin + 0, DIM), vrow(fin + 1, DIM))
    cls = jnp.concatenate([xseq[bb * SEQ:bb * SEQ + 1, :] for bb in range(batch)],
                          axis=0)                                            # (B, DIM)
    z = jnp.dot(cls, head_ref[0:DIM, :],
                preferred_element_type=f32) + vrow(fin + 2, NUM_OUT_FEATS)   # linear1
    z = 1.0 / (1.0 + jnp.exp(-z))                                            # exact sigmoid
    out = jnp.dot(z, head_ref[DIM:DIM + NUM_OUT_FEATS, 0:NUM_CLASSES],
                  preferred_element_type=f32) + vrow(fin + 3, NUM_CLASSES)   # output_head
    o_ref[...] = out.astype(o_ref.dtype)                                     # single store


# ----------------------------- parameter init --------------------------------
def init_params(key):
    ks = iter(jax.random.split(key, 64))
    scale = 0.02

    def dense(k, fan_in, fan_out):
        return (scale * jax.random.normal(k, (fan_in, fan_out), jnp.float32),
                jnp.zeros((fan_out,), jnp.float32))

    params = {}
    params["patch_w"], params["patch_b"] = dense(next(ks), PDIM, DIM)
    params["cls_token"] = scale * jax.random.normal(next(ks), (1, 1, DIM), jnp.float32)
    params["pos_embed"] = scale * jax.random.normal(next(ks), (1, SEQ, DIM), jnp.float32)

    blocks = []
    for _ in range(DEPTH):
        blk = {}
        blk["ln1_g"] = jnp.ones((DIM,), jnp.float32)
        blk["ln1_b"] = jnp.zeros((DIM,), jnp.float32)
        blk["qkv_w"], blk["qkv_b"] = dense(next(ks), DIM, 3 * DIM)
        blk["proj_w"], blk["proj_b"] = dense(next(ks), DIM, DIM)
        blk["ln2_g"] = jnp.ones((DIM,), jnp.float32)
        blk["ln2_b"] = jnp.zeros((DIM,), jnp.float32)
        blk["fc1_w"], blk["fc1_b"] = dense(next(ks), DIM, MLP)
        blk["fc2_w"], blk["fc2_b"] = dense(next(ks), MLP, DIM)
        blocks.append(blk)
    params["blocks"] = blocks

    params["lnf_g"] = jnp.ones((DIM,), jnp.float32)
    params["lnf_b"] = jnp.zeros((DIM,), jnp.float32)
    params["lin1_w"], params["lin1_b"] = dense(next(ks), DIM, NUM_OUT_FEATS)
    params["head_w"], params["head_b"] = dense(next(ks), NUM_OUT_FEATS, NUM_CLASSES)
    return params


# --------------------- one-time wrapper-side parameter packing ----------------
def pack_params(params):
    """Pack all weights into 6 VMEM-friendly arrays (done once, outside the jitted fwd)."""
    blocks = params["blocks"]
    bf16 = jnp.bfloat16

    def stack(name):
        return jnp.stack([blk[name] for blk in blocks], axis=0)

    # --- bf16 MXU operand weights ---
    patch_w = params["patch_w"].astype(bf16)                                  # (PDIM, DIM)
    qkv_w = stack("qkv_w")                                                    # (DEPTH, DIM, 3*DIM)
    proj_w = stack("proj_w")                                                  # (DEPTH, DIM, DIM)
    w_attn = jnp.concatenate([qkv_w, proj_w], axis=-1).astype(bf16)           # (DEPTH, DIM, 4*DIM)
    w_fc1 = stack("fc1_w").astype(bf16)                                       # (DEPTH, DIM, MLP)
    w_fc2 = stack("fc2_w").astype(bf16)                                       # (DEPTH, MLP, DIM)

    # --- fp32 vector table: token bias + all LN params / biases, rows padded to VEC_W ---
    def row(v):
        v = jnp.asarray(v, jnp.float32).reshape(1, -1)
        return jnp.pad(v, ((0, 0), (0, VEC_W - v.shape[1])))

    pos = params["pos_embed"][0]                                              # (SEQ, DIM)
    cls = params["cls_token"][0]                                              # (1, DIM)
    # row 0: cls token + pos[0]; rows 1..: patch_b + pos[s]
    tok_bias = jnp.concatenate([cls + pos[0:1], params["patch_b"][None, :] + pos[1:]], axis=0)
    rows = [row(tok_bias[s]) for s in range(SEQ)]
    for blk in blocks:
        rows += [row(blk["ln1_g"]), row(blk["ln1_b"]), row(blk["qkv_b"]), row(blk["proj_b"]),
                 row(blk["ln2_g"]), row(blk["ln2_b"]), row(blk["fc1_b"]), row(blk["fc2_b"])]
    rows += [row(params["lnf_g"]), row(params["lnf_b"]),
             row(params["lin1_b"]), row(params["head_b"])]
    vec_table = jnp.concatenate(rows, axis=0)                                 # (N_VEC_ROWS, VEC_W)
    assert vec_table.shape == (N_VEC_ROWS, VEC_W)

    # --- fp32 classifier head packed into one array: rows [0:DIM]=lin1_w, rest=head_w (padded) ---
    head_w_pad = jnp.pad(params["head_w"], ((0, 0), (0, NUM_OUT_FEATS - NUM_CLASSES)))
    head_pack = jnp.concatenate([params["lin1_w"], head_w_pad], axis=0)       # (DIM+NOF, NOF)

    return (patch_w, w_attn, w_fc1, w_fc2, vec_table, head_pack)


# ------------------------------- forward pass --------------------------------
def vit_feature_extractor(x, packed):
    # x: NCHW [B, C, IMG, IMG]
    b, c, h, w = x.shape
    hp, wp = h // PATCH, w // PATCH
    # patchify (pure layout glue); flattening order (C, Ph, Pw) matches Conv2d weights
    patches = x.reshape(b, c, hp, PATCH, wp, PATCH)
    patches = patches.transpose(0, 2, 4, 1, 3, 5).reshape(b * hp * wp, PDIM)  # (B*N_PATCH, PDIM)

    def full_spec(a):
        # whole array resident in VMEM for the single grid step
        return pl.BlockSpec(a.shape, lambda i, _n=a.ndim: (0,) * _n)

    out = pl.pallas_call(
        functools.partial(_vit_fused_kernel, batch=b),
        out_shape=jax.ShapeDtypeStruct((b, NUM_CLASSES), jnp.float32),
        grid=(1,),                                       # single step: whole batch fused
        in_specs=[full_spec(patches)] + [full_spec(a) for a in packed],
        out_specs=pl.BlockSpec((b, NUM_CLASSES), lambda i: (0, 0)),
        compiler_params=pltpu.CompilerParams(dimension_semantics=("arbitrary",)),
    )(patches, *packed)
    return out                                            # (B, NUM_CLASSES)


# ----------------------------------- main -------------------------------------
if __name__ == "__main__":
    key = jax.random.PRNGKey(0)
    k_param, k_input = jax.random.split(key)
    params = init_params(k_param)
    packed = pack_params(params)                          # one-time packing, outside jit
    # deterministic "normalized image" input, NCHW
    x = jax.random.normal(k_input, (B, C, IMG, IMG), jnp.float32)

    fwd = jax.jit(vit_feature_extractor)
    out = jax.block_until_ready(fwd(x, packed))

    assert out.shape == (B, NUM_CLASSES), out.shape
    assert bool(jnp.all(jnp.isfinite(out)))
    print("KERNEL_OK")
</pallas_src>

<mosaic_0001>
module attributes {stable_mosaic.version = 11 : i64} {
  func.func @_vit_fused_kernel(%arg0: i32, %arg1: memref<8x768xf32, #tpu.memory_space<vmem>>, %arg2: memref<768x64xbf16, #tpu.memory_space<vmem>>, %arg3: memref<2x64x256xbf16, #tpu.memory_space<vmem>>, %arg4: memref<2x64x256xbf16, #tpu.memory_space<vmem>>, %arg5: memref<2x256x64xbf16, #tpu.memory_space<vmem>>, %arg6: memref<25x256xf32, #tpu.memory_space<vmem>>, %arg7: memref<96x32xf32, #tpu.memory_space<vmem>>, %arg8: memref<2x8xf32, #tpu.memory_space<vmem>>) attributes {dimension_semantics = [#tpu.dimension_semantics<arbitrary>], iteration_bounds = array<i64: 1>, scalar_prefetch = 0 : i64, scratch_operands = 0 : i64, tpu.core_type = #tpu.core_type<tc>, window_params = [{pipeline_mode = #tpu.pipeline_mode<synchronous>, transform_indices = @transform_0, window_bounds = array<i64: 8, 768>}, {pipeline_mode = #tpu.pipeline_mode<synchronous>, transform_indices = @transform_1, window_bounds = array<i64: 768, 64>}, {pipeline_mode = #tpu.pipeline_mode<synchronous>, transform_indices = @transform_2, window_bounds = array<i64: 2, 64, 256>}, {pipeline_mode = #tpu.pipeline_mode<synchronous>, transform_indices = @transform_3, window_bounds = array<i64: 2, 64, 256>}, {pipeline_mode = #tpu.pipeline_mode<synchronous>, transform_indices = @transform_4, window_bounds = array<i64: 2, 256, 64>}, {pipeline_mode = #tpu.pipeline_mode<synchronous>, transform_indices = @transform_5, window_bounds = array<i64: 25, 256>}, {pipeline_mode = #tpu.pipeline_mode<synchronous>, transform_indices = @transform_6, window_bounds = array<i64: 96, 32>}, {pipeline_mode = #tpu.pipeline_mode<synchronous>, transform_indices = @transform_7, window_bounds = array<i64: 2, 8>}]} {
    %c0 = arith.constant 0 : index
    %c0_0 = arith.constant 0 : index
    %0 = vector.load %arg1[%c0, %c0_0] : memref<8x768xf32, #tpu.memory_space<vmem>>, vector<8x768xf32>
    %1 = arith.truncf %0 : vector<8x768xf32> to vector<8x768xbf16>
    %c0_1 = arith.constant 0 : index
    %c0_2 = arith.constant 0 : index
    %2 = vector.load %arg2[%c0_1, %c0_2] : memref<768x64xbf16, #tpu.memory_space<vmem>>, vector<768x64xbf16>
    %cst = arith.constant dense<0.000000e+00> : vector<8x64xf32>
    %3 = tpu.matmul %1, %2, %cst {dimension_numbers = #tpu.dot_dimension_numbers<[1], [0], [0], [1], [0, 0, 1, 1], [], []>} : vector<8x768xbf16>, vector<768x64xbf16>, vector<8x64xf32> -> vector<8x64xf32>
    %c0_3 = arith.constant 0 : index
    %c0_4 = arith.constant 0 : index
    %4 = vector.load %arg6[%c0_3, %c0_4] : memref<25x256xf32, #tpu.memory_space<vmem>>, vector<5x64xf32>
    %5 = vector.extract_strided_slice %4 {offsets = [0, 0], sizes = [1, 64], strides = [1, 1]} : vector<5x64xf32> to vector<1x64xf32>
    %6 = vector.extract_strided_slice %3 {offsets = [0, 0], sizes = [4, 64], strides = [1, 1]} : vector<8x64xf32> to vector<4x64xf32>
    %7 = vector.extract_strided_slice %4 {offsets = [1, 0], sizes = [4, 64], strides = [1, 1]} : vector<5x64xf32> to vector<4x64xf32>
    %8 = arith.addf %6, %7 : vector<4x64xf32>
    %9 = vector.extract_strided_slice %4 {offsets = [0, 0], sizes = [1, 64], strides = [1, 1]} : vector<5x64xf32> to vector<1x64xf32>
    %10 = vector.extract_strided_slice %3 {offsets = [4, 0], sizes = [4, 64], strides = [1, 1]} : vector<8x64xf32> to vector<4x64xf32>
    %11 = vector.extract_strided_slice %4 {offsets = [1, 0], sizes = [4, 64], strides = [1, 1]} : vector<5x64xf32> to vector<4x64xf32>
    %12 = arith.addf %10, %11 : vector<4x64xf32>
    %13 = tpu.concatenate %5, %8, %9, %12 in 0 : vector<1x64xf32>, vector<4x64xf32>, vector<1x64xf32>, vector<4x64xf32> -> vector<10x64xf32>
    %c0_5 = arith.constant 0 : index
    %c0_6 = arith.constant 0 : index
    %c0_7 = arith.constant 0 : index
    %14 = vector.load %arg3[%c0_5, %c0_6, %c0_7] : memref<2x64x256xbf16, #tpu.memory_space<vmem>>, vector<1x64x256xbf16>
    %15 = vector.shape_cast %14 : vector<1x64x256xbf16> to vector<64x256xbf16>
    %16 = vector.extract_strided_slice %15 {offsets = [0, 0], sizes = [64, 192], strides = [1, 1]} : vector<64x256xbf16> to vector<64x192xbf16>
    %17 = vector.extract_strided_slice %15 {offsets = [0, 192], sizes = [64, 64], strides = [1, 1]} : vector<64x256xbf16> to vector<64x64xbf16>
    %c5 = arith.constant 5 : index
    %c0_8 = arith.constant 0 : index
    %18 = vector.load %arg6[%c5, %c0_8] : memref<25x256xf32, #tpu.memory_space<vmem>>, vector<1x64xf32>
    %c6 = arith.constant 6 : index
    %c0_9 = arith.constant 0 : index
    %19 = vector.load %arg6[%c6, %c0_9] : memref<25x256xf32, #tpu.memory_space<vmem>>, vector<1x64xf32>
    %cst_10 = arith.constant dense<0.000000e+00> : vector<10xf32>
    %20 = vector.multi_reduction <add>, %13, %cst_10 [1] : vector<10x64xf32> to vector<10xf32>
    %21 = vector.shape_cast %20 : vector<10xf32> to vector<10x1xf32>
    %cst_11 = arith.constant 6.400000e+01 : f32
    %22 = vector.broadcast %cst_11 : f32 to vector<10x1xf32>
    %23 = arith.divf %21, %22 : vector<10x1xf32>
    %24 = vector.broadcast %23 : vector<10x1xf32> to vector<10x64xf32>
    %25 = arith.subf %13, %24 : vector<10x64xf32>
    %26 = vector.broadcast %23 : vector<10x1xf32> to vector<10x64xf32>
    %27 = arith.subf %13, %26 : vector<10x64xf32>
    %28 = arith.mulf %25, %27 : vector<10x64xf32>
    %cst_12 = arith.constant dense<0.000000e+00> : vector<10xf32>
    %29 = vector.multi_reduction <add>, %28, %cst_12 [1] : vector<10x64xf32> to vector<10xf32>
    %30 = vector.shape_cast %29 : vector<10xf32> to vector<10x1xf32>
    %cst_13 = arith.constant 6.400000e+01 : f32
    %31 = vector.broadcast %cst_13 : f32 to vector<10x1xf32>
    %32 = arith.divf %30, %31 : vector<10x1xf32>
    %33 = vector.broadcast %23 : vector<10x1xf32> to vector<10x64xf32>
    %34 = arith.subf %13, %33 : vector<10x64xf32>
    %cst_14 = arith.constant 9.99999997E-7 : f32
    %35 = vector.broadcast %cst_14 : f32 to vector<10x1xf32>
    %36 = arith.addf %32, %35 : vector<10x1xf32>
    %37 = math.rsqrt %36 : vector<10x1xf32>
    %38 = vector.broadcast %37 : vector<10x1xf32> to vector<10x64xf32>
    %39 = arith.mulf %34, %38 : vector<10x64xf32>
    %40 = vector.broadcast %18 : vector<1x64xf32> to vector<10x64xf32>
    %41 = arith.mulf %39, %40 : vector<10x64xf32>
    %42 = vector.broadcast %19 : vector<1x64xf32> to vector<10x64xf32>
    %43 = arith.addf %41, %42 : vector<10x64xf32>
    %44 = arith.truncf %43 : vector<10x64xf32> to vector<10x64xbf16>
    %cst_15 = arith.constant dense<0.000000e+00> : vector<10x192xf32>
    %45 = tpu.matmul %44, %16, %cst_15 {dimension_numbers = #tpu.dot_dimension_numbers<[1], [0], [0], [1], [0, 0, 1, 1], [], []>} : vector<10x64xbf16>, vector<64x192xbf16>, vector<10x192xf32> -> vector<10x192xf32>
    %c7 = arith.constant 7 : index
    %c0_16 = arith.constant 0 : index
    %46 = vector.load %arg6[%c7, %c0_16] : memref<25x256xf32, #tpu.memory_space<vmem>>, vector<1x192xf32>
    %47 = vector.broadcast %46 : vector<1x192xf32> to vector<10x192xf32>
    %48 = arith.addf %45, %47 : vector<10x192xf32>
    %49 = vector.extract_strided_slice %48 {offsets = [0, 0], sizes = [5, 16], strides = [1, 1]} : vector<10x192xf32> to vector<5x16xf32>
    %50 = vector.extract_strided_slice %48 {offsets = [0, 64], sizes = [5, 16], strides = [1, 1]} : vector<10x192xf32> to vector<5x16xf32>
    %51 = vector.extract_strided_slice %48 {offsets = [0, 128], sizes = [5, 16], strides = [1, 1]} : vector<10x192xf32> to vector<5x16xf32>
    %cst_17 = arith.constant dense<0.000000e+00> : vector<5x5xf32>
    %52 = tpu.matmul %49, %50, %cst_17 {dimension_numbers = #tpu.dot_dimension_numbers<[1], [1], [0], [0], [0, 0, 1, 0], [], []>} : vector<5x16xf32>, vector<5x16xf32>, vector<5x5xf32> -> vector<5x5xf32>
    %cst_18 = arith.constant 2.500000e-01 : f32
    %53 = vector.broadcast %cst_18 : f32 to vector<5x5xf32>
    %54 = arith.mulf %52, %53 : vector<5x5xf32>
    %cst_19 = arith.constant dense<0xFF800000> : vector<5xf32>
    %55 = vector.multi_reduction <maximumf>, %54, %cst_19 [1] : vector<5x5xf32> to vector<5xf32>
    %56 = vector.shape_cast %55 : vector<5xf32> to vector<5x1xf32>
    %57 = vector.broadcast %56 : vector<5x1xf32> to vector<5x5xf32>
    %58 = arith.subf %54, %57 : vector<5x5xf32>
    %59 = math.exp %58 : vector<5x5xf32>
    %cst_20 = arith.constant dense<0.000000e+00> : vector<5xf32>
    %60 = vector.multi_reduction <add>, %59, %cst_20 [1] : vector<5x5xf32> to vector<5xf32>
    %61 = vector.shape_cast %60 : vector<5xf32> to vector<5x1xf32>
    %62 = vector.broadcast %61 : vector<5x1xf32> to vector<5x5xf32>
    %63 = arith.divf %59, %62 : vector<5x5xf32>
    %cst_21 = arith.constant dense<0.000000e+00> : vector<5x16xf32>
    %64 = tpu.matmul %63, %51, %cst_21 {dimension_numbers = #tpu.dot_dimension_numbers<[1], [0], [0], [1], [0, 0, 1, 1], [], []>} : vector<5x5xf32>, vector<5x16xf32>, vector<5x16xf32> -> vector<5x16xf32>
    %65 = vector.extract_strided_slice %48 {offsets = [0, 16], sizes = [5, 16], strides = [1, 1]} : vector<10x192xf32> to vector<5x16xf32>
    %66 = vector.extract_strided_slice %48 {offsets = [0, 80], sizes = [5, 16], strides = [1, 1]} : vector<10x192xf32> to vector<5x16xf32>
    %67 = vector.extract_strided_slice %48 {offsets = [0, 144], sizes = [5, 16], strides = [1, 1]} : vector<10x192xf32> to vector<5x16xf32>
    %cst_22 = arith.constant dense<0.000000e+00> : vector<5x5xf32>
    %68 = tpu.matmul %65, %66, %cst_22 {dimension_numbers = #tpu.dot_dimension_numbers<[1], [1], [0], [0], [0, 0, 1, 0], [], []>} : vector<5x16xf32>, vector<5x16xf32>, vector<5x5xf32> -> vector<5x5xf32>
    %cst_23 = arith.constant 2.500000e-01 : f32
    %69 = vector.broadcast %cst_23 : f32 to vector<5x5xf32>
    %70 = arith.mulf %68, %69 : vector<5x5xf32>
    %cst_24 = arith.constant dense<0xFF800000> : vector<5xf32>
    %71 = vector.multi_reduction <maximumf>, %70, %cst_24 [1] : vector<5x5xf32> to vector<5xf32>
    %72 = vector.shape_cast %71 : vector<5xf32> to vector<5x1xf32>
    %73 = vector.broadcast %72 : vector<5x1xf32> to vector<5x5xf32>
    %74 = arith.subf %70, %73 : vector<5x5xf32>
    %75 = math.exp %74 : vector<5x5xf32>
    %cst_25 = arith.constant dense<0.000000e+00> : vector<5xf32>
    %76 = vector.multi_reduction <add>, %75, %cst_25 [1] : vector<5x5xf32> to vector<5xf32>
    %77 = vector.shape_cast %76 : vector<5xf32> to vector<5x1xf32>
    %78 = vector.broadcast %77 : vector<5x1xf32> to vector<5x5xf32>
    %79 = arith.divf %75, %78 : vector<5x5xf32>
    %cst_26 = arith.constant dense<0.000000e+00> : vector<5x16xf32>
    %80 = tpu.matmul %79, %67, %cst_26 {dimension_numbers = #tpu.dot_dimension_numbers<[1], [0], [0], [1], [0, 0, 1, 1], [], []>} : vector<5x5xf32>, vector<5x16xf32>, vector<5x16xf32> -> vector<5x16xf32>
    %81 = vector.extract_strided_slice %48 {offsets = [0, 32], sizes = [5, 16], strides = [1, 1]} : vector<10x192xf32> to vector<5x16xf32>
    %82 = vector.extract_strided_slice %48 {offsets = [0, 96], sizes = [5, 16], strides = [1, 1]} : vector<10x192xf32> to vector<5x16xf32>
    %83 = vector.extract_strided_slice %48 {offsets = [0, 160], sizes = [5, 16], strides = [1, 1]} : vector<10x192xf32> to vector<5x16xf32>
    %cst_27 = arith.constant dense<0.000000e+00> : vector<5x5xf32>
    %84 = tpu.matmul %81, %82, %cst_27 {dimension_numbers = #tpu.dot_dimension_numbers<[1], [1], [0], [0], [0, 0, 1, 0], [], []>} : vector<5x16xf32>, vector<5x16xf32>, vector<5x5xf32> -> vector<5x5xf32>
    %cst_28 = arith.constant 2.500000e-01 : f32
    %85 = vector.broadcast %cst_28 : f32 to vector<5x5xf32>
    %86 = arith.mulf %84, %85 : vector<5x5xf32>
    %cst_29 = arith.constant dense<0xFF800000> : vector<5xf32>
    %87 = vector.multi_reduction <maximumf>, %86, %cst_29 [1] : vector<5x5xf32> to vector<5xf32>
    %88 = vector.shape_cast %87 : vector<5xf32> to vector<5x1xf32>
    %89 = vector.broadcast %88 : vector<5x1xf32> to vector<5x5xf32>
    %90 = arith.subf %86, %89 : vector<5x5xf32>
    %91 = math.exp %90 : vector<5x5xf32>
    %cst_30 = arith.constant dense<0.000000e+00> : vector<5xf32>
    %92 = vector.multi_reduction <add>, %91, %cst_30 [1] : vector<5x5xf32> to vector<5xf32>
    %93 = vector.shape_cast %92 : vector<5xf32> to vector<5x1xf32>
    %94 = vector.broadcast %93 : vector<5x1xf32> to vector<5x5xf32>
    %95 = arith.divf %91, %94 : vector<5x5xf32>
    %cst_31 = arith.constant dense<0.000000e+00> : vector<5x16xf32>
    %96 = tpu.matmul %95, %83, %cst_31 {dimension_numbers = #tpu.dot_dimension_numbers<[1], [0], [0], [1], [0, 0, 1, 1], [], []>} : vector<5x5xf32>, vector<5x16xf32>, vector<5x16xf32> -> vector<5x16xf32>
    %97 = vector.extract_strided_slice %48 {offsets = [0, 48], sizes = [5, 16], strides = [1, 1]} : vector<10x192xf32> to vector<5x16xf32>
    %98 = vector.extract_strided_slice %48 {offsets = [0, 112], sizes = [5, 16], strides = [1, 1]} : vector<10x192xf32> to vector<5x16xf32>
    %99 = vector.extract_strided_slice %48 {offsets = [0, 176], sizes = [5, 16], strides = [1, 1]} : vector<10x192xf32> to vector<5x16xf32>
    %cst_32 = arith.constant dense<0.000000e+00> : vector<5x5xf32>
    %100 = tpu.matmul %97, %98, %cst_32 {dimension_numbers = #tpu.dot_dimension_numbers<[1], [1], [0], [0], [0, 0, 1, 0], [], []>} : vector<5x16xf32>, vector<5x16xf32>, vector<5x5xf32> -> vector<5x5xf32>
    %cst_33 = arith.constant 2.500000e-01 : f32
    %101 = vector.broadcast %cst_33 : f32 to vector<5x5xf32>
    %102 = arith.mulf %100, %101 : vector<5x5xf32>
    %cst_34 = arith.constant dense<0xFF800000> : vector<5xf32>
    %103 = vector.multi_reduction <maximumf>, %102, %cst_34 [1] : vector<5x5xf32> to vector<5xf32>
    %104 = vector.shape_cast %103 : vector<5xf32> to vector<5x1xf32>
    %105 = vector.broadcast %104 : vector<5x1xf32> to vector<5x5xf32>
    %106 = arith.subf %102, %105 : vector<5x5xf32>
    %107 = math.exp %106 : vector<5x5xf32>
    %cst_35 = arith.constant dense<0.000000e+00> : vector<5xf32>
    %108 = vector.multi_reduction <add>, %107, %cst_35 [1] : vector<5x5xf32> to vector<5xf32>
    %109 = vector.shape_cast %108 : vector<5xf32> to vector<5x1xf32>
    %110 = vector.broadcast %109 : vector<5x1xf32> to vector<5x5xf32>
    %111 = arith.divf %107, %110 : vector<5x5xf32>
    %cst_36 = arith.constant dense<0.000000e+00> : vector<5x16xf32>
    %112 = tpu.matmul %111, %99, %cst_36 {dimension_numbers = #tpu.dot_dimension_numbers<[1], [0], [0], [1], [0, 0, 1, 1], [], []>} : vector<5x5xf32>, vector<5x16xf32>, vector<5x16xf32> -> vector<5x16xf32>
    %113 = tpu.concatenate %64, %80, %96, %112 in 1 : vector<5x16xf32>, vector<5x16xf32>, vector<5x16xf32>, vector<5x16xf32> -> vector<5x64xf32>
    %114 = vector.extract_strided_slice %48 {offsets = [5, 0], sizes = [5, 16], strides = [1, 1]} : vector<10x192xf32> to vector<5x16xf32>
    %115 = vector.extract_strided_slice %48 {offsets = [5, 64], sizes = [5, 16], strides = [1, 1]} : vector<10x192xf32> to vector<5x16xf32>
    %116 = vector.extract_strided_slice %48 {offsets = [5, 128], sizes = [5, 16], strides = [1, 1]} : vector<10x192xf32> to vector<5x16xf32>
    %cst_37 = arith.constant dense<0.000000e+00> : vector<5x5xf32>
    %117 = tpu.matmul %114, %115, %cst_37 {dimension_numbers = #tpu.dot_dimension_numbers<[1], [1], [0], [0], [0, 0, 1, 0], [], []>} : vector<5x16xf32>, vector<5x16xf32>, vector<5x5xf32> -> vector<5x5xf32>
    %cst_38 = arith.constant 2.500000e-01 : f32
    %118 = vector.broadcast %cst_38 : f32 to vector<5x5xf32>
    %119 = arith.mulf %117, %118 : vector<5x5xf32>
    %cst_39 = arith.constant dense<0xFF800000> : vector<5xf32>
    %120 = vector.multi_reduction <maximumf>, %119, %cst_39 [1] : vector<5x5xf32> to vector<5xf32>
    %121 = vector.shape_cast %120 : vector<5xf32> to vector<5x1xf32>
    %122 = vector.broadcast %121 : vector<5x1xf32> to vector<5x5xf32>
    %123 = arith.subf %119, %122 : vector<5x5xf32>
    %124 = math.exp %123 : vector<5x5xf32>
    %cst_40 = arith.constant dense<0.000000e+00> : vector<5xf32>
    %125 = vector.multi_reduction <add>, %124, %cst_40 [1] : vector<5x5xf32> to vector<5xf32>
    %126 = vector.shape_cast %125 : vector<5xf32> to vector<5x1xf32>
    %127 = vector.broadcast %126 : vector<5x1xf32> to vector<5x5xf32>
    %128 = arith.divf %124, %127 : vector<5x5xf32>
    %cst_41 = arith.constant dense<0.000000e+00> : vector<5x16xf32>
    %129 = tpu.matmul %128, %116, %cst_41 {dimension_numbers = #tpu.dot_dimension_numbers<[1], [0], [0], [1], [0, 0, 1, 1], [], []>} : vector<5x5xf32>, vector<5x16xf32>, vector<5x16xf32> -> vector<5x16xf32>
    %130 = vector.extract_strided_slice %48 {offsets = [5, 16], sizes = [5, 16], strides = [1, 1]} : vector<10x192xf32> to vector<5x16xf32>
    %131 = vector.extract_strided_slice %48 {offsets = [5, 80], sizes = [5, 16], strides = [1, 1]} : vector<10x192xf32> to vector<5x16xf32>
    %132 = vector.extract_strided_slice %48 {offsets = [5, 144], sizes = [5, 16], strides = [1, 1]} : vector<10x192xf32> to vector<5x16xf32>
    %cst_42 = arith.constant dense<0.000000e+00> : vector<5x5xf32>
    %133 = tpu.matmul %130, %131, %cst_42 {dimension_numbers = #tpu.dot_dimension_numbers<[1], [1], [0], [0], [0, 0, 1, 0], [], []>} : vector<5x16xf32>, vector<5x16xf32>, vector<5x5xf32> -> vector<5x5xf32>
    %cst_43 = arith.constant 2.500000e-01 : f32
    %134 = vector.broadcast %cst_43 : f32 to vector<5x5xf32>
    %135 = arith.mulf %133, %134 : vector<5x5xf32>
    %cst_44 = arith.constant dense<0xFF800000> : vector<5xf32>
    %136 = vector.multi_reduction <maximumf>, %135, %cst_44 [1] : vector<5x5xf32> to vector<5xf32>
    %137 = vector.shape_cast %136 : vector<5xf32> to vector<5x1xf32>
    %138 = vector.broadcast %137 : vector<5x1xf32> to vector<5x5xf32>
    %139 = arith.subf %135, %138 : vector<5x5xf32>
    %140 = math.exp %139 : vector<5x5xf32>
    %cst_45 = arith.constant dense<0.000000e+00> : vector<5xf32>
    %141 = vector.multi_reduction <add>, %140, %cst_45 [1] : vector<5x5xf32> to vector<5xf32>
    %142 = vector.shape_cast %141 : vector<5xf32> to vector<5x1xf32>
    %143 = vector.broadcast %142 : vector<5x1xf32> to vector<5x5xf32>
    %144 = arith.divf %140, %143 : vector<5x5xf32>
    %cst_46 = arith.constant dense<0.000000e+00> : vector<5x16xf32>
    %145 = tpu.matmul %144, %132, %cst_46 {dimension_numbers = #tpu.dot_dimension_numbers<[1], [0], [0], [1], [0, 0, 1, 1], [], []>} : vector<5x5xf32>, vector<5x16xf32>, vector<5x16xf32> -> vector<5x16xf32>
    %146 = vector.extract_strided_slice %48 {offsets = [5, 32], sizes = [5, 16], strides = [1, 1]} : vector<10x192xf32> to vector<5x16xf32>
    %147 = vector.extract_strided_slice %48 {offsets = [5, 96], sizes = [5, 16], strides = [1, 1]} : vector<10x192xf32> to vector<5x16xf32>
    %148 = vector.extract_strided_slice %48 {offsets = [5, 160], sizes = [5, 16], strides = [1, 1]} : vector<10x192xf32> to vector<5x16xf32>
    %cst_47 = arith.constant dense<0.000000e+00> : vector<5x5xf32>
    %149 = tpu.matmul %146, %147, %cst_47 {dimension_numbers = #tpu.dot_dimension_numbers<[1], [1], [0], [0], [0, 0, 1, 0], [], []>} : vector<5x16xf32>, vector<5x16xf32>, vector<5x5xf32> -> vector<5x5xf32>
    %cst_48 = arith.constant 2.500000e-01 : f32
    %150 = vector.broadcast %cst_48 : f32 to vector<5x5xf32>
    %151 = arith.mulf %149, %150 : vector<5x5xf32>
    %cst_49 = arith.constant dense<0xFF800000> : vector<5xf32>
    %152 = vector.multi_reduction <maximumf>, %151, %cst_49 [1] : vector<5x5xf32> to vector<5xf32>
    %153 = vector.shape_cast %152 : vector<5xf32> to vector<5x1xf32>
    %154 = vector.broadcast %153 : vector<5x1xf32> to vector<5x5xf32>
    %155 = arith.subf %151, %154 : vector<5x5xf32>
    %156 = math.exp %155 : vector<5x5xf32>
    %cst_50 = arith.constant dense<0.000000e+00> : vector<5xf32>
    %157 = vector.multi_reduction <add>, %156, %cst_50 [1] : vector<5x5xf32> to vector<5xf32>
    %158 = vector.shape_cast %157 : vector<5xf32> to vector<5x1xf32>
    %159 = vector.broadcast %158 : vector<5x1xf32> to vector<5x5xf32>
    %160 = arith.divf %156, %159 : vector<5x5xf32>
    %cst_51 = arith.constant dense<0.000000e+00> : vector<5x16xf32>
    %161 = tpu.matmul %160, %148, %cst_51 {dimension_numbers = #tpu.dot_dimension_numbers<[1], [0], [0], [1], [0, 0, 1, 1], [], []>} : vector<5x5xf32>, vector<5x16xf32>, vector<5x16xf32> -> vector<5x16xf32>
    %162 = vector.extract_strided_slice %48 {offsets = [5, 48], sizes = [5, 16], strides = [1, 1]} : vector<10x192xf32> to vector<5x16xf32>
    %163 = vector.extract_strided_slice %48 {offsets = [5, 112], sizes = [5, 16], strides = [1, 1]} : vector<10x192xf32> to vector<5x16xf32>
    %164 = vector.extract_strided_slice %48 {offsets = [5, 176], sizes = [5, 16], strides = [1, 1]} : vector<10x192xf32> to vector<5x16xf32>
    %cst_52 = arith.constant dense<0.000000e+00> : vector<5x5xf32>
    %165 = tpu.matmul %162, %163, %cst_52 {dimension_numbers = #tpu.dot_dimension_numbers<[1], [1], [0], [0], [0, 0, 1, 0], [], []>} : vector<5x16xf32>, vector<5x16xf32>, vector<5x5xf32> -> vector<5x5xf32>
    %cst_53 = arith.constant 2.500000e-01 : f32
    %166 = vector.broadcast %cst_53 : f32 to vector<5x5xf32>
    %167 = arith.mulf %165, %166 : vector<5x5xf32>
    %cst_54 = arith.constant dense<0xFF800000> : vector<5xf32>
    %168 = vector.multi_reduction <maximumf>, %167, %cst_54 [1] : vector<5x5xf32> to vector<5xf32>
    %169 = vector.shape_cast %168 : vector<5xf32> to vector<5x1xf32>
    %170 = vector.broadcast %169 : vector<5x1xf32> to vector<5x5xf32>
    %171 = arith.subf %167, %170 : vector<5x5xf32>
    %172 = math.exp %171 : vector<5x5xf32>
    %cst_55 = arith.constant dense<0.000000e+00> : vector<5xf32>
    %173 = vector.multi_reduction <add>, %172, %cst_55 [1] : vector<5x5xf32> to vector<5xf32>
    %174 = vector.shape_cast %173 : vector<5xf32> to vector<5x1xf32>
    %175 = vector.broadcast %174 : vector<5x1xf32> to vector<5x5xf32>
    %176 = arith.divf %172, %175 : vector<5x5xf32>
    %cst_56 = arith.constant dense<0.000000e+00> : vector<5x16xf32>
    %177 = tpu.matmul %176, %164, %cst_56 {dimension_numbers = #tpu.dot_dimension_numbers<[1], [0], [0], [1], [0, 0, 1, 1], [], []>} : vector<5x5xf32>, vector<5x16xf32>, vector<5x16xf32> -> vector<5x16xf32>
    %178 = tpu.concatenate %129, %145, %161, %177 in 1 : vector<5x16xf32>, vector<5x16xf32>, vector<5x16xf32>, vector<5x16xf32> -> vector<5x64xf32>
    %179 = tpu.concatenate %113, %178 in 0 : vector<5x64xf32>, vector<5x64xf32> -> vector<10x64xf32>
    %180 = arith.truncf %179 : vector<10x64xf32> to vector<10x64xbf16>
    %cst_57 = arith.constant dense<0.000000e+00> : vector<10x64xf32>
    %181 = tpu.matmul %180, %17, %cst_57 {dimension_numbers = #tpu.dot_dimension_numbers<[1], [0], [0], [1], [0, 0, 1, 1], [], []>} : vector<10x64xbf16>, vector<64x64xbf16>, vector<10x64xf32> -> vector<10x64xf32>
    %c8 = arith.constant 8 : index
    %c0_58 = arith.constant 0 : index
    %182 = vector.load %arg6[%c8, %c0_58] : memref<25x256xf32, #tpu.memory_space<vmem>>, vector<1x64xf32>
    %183 = vector.broadcast %182 : vector<1x64xf32> to vector<10x64xf32>
    %184 = arith.addf %181, %183 : vector<10x64xf32>
    %185 = arith.addf %13, %184 : vector<10x64xf32>
    %c9 = arith.constant 9 : index
    %c0_59 = arith.constant 0 : index
    %186 = vector.load %arg6[%c9, %c0_59] : memref<25x256xf32, #tpu.memory_space<vmem>>, vector<1x64xf32>
    %c10 = arith.constant 10 : index
    %c0_60 = arith.constant 0 : index
    %187 = vector.load %arg6[%c10, %c0_60] : memref<25x256xf32, #tpu.memory_space<vmem>>, vector<1x64xf32>
    %cst_61 = arith.constant dense<0.000000e+00> : vector<10xf32>
    %188 = vector.multi_reduction <add>, %185, %cst_61 [1] : vector<10x64xf32> to vector<10xf32>
    %189 = vector.shape_cast %188 : vector<10xf32> to vector<10x1xf32>
    %cst_62 = arith.constant 6.400000e+01 : f32
    %190 = vector.broadcast %cst_62 : f32 to vector<10x1xf32>
    %191 = arith.divf %189, %190 : vector<10x1xf32>
    %192 = vector.broadcast %191 : vector<10x1xf32> to vector<10x64xf32>
    %193 = arith.subf %185, %192 : vector<10x64xf32>
    %194 = vector.broadcast %191 : vector<10x1xf32> to vector<10x64xf32>
    %195 = arith.subf %185, %194 : vector<10x64xf32>
    %196 = arith.mulf %193, %195 : vector<10x64xf32>
    %cst_63 = arith.constant dense<0.000000e+00> : vector<10xf32>
    %197 = vector.multi_reduction <add>, %196, %cst_63 [1] : vector<10x64xf32> to vector<10xf32>
    %198 = vector.shape_cast %197 : vector<10xf32> to vector<10x1xf32>
    %cst_64 = arith.constant 6.400000e+01 : f32
    %199 = vector.broadcast %cst_64 : f32 to vector<10x1xf32>
    %200 = arith.divf %198, %199 : vector<10x1xf32>
    %201 = vector.broadcast %191 : vector<10x1xf32> to vector<10x64xf32>
    %202 = arith.subf %185, %201 : vector<10x64xf32>
    %cst_65 = arith.constant 9.99999997E-7 : f32
    %203 = vector.broadcast %cst_65 : f32 to vector<10x1xf32>
    %204 = arith.addf %200, %203 : vector<10x1xf32>
    %205 = math.rsqrt %204 : vector<10x1xf32>
    %206 = vector.broadcast %205 : vector<10x1xf32> to vector<10x64xf32>
    %207 = arith.mulf %202, %206 : vector<10x64xf32>
    %208 = vector.broadcast %186 : vector<1x64xf32> to vector<10x64xf32>
    %209 = arith.mulf %207, %208 : vector<10x64xf32>
    %210 = vector.broadcast %187 : vector<1x64xf32> to vector<10x64xf32>
    %211 = arith.addf %209, %210 : vector<10x64xf32>
    %212 = arith.truncf %211 : vector<10x64xf32> to vector<10x64xbf16>
    %c0_66 = arith.constant 0 : index
    %c0_67 = arith.constant 0 : index
    %c0_68 = arith.constant 0 : index
    %213 = vector.load %arg4[%c0_66, %c0_67, %c0_68] : memref<2x64x256xbf16, #tpu.memory_space<vmem>>, vector<1x64x256xbf16>
    %214 = vector.shape_cast %213 : vector<1x64x256xbf16> to vector<64x256xbf16>
    %cst_69 = arith.constant dense<0.000000e+00> : vector<10x256xf32>
    %215 = tpu.matmul %212, %214, %cst_69 {dimension_numbers = #tpu.dot_dimension_numbers<[1], [0], [0], [1], [0, 0, 1, 1], [], []>} : vector<10x64xbf16>, vector<64x256xbf16>, vector<10x256xf32> -> vector<10x256xf32>
    %c11 = arith.constant 11 : index
    %c0_70 = arith.constant 0 : index
    %216 = vector.load %arg6[%c11, %c0_70] : memref<25x256xf32, #tpu.memory_space<vmem>>, vector<1x256xf32>
    %217 = vector.broadcast %216 : vector<1x256xf32> to vector<10x256xf32>
    %218 = arith.addf %215, %217 : vector<10x256xf32>
    %cst_71 = arith.constant 5.000000e-01 : f32
    %219 = vector.broadcast %cst_71 : f32 to vector<10x256xf32>
    %220 = arith.mulf %219, %218 : vector<10x256xf32>
    %cst_72 = arith.constant 4.471500e-02 : f32
    %221 = vector.broadcast %cst_72 : f32 to vector<10x256xf32>
    %222 = arith.mulf %221, %218 : vector<10x256xf32>
    %223 = arith.mulf %222, %218 : vector<10x256xf32>
    %224 = arith.mulf %223, %218 : vector<10x256xf32>
    %225 = arith.addf %218, %224 : vector<10x256xf32>
    %cst_73 = arith.constant 0.797884583 : f32
    %226 = vector.broadcast %cst_73 : f32 to vector<10x256xf32>
    %227 = arith.mulf %226, %225 : vector<10x256xf32>
    %228 = math.tanh %227 : vector<10x256xf32>
    %cst_74 = arith.constant 1.000000e+00 : f32
    %229 = vector.broadcast %cst_74 : f32 to vector<10x256xf32>
    %230 = arith.addf %229, %228 : vector<10x256xf32>
    %231 = arith.mulf %220, %230 : vector<10x256xf32>
    %232 = arith.truncf %231 : vector<10x256xf32> to vector<10x256xbf16>
    %c0_75 = arith.constant 0 : index
    %c0_76 = arith.constant 0 : index
    %c0_77 = arith.constant 0 : index
    %233 = vector.load %arg5[%c0_75, %c0_76, %c0_77] : memref<2x256x64xbf16, #tpu.memory_space<vmem>>, vector<1x256x64xbf16>
    %234 = vector.shape_cast %233 : vector<1x256x64xbf16> to vector<256x64xbf16>
    %cst_78 = arith.constant dense<0.000000e+00> : vector<10x64xf32>
    %235 = tpu.matmul %232, %234, %cst_78 {dimension_numbers = #tpu.dot_dimension_numbers<[1], [0], [0], [1], [0, 0, 1, 1], [], []>} : vector<10x256xbf16>, vector<256x64xbf16>, vector<10x64xf32> -> vector<10x64xf32>
    %c12 = arith.constant 12 : index
    %c0_79 = arith.constant 0 : index
    %236 = vector.load %arg6[%c12, %c0_79] : memref<25x256xf32, #tpu.memory_space<vmem>>, vector<1x64xf32>
    %237 = vector.broadcast %236 : vector<1x64xf32> to vector<10x64xf32>
    %238 = arith.addf %235, %237 : vector<10x64xf32>
    %239 = arith.addf %185, %238 : vector<10x64xf32>
    %c1 = arith.constant 1 : index
    %c0_80 = arith.constant 0 : index
    %c0_81 = arith.constant 0 : index
    %240 = vector.load %arg3[%c1, %c0_80, %c0_81] : memref<2x64x256xbf16, #tpu.memory_space<vmem>>, vector<1x64x256xbf16>
    %241 = vector.shape_cast %240 : vector<1x64x256xbf16> to vector<64x256xbf16>
    %242 = vector.extract_strided_slice %241 {offsets = [0, 0], sizes = [64, 192], strides = [1, 1]} : vector<64x256xbf16> to vector<64x192xbf16>
    %243 = vector.extract_strided_slice %241 {offsets = [0, 192], sizes = [64, 64], strides = [1, 1]} : vector<64x256xbf16> to vector<64x64xbf16>
    %c13 = arith.constant 13 : index
    %c0_82 = arith.constant 0 : index
    %244 = vector.load %arg6[%c13, %c0_82] : memref<25x256xf32, #tpu.memory_space<vmem>>, vector<1x64xf32>
    %c14 = arith.constant 14 : index
    %c0_83 = arith.constant 0 : index
    %245 = vector.load %arg6[%c14, %c0_83] : memref<25x256xf32, #tpu.memory_space<vmem>>, vector<1x64xf32>
    %cst_84 = arith.constant dense<0.000000e+00> : vector<10xf32>
    %246 = vector.multi_reduction <add>, %239, %cst_84 [1] : vector<10x64xf32> to vector<10xf32>
    %247 = vector.shape_cast %246 : vector<10xf32> to vector<10x1xf32>
    %cst_85 = arith.constant 6.400000e+01 : f32
    %248 = vector.broadcast %cst_85 : f32 to vector<10x1xf32>
    %249 = arith.divf %247, %248 : vector<10x1xf32>
    %250 = vector.broadcast %249 : vector<10x1xf32> to vector<10x64xf32>
    %251 = arith.subf %239, %250 : vector<10x64xf32>
    %252 = vector.broadcast %249 : vector<10x1xf32> to vector<10x64xf32>
    %253 = arith.subf %239, %252 : vector<10x64xf32>
    %254 = arith.mulf %251, %253 : vector<10x64xf32>
    %cst_86 = arith.constant dense<0.000000e+00> : vector<10xf32>
    %255 = vector.multi_reduction <add>, %254, %cst_86 [1] : vector<10x64xf32> to vector<10xf32>
    %256 = vector.shape_cast %255 : vector<10xf32> to vector<10x1xf32>
    %cst_87 = arith.constant 6.400000e+01 : f32
    %257 = vector.broadcast %cst_87 : f32 to vector<10x1xf32>
    %258 = arith.divf %256, %257 : vector<10x1xf32>
    %259 = vector.broadcast %249 : vector<10x1xf32> to vector<10x64xf32>
    %260 = arith.subf %239, %259 : vector<10x64xf32>
    %cst_88 = arith.constant 9.99999997E-7 : f32
    %261 = vector.broadcast %cst_88 : f32 to vector<10x1xf32>
    %262 = arith.addf %258, %261 : vector<10x1xf32>
    %263 = math.rsqrt %262 : vector<10x1xf32>
    %264 = vector.broadcast %263 : vector<10x1xf32> to vector<10x64xf32>
    %265 = arith.mulf %260, %264 : vector<10x64xf32>
    %266 = vector.broadcast %244 : vector<1x64xf32> to vector<10x64xf32>
    %267 = arith.mulf %265, %266 : vector<10x64xf32>
    %268 = vector.broadcast %245 : vector<1x64xf32> to vector<10x64xf32>
    %269 = arith.addf %267, %268 : vector<10x64xf32>
    %270 = arith.truncf %269 : vector<10x64xf32> to vector<10x64xbf16>
    %cst_89 = arith.constant dense<0.000000e+00> : vector<10x192xf32>
    %271 = tpu.matmul %270, %242, %cst_89 {dimension_numbers = #tpu.dot_dimension_numbers<[1], [0], [0], [1], [0, 0, 1, 1], [], []>} : vector<10x64xbf16>, vector<64x192xbf16>, vector<10x192xf32> -> vector<10x192xf32>
    %c15 = arith.constant 15 : index
    %c0_90 = arith.constant 0 : index
    %272 = vector.load %arg6[%c15, %c0_90] : memref<25x256xf32, #tpu.memory_space<vmem>>, vector<1x192xf32>
    %273 = vector.broadcast %272 : vector<1x192xf32> to vector<10x192xf32>
    %274 = arith.addf %271, %273 : vector<10x192xf32>
    %275 = vector.extract_strided_slice %274 {offsets = [0, 0], sizes = [5, 16], strides = [1, 1]} : vector<10x192xf32> to vector<5x16xf32>
    %276 = vector.extract_strided_slice %274 {offsets = [0, 64], sizes = [5, 16], strides = [1, 1]} : vector<10x192xf32> to vector<5x16xf32>
    %277 = vector.extract_strided_slice %274 {offsets = [0, 128], sizes = [5, 16], strides = [1, 1]} : vector<10x192xf32> to vector<5x16xf32>
    %cst_91 = arith.constant dense<0.000000e+00> : vector<5x5xf32>
    %278 = tpu.matmul %275, %276, %cst_91 {dimension_numbers = #tpu.dot_dimension_numbers<[1], [1], [0], [0], [0, 0, 1, 0], [], []>} : vector<5x16xf32>, vector<5x16xf32>, vector<5x5xf32> -> vector<5x5xf32>
    %cst_92 = arith.constant 2.500000e-01 : f32
    %279 = vector.broadcast %cst_92 : f32 to vector<5x5xf32>
    %280 = arith.mulf %278, %279 : vector<5x5xf32>
    %cst_93 = arith.constant dense<0xFF800000> : vector<5xf32>
    %281 = vector.multi_reduction <maximumf>, %280, %cst_93 [1] : vector<5x5xf32> to vector<5xf32>
    %282 = vector.shape_cast %281 : vector<5xf32> to vector<5x1xf32>
    %283 = vector.broadcast %282 : vector<5x1xf32> to vector<5x5xf32>
    %284 = arith.subf %280, %283 : vector<5x5xf32>
    %285 = math.exp %284 : vector<5x5xf32>
    %cst_94 = arith.constant dense<0.000000e+00> : vector<5xf32>
    %286 = vector.multi_reduction <add>, %285, %cst_94 [1] : vector<5x5xf32> to vector<5xf32>
    %287 = vector.shape_cast %286 : vector<5xf32> to vector<5x1xf32>
    %288 = vector.broadcast %287 : vector<5x1xf32> to vector<5x5xf32>
    %289 = arith.divf %285, %288 : vector<5x5xf32>
    %cst_95 = arith.constant dense<0.000000e+00> : vector<5x16xf32>
    %290 = tpu.matmul %289, %277, %cst_95 {dimension_numbers = #tpu.dot_dimension_numbers<[1], [0], [0], [1], [0, 0, 1, 1], [], []>} : vector<5x5xf32>, vector<5x16xf32>, vector<5x16xf32> -> vector<5x16xf32>
    %291 = vector.extract_strided_slice %274 {offsets = [0, 16], sizes = [5, 16], strides = [1, 1]} : vector<10x192xf32> to vector<5x16xf32>
    %292 = vector.extract_strided_slice %274 {offsets = [0, 80], sizes = [5, 16], strides = [1, 1]} : vector<10x192xf32> to vector<5x16xf32>
    %293 = vector.extract_strided_slice %274 {offsets = [0, 144], sizes = [5, 16], strides = [1, 1]} : vector<10x192xf32> to vector<5x16xf32>
    %cst_96 = arith.constant dense<0.000000e+00> : vector<5x5xf32>
    %294 = tpu.matmul %291, %292, %cst_96 {dimension_numbers = #tpu.dot_dimension_numbers<[1], [1], [0], [0], [0, 0, 1, 0], [], []>} : vector<5x16xf32>, vector<5x16xf32>, vector<5x5xf32> -> vector<5x5xf32>
    %cst_97 = arith.constant 2.500000e-01 : f32
    %295 = vector.broadcast %cst_97 : f32 to vector<5x5xf32>
    %296 = arith.mulf %294, %295 : vector<5x5xf32>
    %cst_98 = arith.constant dense<0xFF800000> : vector<5xf32>
    %297 = vector.multi_reduction <maximumf>, %296, %cst_98 [1] : vector<5x5xf32> to vector<5xf32>
    %298 = vector.shape_cast %297 : vector<5xf32> to vector<5x1xf32>
    %299 = vector.broadcast %298 : vector<5x1xf32> to vector<5x5xf32>
    %300 = arith.subf %296, %299 : vector<5x5xf32>
    %301 = math.exp %300 : vector<5x5xf32>
    %cst_99 = arith.constant dense<0.000000e+00> : vector<5xf32>
    %302 = vector.multi_reduction <add>, %301, %cst_99 [1] : vector<5x5xf32> to vector<5xf32>
    %303 = vector.shape_cast %302 : vector<5xf32> to vector<5x1xf32>
    %304 = vector.broadcast %303 : vector<5x1xf32> to vector<5x5xf32>
    %305 = arith.divf %301, %304 : vector<5x5xf32>
    %cst_100 = arith.constant dense<0.000000e+00> : vector<5x16xf32>
    %306 = tpu.matmul %305, %293, %cst_100 {dimension_numbers = #tpu.dot_dimension_numbers<[1], [0], [0], [1], [0, 0, 1, 1], [], []>} : vector<5x5xf32>, vector<5x16xf32>, vector<5x16xf32> -> vector<5x16xf32>
    %307 = vector.extract_strided_slice %274 {offsets = [0, 32], sizes = [5, 16], strides = [1, 1]} : vector<10x192xf32> to vector<5x16xf32>
    %308 = vector.extract_strided_slice %274 {offsets = [0, 96], sizes = [5, 16], strides = [1, 1]} : vector<10x192xf32> to vector<5x16xf32>
    %309 = vector.extract_strided_slice %274 {offsets = [0, 160], sizes = [5, 16], strides = [1, 1]} : vector<10x192xf32> to vector<5x16xf32>
    %cst_101 = arith.constant dense<0.000000e+00> : vector<5x5xf32>
    %310 = tpu.matmul %307, %308, %cst_101 {dimension_numbers = #tpu.dot_dimension_numbers<[1], [1], [0], [0], [0, 0, 1, 0], [], []>} : vector<5x16xf32>, vector<5x16xf32>, vector<5x5xf32> -> vector<5x5xf32>
    %cst_102 = arith.constant 2.500000e-01 : f32
    %311 = vector.broadcast %cst_102 : f32 to vector<5x5xf32>
    %312 = arith.mulf %310, %311 : vector<5x5xf32>
    %cst_103 = arith.constant dense<0xFF800000> : vector<5xf32>
    %313 = vector.multi_reduction <maximumf>, %312, %cst_103 [1] : vector<5x5xf32> to vector<5xf32>
    %314 = vector.shape_cast %313 : vector<5xf32> to vector<5x1xf32>
    %315 = vector.broadcast %314 : vector<5x1xf32> to vector<5x5xf32>
    %316 = arith.subf %312, %315 : vector<5x5xf32>
    %317 = math.exp %316 : vector<5x5xf32>
    %cst_104 = arith.constant dense<0.000000e+00> : vector<5xf32>
    %318 = vector.multi_reduction <add>, %317, %cst_104 [1] : vector<5x5xf32> to vector<5xf32>
    %319 = vector.shape_cast %318 : vector<5xf32> to vector<5x1xf32>
    %320 = vector.broadcast %319 : vector<5x1xf32> to vector<5x5xf32>
    %321 = arith.divf %317, %320 : vector<5x5xf32>
    %cst_105 = arith.constant dense<0.000000e+00> : vector<5x16xf32>
    %322 = tpu.matmul %321, %309, %cst_105 {dimension_numbers = #tpu.dot_dimension_numbers<[1], [0], [0], [1], [0, 0, 1, 1], [], []>} : vector<5x5xf32>, vector<5x16xf32>, vector<5x16xf32> -> vector<5x16xf32>
    %323 = vector.extract_strided_slice %274 {offsets = [0, 48], sizes = [5, 16], strides = [1, 1]} : vector<10x192xf32> to vector<5x16xf32>
    %324 = vector.extract_strided_slice %274 {offsets = [0, 112], sizes = [5, 16], strides = [1, 1]} : vector<10x192xf32> to vector<5x16xf32>
    %325 = vector.extract_strided_slice %274 {offsets = [0, 176], sizes = [5, 16], strides = [1, 1]} : vector<10x192xf32> to vector<5x16xf32>
    %cst_106 = arith.constant dense<0.000000e+00> : vector<5x5xf32>
    %326 = tpu.matmul %323, %324, %cst_106 {dimension_numbers = #tpu.dot_dimension_numbers<[1], [1], [0], [0], [0, 0, 1, 0], [], []>} : vector<5x16xf32>, vector<5x16xf32>, vector<5x5xf32> -> vector<5x5xf32>
    %cst_107 = arith.constant 2.500000e-01 : f32
    %327 = vector.broadcast %cst_107 : f32 to vector<5x5xf32>
    %328 = arith.mulf %326, %327 : vector<5x5xf32>
    %cst_108 = arith.constant dense<0xFF800000> : vector<5xf32>
    %329 = vector.multi_reduction <maximumf>, %328, %cst_108 [1] : vector<5x5xf32> to vector<5xf32>
    %330 = vector.shape_cast %329 : vector<5xf32> to vector<5x1xf32>
    %331 = vector.broadcast %330 : vector<5x1xf32> to vector<5x5xf32>
    %332 = arith.subf %328, %331 : vector<5x5xf32>
    %333 = math.exp %332 : vector<5x5xf32>
    %cst_109 = arith.constant dense<0.000000e+00> : vector<5xf32>
    %334 = vector.multi_reduction <add>, %333, %cst_109 [1] : vector<5x5xf32> to vector<5xf32>
    %335 = vector.shape_cast %334 : vector<5xf32> to vector<5x1xf32>
    %336 = vector.broadcast %335 : vector<5x1xf32> to vector<5x5xf32>
    %337 = arith.divf %333, %336 : vector<5x5xf32>
    %cst_110 = arith.constant dense<0.000000e+00> : vector<5x16xf32>
    %338 = tpu.matmul %337, %325, %cst_110 {dimension_numbers = #tpu.dot_dimension_numbers<[1], [0], [0], [1], [0, 0, 1, 1], [], []>} : vector<5x5xf32>, vector<5x16xf32>, vector<5x16xf32> -> vector<5x16xf32>
    %339 = tpu.concatenate %290, %306, %322, %338 in 1 : vector<5x16xf32>, vector<5x16xf32>, vector<5x16xf32>, vector<5x16xf32> -> vector<5x64xf32>
    %340 = vector.extract_strided_slice %274 {offsets = [5, 0], sizes = [5, 16], strides = [1, 1]} : vector<10x192xf32> to vector<5x16xf32>
    %341 = vector.extract_strided_slice %274 {offsets = [5, 64], sizes = [5, 16], strides = [1, 1]} : vector<10x192xf32> to vector<5x16xf32>
    %342 = vector.extract_strided_slice %274 {offsets = [5, 128], sizes = [5, 16], strides = [1, 1]} : vector<10x192xf32> to vector<5x16xf32>
    %cst_111 = arith.constant dense<0.000000e+00> : vector<5x5xf32>
    %343 = tpu.matmul %340, %341, %cst_111 {dimension_numbers = #tpu.dot_dimension_numbers<[1], [1], [0], [0], [0, 0, 1, 0], [], []>} : vector<5x16xf32>, vector<5x16xf32>, vector<5x5xf32> -> vector<5x5xf32>
    %cst_112 = arith.constant 2.500000e-01 : f32
    %344 = vector.broadcast %cst_112 : f32 to vector<5x5xf32>
    %345 = arith.mulf %343, %344 : vector<5x5xf32>
    %cst_113 = arith.constant dense<0xFF800000> : vector<5xf32>
    %346 = vector.multi_reduction <maximumf>, %345, %cst_113 [1] : vector<5x5xf32> to vector<5xf32>
    %347 = vector.shape_cast %346 : vector<5xf32> to vector<5x1xf32>
    %348 = vector.broadcast %347 : vector<5x1xf32> to vector<5x5xf32>
    %349 = arith.subf %345, %348 : vector<5x5xf32>
    %350 = math.exp %349 : vector<5x5xf32>
    %cst_114 = arith.constant dense<0.000000e+00> : vector<5xf32>
    %351 = vector.multi_reduction <add>, %350, %cst_114 [1] : vector<5x5xf32> to vector<5xf32>
    %352 = vector.shape_cast %351 : vector<5xf32> to vector<5x1xf32>
    %353 = vector.broadcast %352 : vector<5x1xf32> to vector<5x5xf32>
    %354 = arith.divf %350, %353 : vector<5x5xf32>
    %cst_115 = arith.constant dense<0.000000e+00> : vector<5x16xf32>
    %355 = tpu.matmul %354, %342, %cst_115 {dimension_numbers = #tpu.dot_dimension_numbers<[1], [0], [0], [1], [0, 0, 1, 1], [], []>} : vector<5x5xf32>, vector<5x16xf32>, vector<5x16xf32> -> vector<5x16xf32>
    %356 = vector.extract_strided_slice %274 {offsets = [5, 16], sizes = [5, 16], strides = [1, 1]} : vector<10x192xf32> to vector<5x16xf32>
    %357 = vector.extract_strided_slice %274 {offsets = [5, 80], sizes = [5, 16], strides = [1, 1]} : vector<10x192xf32> to vector<5x16xf32>
    %358 = vector.extract_strided_slice %274 {offsets = [5, 144], sizes = [5, 16], strides = [1, 1]} : vector<10x192xf32> to vector<5x16xf32>
    %cst_116 = arith.constant dense<0.000000e+00> : vector<5x5xf32>
    %359 = tpu.matmul %356, %357, %cst_116 {dimension_numbers = #tpu.dot_dimension_numbers<[1], [1], [0], [0], [0, 0, 1, 0], [], []>} : vector<5x16xf32>, vector<5x16xf32>, vector<5x5xf32> -> vector<5x5xf32>
    %cst_117 = arith.constant 2.500000e-01 : f32
    %360 = vector.broadcast %cst_117 : f32 to vector<5x5xf32>
    %361 = arith.mulf %359, %360 : vector<5x5xf32>
    %cst_118 = arith.constant dense<0xFF800000> : vector<5xf32>
    %362 = vector.multi_reduction <maximumf>, %361, %cst_118 [1] : vector<5x5xf32> to vector<5xf32>
    %363 = vector.shape_cast %362 : vector<5xf32> to vector<5x1xf32>
    %364 = vector.broadcast %363 : vector<5x1xf32> to vector<5x5xf32>
    %365 = arith.subf %361, %364 : vector<5x5xf32>
    %366 = math.exp %365 : vector<5x5xf32>
    %cst_119 = arith.constant dense<0.000000e+00> : vector<5xf32>
    %367 = vector.multi_reduction <add>, %366, %cst_119 [1] : vector<5x5xf32> to vector<5xf32>
    %368 = vector.shape_cast %367 : vector<5xf32> to vector<5x1xf32>
    %369 = vector.broadcast %368 : vector<5x1xf32> to vector<5x5xf32>
    %370 = arith.divf %366, %369 : vector<5x5xf32>
    %cst_120 = arith.constant dense<0.000000e+00> : vector<5x16xf32>
    %371 = tpu.matmul %370, %358, %cst_120 {dimension_numbers = #tpu.dot_dimension_numbers<[1], [0], [0], [1], [0, 0, 1, 1], [], []>} : vector<5x5xf32>, vector<5x16xf32>, vector<5x16xf32> -> vector<5x16xf32>
    %372 = vector.extract_strided_slice %274 {offsets = [5, 32], sizes = [5, 16], strides = [1, 1]} : vector<10x192xf32> to vector<5x16xf32>
    %373 = vector.extract_strided_slice %274 {offsets = [5, 96], sizes = [5, 16], strides = [1, 1]} : vector<10x192xf32> to vector<5x16xf32>
    %374 = vector.extract_strided_slice %274 {offsets = [5, 160], sizes = [5, 16], strides = [1, 1]} : vector<10x192xf32> to vector<5x16xf32>
    %cst_121 = arith.constant dense<0.000000e+00> : vector<5x5xf32>
    %375 = tpu.matmul %372, %373, %cst_121 {dimension_numbers = #tpu.dot_dimension_numbers<[1], [1], [0], [0], [0, 0, 1, 0], [], []>} : vector<5x16xf32>, vector<5x16xf32>, vector<5x5xf32> -> vector<5x5xf32>
    %cst_122 = arith.constant 2.500000e-01 : f32
    %376 = vector.broadcast %cst_122 : f32 to vector<5x5xf32>
    %377 = arith.mulf %375, %376 : vector<5x5xf32>
    %cst_123 = arith.constant dense<0xFF800000> : vector<5xf32>
    %378 = vector.multi_reduction <maximumf>, %377, %cst_123 [1] : vector<5x5xf32> to vector<5xf32>
    %379 = vector.shape_cast %378 : vector<5xf32> to vector<5x1xf32>
    %380 = vector.broadcast %379 : vector<5x1xf32> to vector<5x5xf32>
    %381 = arith.subf %377, %380 : vector<5x5xf32>
    %382 = math.exp %381 : vector<5x5xf32>
    %cst_124 = arith.constant dense<0.000000e+00> : vector<5xf32>
    %383 = vector.multi_reduction <add>, %382, %cst_124 [1] : vector<5x5xf32> to vector<5xf32>
    %384 = vector.shape_cast %383 : vector<5xf32> to vector<5x1xf32>
    %385 = vector.broadcast %384 : vector<5x1xf32> to vector<5x5xf32>
    %386 = arith.divf %382, %385 : vector<5x5xf32>
    %cst_125 = arith.constant dense<0.000000e+00> : vector<5x16xf32>
    %387 = tpu.matmul %386, %374, %cst_125 {dimension_numbers = #tpu.dot_dimension_numbers<[1], [0], [0], [1], [0, 0, 1, 1], [], []>} : vector<5x5xf32>, vector<5x16xf32>, vector<5x16xf32> -> vector<5x16xf32>
    %388 = vector.extract_strided_slice %274 {offsets = [5, 48], sizes = [5, 16], strides = [1, 1]} : vector<10x192xf32> to vector<5x16xf32>
    %389 = vector.extract_strided_slice %274 {offsets = [5, 112], sizes = [5, 16], strides = [1, 1]} : vector<10x192xf32> to vector<5x16xf32>
    %390 = vector.extract_strided_slice %274 {offsets = [5, 176], sizes = [5, 16], strides = [1, 1]} : vector<10x192xf32> to vector<5x16xf32>
    %cst_126 = arith.constant dense<0.000000e+00> : vector<5x5xf32>
    %391 = tpu.matmul %388, %389, %cst_126 {dimension_numbers = #tpu.dot_dimension_numbers<[1], [1], [0], [0], [0, 0, 1, 0], [], []>} : vector<5x16xf32>, vector<5x16xf32>, vector<5x5xf32> -> vector<5x5xf32>
    %cst_127 = arith.constant 2.500000e-01 : f32
    %392 = vector.broadcast %cst_127 : f32 to vector<5x5xf32>
    %393 = arith.mulf %391, %392 : vector<5x5xf32>
    %cst_128 = arith.constant dense<0xFF800000> : vector<5xf32>
    %394 = vector.multi_reduction <maximumf>, %393, %cst_128 [1] : vector<5x5xf32> to vector<5xf32>
    %395 = vector.shape_cast %394 : vector<5xf32> to vector<5x1xf32>
    %396 = vector.broadcast %395 : vector<5x1xf32> to vector<5x5xf32>
    %397 = arith.subf %393, %396 : vector<5x5xf32>
    %398 = math.exp %397 : vector<5x5xf32>
    %cst_129 = arith.constant dense<0.000000e+00> : vector<5xf32>
    %399 = vector.multi_reduction <add>, %398, %cst_129 [1] : vector<5x5xf32> to vector<5xf32>
    %400 = vector.shape_cast %399 : vector<5xf32> to vector<5x1xf32>
    %401 = vector.broadcast %400 : vector<5x1xf32> to vector<5x5xf32>
    %402 = arith.divf %398, %401 : vector<5x5xf32>
    %cst_130 = arith.constant dense<0.000000e+00> : vector<5x16xf32>
    %403 = tpu.matmul %402, %390, %cst_130 {dimension_numbers = #tpu.dot_dimension_numbers<[1], [0], [0], [1], [0, 0, 1, 1], [], []>} : vector<5x5xf32>, vector<5x16xf32>, vector<5x16xf32> -> vector<5x16xf32>
    %404 = tpu.concatenate %355, %371, %387, %403 in 1 : vector<5x16xf32>, vector<5x16xf32>, vector<5x16xf32>, vector<5x16xf32> -> vector<5x64xf32>
    %405 = tpu.concatenate %339, %404 in 0 : vector<5x64xf32>, vector<5x64xf32> -> vector<10x64xf32>
    %406 = arith.truncf %405 : vector<10x64xf32> to vector<10x64xbf16>
    %cst_131 = arith.constant dense<0.000000e+00> : vector<10x64xf32>
    %407 = tpu.matmul %406, %243, %cst_131 {dimension_numbers = #tpu.dot_dimension_numbers<[1], [0], [0], [1], [0, 0, 1, 1], [], []>} : vector<10x64xbf16>, vector<64x64xbf16>, vector<10x64xf32> -> vector<10x64xf32>
    %c16 = arith.constant 16 : index
    %c0_132 = arith.constant 0 : index
    %408 = vector.load %arg6[%c16, %c0_132] : memref<25x256xf32, #tpu.memory_space<vmem>>, vector<1x64xf32>
    %409 = vector.broadcast %408 : vector<1x64xf32> to vector<10x64xf32>
    %410 = arith.addf %407, %409 : vector<10x64xf32>
    %411 = arith.addf %239, %410 : vector<10x64xf32>
    %c17 = arith.constant 17 : index
    %c0_133 = arith.constant 0 : index
    %412 = vector.load %arg6[%c17, %c0_133] : memref<25x256xf32, #tpu.memory_space<vmem>>, vector<1x64xf32>
    %c18 = arith.constant 18 : index
    %c0_134 = arith.constant 0 : index
    %413 = vector.load %arg6[%c18, %c0_134] : memref<25x256xf32, #tpu.memory_space<vmem>>, vector<1x64xf32>
    %cst_135 = arith.constant dense<0.000000e+00> : vector<10xf32>
    %414 = vector.multi_reduction <add>, %411, %cst_135 [1] : vector<10x64xf32> to vector<10xf32>
    %415 = vector.shape_cast %414 : vector<10xf32> to vector<10x1xf32>
    %cst_136 = arith.constant 6.400000e+01 : f32
    %416 = vector.broadcast %cst_136 : f32 to vector<10x1xf32>
    %417 = arith.divf %415, %416 : vector<10x1xf32>
    %418 = vector.broadcast %417 : vector<10x1xf32> to vector<10x64xf32>
    %419 = arith.subf %411, %418 : vector<10x64xf32>
    %420 = vector.broadcast %417 : vector<10x1xf32> to vector<10x64xf32>
    %421 = arith.subf %411, %420 : vector<10x64xf32>
    %422 = arith.mulf %419, %421 : vector<10x64xf32>
    %cst_137 = arith.constant dense<0.000000e+00> : vector<10xf32>
    %423 = vector.multi_reduction <add>, %422, %cst_137 [1] : vector<10x64xf32> to vector<10xf32>
    %424 = vector.shape_cast %423 : vector<10xf32> to vector<10x1xf32>
    %cst_138 = arith.constant 6.400000e+01 : f32
    %425 = vector.broadcast %cst_138 : f32 to vector<10x1xf32>
    %426 = arith.divf %424, %425 : vector<10x1xf32>
    %427 = vector.broadcast %417 : vector<10x1xf32> to vector<10x64xf32>
    %428 = arith.subf %411, %427 : vector<10x64xf32>
    %cst_139 = arith.constant 9.99999997E-7 : f32
    %429 = vector.broadcast %cst_139 : f32 to vector<10x1xf32>
    %430 = arith.addf %426, %429 : vector<10x1xf32>
    %431 = math.rsqrt %430 : vector<10x1xf32>
    %432 = vector.broadcast %431 : vector<10x1xf32> to vector<10x64xf32>
    %433 = arith.mulf %428, %432 : vector<10x64xf32>
    %434 = vector.broadcast %412 : vector<1x64xf32> to vector<10x64xf32>
    %435 = arith.mulf %433, %434 : vector<10x64xf32>
    %436 = vector.broadcast %413 : vector<1x64xf32> to vector<10x64xf32>
    %437 = arith.addf %435, %436 : vector<10x64xf32>
    %438 = arith.truncf %437 : vector<10x64xf32> to vector<10x64xbf16>
    %c1_140 = arith.constant 1 : index
    %c0_141 = arith.constant 0 : index
    %c0_142 = arith.constant 0 : index
    %439 = vector.load %arg4[%c1_140, %c0_141, %c0_142] : memref<2x64x256xbf16, #tpu.memory_space<vmem>>, vector<1x64x256xbf16>
    %440 = vector.shape_cast %439 : vector<1x64x256xbf16> to vector<64x256xbf16>
    %cst_143 = arith.constant dense<0.000000e+00> : vector<10x256xf32>
    %441 = tpu.matmul %438, %440, %cst_143 {dimension_numbers = #tpu.dot_dimension_numbers<[1], [0], [0], [1], [0, 0, 1, 1], [], []>} : vector<10x64xbf16>, vector<64x256xbf16>, vector<10x256xf32> -> vector<10x256xf32>
    %c19 = arith.constant 19 : index
    %c0_144 = arith.constant 0 : index
    %442 = vector.load %arg6[%c19, %c0_144] : memref<25x256xf32, #tpu.memory_space<vmem>>, vector<1x256xf32>
    %443 = vector.broadcast %442 : vector<1x256xf32> to vector<10x256xf32>
    %444 = arith.addf %441, %443 : vector<10x256xf32>
    %cst_145 = arith.constant 5.000000e-01 : f32
    %445 = vector.broadcast %cst_145 : f32 to vector<10x256xf32>
    %446 = arith.mulf %445, %444 : vector<10x256xf32>
    %cst_146 = arith.constant 4.471500e-02 : f32
    %447 = vector.broadcast %cst_146 : f32 to vector<10x256xf32>
    %448 = arith.mulf %447, %444 : vector<10x256xf32>
    %449 = arith.mulf %448, %444 : vector<10x256xf32>
    %450 = arith.mulf %449, %444 : vector<10x256xf32>
    %451 = arith.addf %444, %450 : vector<10x256xf32>
    %cst_147 = arith.constant 0.797884583 : f32
    %452 = vector.broadcast %cst_147 : f32 to vector<10x256xf32>
    %453 = arith.mulf %452, %451 : vector<10x256xf32>
    %454 = math.tanh %453 : vector<10x256xf32>
    %cst_148 = arith.constant 1.000000e+00 : f32
    %455 = vector.broadcast %cst_148 : f32 to vector<10x256xf32>
    %456 = arith.addf %455, %454 : vector<10x256xf32>
    %457 = arith.mulf %446, %456 : vector<10x256xf32>
    %458 = arith.truncf %457 : vector<10x256xf32> to vector<10x256xbf16>
    %c1_149 = arith.constant 1 : index
    %c0_150 = arith.constant 0 : index
    %c0_151 = arith.constant 0 : index
    %459 = vector.load %arg5[%c1_149, %c0_150, %c0_151] : memref<2x256x64xbf16, #tpu.memory_space<vmem>>, vector<1x256x64xbf16>
    %460 = vector.shape_cast %459 : vector<1x256x64xbf16> to vector<256x64xbf16>
    %cst_152 = arith.constant dense<0.000000e+00> : vector<10x64xf32>
    %461 = tpu.matmul %458, %460, %cst_152 {dimension_numbers = #tpu.dot_dimension_numbers<[1], [0], [0], [1], [0, 0, 1, 1], [], []>} : vector<10x256xbf16>, vector<256x64xbf16>, vector<10x64xf32> -> vector<10x64xf32>
    %c20 = arith.constant 20 : index
    %c0_153 = arith.constant 0 : index
    %462 = vector.load %arg6[%c20, %c0_153] : memref<25x256xf32, #tpu.memory_space<vmem>>, vector<1x64xf32>
    %463 = vector.broadcast %462 : vector<1x64xf32> to vector<10x64xf32>
    %464 = arith.addf %461, %463 : vector<10x64xf32>
    %465 = arith.addf %411, %464 : vector<10x64xf32>
    %c21 = arith.constant 21 : index
    %c0_154 = arith.constant 0 : index
    %466 = vector.load %arg6[%c21, %c0_154] : memref<25x256xf32, #tpu.memory_space<vmem>>, vector<1x64xf32>
    %c22 = arith.constant 22 : index
    %c0_155 = arith.constant 0 : index
    %467 = vector.load %arg6[%c22, %c0_155] : memref<25x256xf32, #tpu.memory_space<vmem>>, vector<1x64xf32>
    %cst_156 = arith.constant dense<0.000000e+00> : vector<10xf32>
    %468 = vector.multi_reduction <add>, %465, %cst_156 [1] : vector<10x64xf32> to vector<10xf32>
    %469 = vector.shape_cast %468 : vector<10xf32> to vector<10x1xf32>
    %cst_157 = arith.constant 6.400000e+01 : f32
    %470 = vector.broadcast %cst_157 : f32 to vector<10x1xf32>
    %471 = arith.divf %469, %470 : vector<10x1xf32>
    %472 = vector.broadcast %471 : vector<10x1xf32> to vector<10x64xf32>
    %473 = arith.subf %465, %472 : vector<10x64xf32>
    %474 = vector.broadcast %471 : vector<10x1xf32> to vector<10x64xf32>
    %475 = arith.subf %465, %474 : vector<10x64xf32>
    %476 = arith.mulf %473, %475 : vector<10x64xf32>
    %cst_158 = arith.constant dense<0.000000e+00> : vector<10xf32>
    %477 = vector.multi_reduction <add>, %476, %cst_158 [1] : vector<10x64xf32> to vector<10xf32>
    %478 = vector.shape_cast %477 : vector<10xf32> to vector<10x1xf32>
    %cst_159 = arith.constant 6.400000e+01 : f32
    %479 = vector.broadcast %cst_159 : f32 to vector<10x1xf32>
    %480 = arith.divf %478, %479 : vector<10x1xf32>
    %481 = vector.broadcast %471 : vector<10x1xf32> to vector<10x64xf32>
    %482 = arith.subf %465, %481 : vector<10x64xf32>
    %cst_160 = arith.constant 9.99999997E-7 : f32
    %483 = vector.broadcast %cst_160 : f32 to vector<10x1xf32>
    %484 = arith.addf %480, %483 : vector<10x1xf32>
    %485 = math.rsqrt %484 : vector<10x1xf32>
    %486 = vector.broadcast %485 : vector<10x1xf32> to vector<10x64xf32>
    %487 = arith.mulf %482, %486 : vector<10x64xf32>
    %488 = vector.broadcast %466 : vector<1x64xf32> to vector<10x64xf32>
    %489 = arith.mulf %487, %488 : vector<10x64xf32>
    %490 = vector.broadcast %467 : vector<1x64xf32> to vector<10x64xf32>
    %491 = arith.addf %489, %490 : vector<10x64xf32>
    %492 = vector.extract_strided_slice %491 {offsets = [0, 0], sizes = [1, 64], strides = [1, 1]} : vector<10x64xf32> to vector<1x64xf32>
    %493 = vector.extract_strided_slice %491 {offsets = [5, 0], sizes = [1, 64], strides = [1, 1]} : vector<10x64xf32> to vector<1x64xf32>
    %494 = tpu.concatenate %492, %493 in 0 : vector<1x64xf32>, vector<1x64xf32> -> vector<2x64xf32>
    %c0_161 = arith.constant 0 : index
    %c0_162 = arith.constant 0 : index
    %495 = vector.load %arg7[%c0_161, %c0_162] : memref<96x32xf32, #tpu.memory_space<vmem>>, vector<64x32xf32>
    %cst_163 = arith.constant dense<0.000000e+00> : vector<2x32xf32>
    %496 = tpu.matmul %494, %495, %cst_163 {dimension_numbers = #tpu.dot_dimension_numbers<[1], [0], [0], [1], [0, 0, 1, 1], [], []>} : vector<2x64xf32>, vector<64x32xf32>, vector<2x32xf32> -> vector<2x32xf32>
    %c23 = arith.constant 23 : index
    %c0_164 = arith.constant 0 : index
    %497 = vector.load %arg6[%c23, %c0_164] : memref<25x256xf32, #tpu.memory_space<vmem>>, vector<1x32xf32>
    %498 = vector.broadcast %497 : vector<1x32xf32> to vector<2x32xf32>
    %499 = arith.addf %496, %498 : vector<2x32xf32>
    %cst_165 = arith.constant 0.000000e+00 : f32
    %500 = vector.broadcast %cst_165 : f32 to vector<2x32xf32>
    %501 = arith.subf %500, %499 : vector<2x32xf32>
    %502 = math.exp %501 : vector<2x32xf32>
    %cst_166 = arith.constant 1.000000e+00 : f32
    %503 = vector.broadcast %cst_166 : f32 to vector<2x32xf32>
    %504 = arith.addf %503, %502 : vector<2x32xf32>
    %cst_167 = arith.constant 1.000000e+00 : f32
    %505 = vector.broadcast %cst_167 : f32 to vector<2x32xf32>
    %506 = arith.divf %505, %504 : vector<2x32xf32>
    %c64 = arith.constant 64 : index
    %c0_168 = arith.constant 0 : index
    %507 = vector.load %arg7[%c64, %c0_168] : memref<96x32xf32, #tpu.memory_space<vmem>>, vector<32x8xf32>
    %cst_169 = arith.constant dense<0.000000e+00> : vector<2x8xf32>
    %508 = tpu.matmul %506, %507, %cst_169 {dimension_numbers = #tpu.dot_dimension_numbers<[1], [0], [0], [1], [0, 0, 1, 1], [], []>} : vector<2x32xf32>, vector<32x8xf32>, vector<2x8xf32> -> vector<2x8xf32>
    %c24 = arith.constant 24 : index
    %c0_170 = arith.constant 0 : index
    %509 = vector.load %arg6[%c24, %c0_170] : memref<25x256xf32, #tpu.memory_space<vmem>>, vector<1x8xf32>
    %510 = vector.broadcast %509 : vector<1x8xf32> to vector<2x8xf32>
    %511 = arith.addf %508, %510 : vector<2x8xf32>
    %c0_171 = arith.constant 0 : index
    %c0_172 = arith.constant 0 : index
    %512 = vector.load %arg8[%c0_171, %c0_172] : memref<2x8xf32, #tpu.memory_space<vmem>>, vector<2x8xf32>
    tpu.vector_store %arg8[%c0_171, %c0_172], %511 {strides = array<i32>} : memref<2x8xf32, #tpu.memory_space<vmem>>, vector<2x8xf32>,
    return
  }
  func.func @transform_0(%arg0: i32) -> (i32, i32) {
    %c0_i32 = arith.constant 0 : i32
    %c0_i32_0 = arith.constant 0 : i32
    %c0_i32_1 = arith.constant 0 : i32
    return %c0_i32, %c0_i32_0 : i32, i32
  }
  func.func @transform_1(%arg0: i32) -> (i32, i32) {
    %c0_i32 = arith.constant 0 : i32
    %c0_i32_0 = arith.constant 0 : i32
    %c0_i32_1 = arith.constant 0 : i32
    return %c0_i32, %c0_i32_0 : i32, i32
  }
  func.func @transform_2(%arg0: i32) -> (i32, i32, i32) {
    %c0_i32 = arith.constant 0 : i32
    %c0_i32_0 = arith.constant 0 : i32
    %c0_i32_1 = arith.constant 0 : i32
    %c0_i32_2 = arith.constant 0 : i32
    return %c0_i32, %c0_i32_0, %c0_i32_1 : i32, i32, i32
  }
  func.func @transform_3(%arg0: i32) -> (i32, i32, i32) {
    %c0_i32 = arith.constant 0 : i32
    %c0_i32_0 = arith.constant 0 : i32
    %c0_i32_1 = arith.constant 0 : i32
    %c0_i32_2 = arith.constant 0 : i32
    return %c0_i32, %c0_i32_0, %c0_i32_1 : i32, i32, i32
  }
  func.func @transform_4(%arg0: i32) -> (i32, i32, i32) {
    %c0_i32 = arith.constant 0 : i32
    %c0_i32_0 = arith.constant 0 : i32
    %c0_i32_1 = arith.constant 0 : i32
    %c0_i32_2 = arith.constant 0 : i32
    return %c0_i32, %c0_i32_0, %c0_i32_1 : i32, i32, i32
  }
  func.func @transform_5(%arg0: i32) -> (i32, i32) {
    %c0_i32 = arith.constant 0 : i32
    %c0_i32_0 = arith.constant 0 : i32
    %c0_i32_1 = arith.constant 0 : i32
    return %c0_i32, %c0_i32_0 : i32, i32
  }
  func.func @transform_6(%arg0: i32) -> (i32, i32) {
    %c0_i32 = arith.constant 0 : i32
    %c0_i32_0 = arith.constant 0 : i32
    %c0_i32_1 = arith.constant 0 : i32
    return %c0_i32, %c0_i32_0 : i32, i32
  }
  func.func @transform_7(%arg0: i32) -> (i32, i32) {
    %c0_i32 = arith.constant 0 : i32
    %c0_i32_0 = arith.constant 0 : i32
    %c0_i32_1 = arith.constant 0 : i32
    return %c0_i32, %c0_i32_0 : i32, i32
  }
}

</mosaic_0001>

<llo_original>
// kernel: vit_feature_extractor.1
$region0: #{vit_feature_extractor.1}
  #allocation0 [shape = 'u32[]', space=smem, size = 0x4, offset = 0x4, fixed_abs, tag = 'smem constant byte address 0x4 - core index']
  #allocation1 [shape = 'u32[72,128]{1,0:T(1,128)}', space=vmem, size = 0x9000, scoped, tag = 'internal scratch']
  %s0 = inlined_call_operand.vmem [shape: f32[8,768], index: 0, kind: input, shape index: {}]
  %s1 = inlined_call_operand.vmem [shape: bf16[768,64], index: 1, kind: input, shape index: {}]
  %s2 = inlined_call_operand.vmem [shape: bf16[2,64,256], index: 2, kind: input, shape index: {}]
  %s3 = inlined_call_operand.vmem [shape: bf16[2,64,256], index: 3, kind: input, shape index: {}]
  %s4 = inlined_call_operand.vmem [shape: bf16[2,256,64], index: 4, kind: input, shape index: {}]
  %s5 = inlined_call_operand.vmem [shape: f32[25,256], index: 5, kind: input, shape index: {}]
  %s6 = inlined_call_operand.vmem [shape: f32[96,32], index: 6, kind: input, shape index: {}]
  %s7 = inlined_call_operand.hbm [shape: f32[2,8], index: 7, kind: output, shape index: {}]
  %s8 = sld [smem:[#allocation0]]
  $region38: #{vit_feature_extractor.1} parent=0
    _
  %s10 = ssub.s32 1, %s8
  %s11 = scalar_select 0, %s10, %s8
  $region1: #{vit_feature_extractor.1} parent=0
    #allocation2 [shape = 'u8[1024]{0}', space=vmem, size = 0x400, scoped, tag = 'output window, operand 0, single buffered']
    #allocation3 [shape = 's32[1]{0}', space=sflag, size = 0x4, scoped, tag = 'scoped memory for vit_feature_extractor.1']
    %12 = vsyncpa [#allocation3], 0
    // Predicated region
    $region2: #{vit_feature_extractor.1} parent=1 // pred_check
      _
    $region3: #{vit_feature_extractor.1} parent=1 // pred_check_branch
      %14 = sbr.rel (0) target = $region5
    $region4: #{vit_feature_extractor.1} parent=1 // pred_region
      _
    $region5: #{vit_feature_extractor.1} parent=1 // pred_fallthru
      _
    // Predicated region
    $region6: #{vit_feature_extractor.1} parent=1 // pred_check
      _
    $region7: #{vit_feature_extractor.1} parent=1 // pred_check_branch
      %16 = sbr.rel (0) target = $region9
    $region8: #{vit_feature_extractor.1} parent=1 // pred_region
      _
    $region9: #{vit_feature_extractor.1} parent=1 // pred_fallthru
      _
    // Predicated region
    $region10: #{vit_feature_extractor.1} parent=1 // pred_check
      _
    $region11: #{vit_feature_extractor.1} parent=1 // pred_check_branch
      %18 = sbr.rel (0) target = $region13
    $region12: #{vit_feature_extractor.1} parent=1 // pred_region
      _
    $region13: #{vit_feature_extractor.1} parent=1 // pred_fallthru
      _
    // Predicated region
    $region14: #{vit_feature_extractor.1} parent=1 // pred_check
      _
    $region15: #{vit_feature_extractor.1} parent=1 // pred_check_branch
      %20 = sbr.rel (0) target = $region17
    $region16: #{vit_feature_extractor.1} parent=1 // pred_region
      _
    $region17: #{vit_feature_extractor.1} parent=1 // pred_fallthru
      _
    // Predicated region
    $region18: #{vit_feature_extractor.1} parent=1 // pred_check
      _
    $region19: #{vit_feature_extractor.1} parent=1 // pred_check_branch
      %22 = sbr.rel (0) target = $region21
    $region20: #{vit_feature_extractor.1} parent=1 // pred_region
      _
    $region21: #{vit_feature_extractor.1} parent=1 // pred_fallthru
      _
    // Predicated region
    $region22: #{vit_feature_extractor.1} parent=1 // pred_check
      _
    $region23: #{vit_feature_extractor.1} parent=1 // pred_check_branch
      %24 = sbr.rel (0) target = $region25
    $region24: #{vit_feature_extractor.1} parent=1 // pred_region
      _
    $region25: #{vit_feature_extractor.1} parent=1 // pred_fallthru
      _
    // Predicated region
    $region26: #{vit_feature_extractor.1} parent=1 // pred_check
      _
    $region27: #{vit_feature_extractor.1} parent=1 // pred_check_branch
      %26 = sbr.rel (0) target = $region29
    $region28: #{vit_feature_extractor.1} parent=1 // pred_region
      _
    $region29: #{vit_feature_extractor.1} parent=1 // pred_fallthru
      _
    %v28 = vld [vmem:[%s0] sm:$0xff]
    %v29 = vld [vmem:[%s0 + $0x8] sm:$0xff]
    %v30 = vld [vmem:[%s0 + $0x10] sm:$0xff]
    %v31 = vld [vmem:[%s0 + $0x18] sm:$0xff]
    %v32 = vld [vmem:[%s0 + $0x20] sm:$0xff]
    %v33 = vld [vmem:[%s0 + $0x28] sm:$0xff]
    %v34 = vpack.c.bf16 %v28, %v28
    %v35 = vpack.c.bf16 %v29, %v29
    %v36 = vpack.c.bf16 %v30, %v30
    %v37 = vpack.c.bf16 %v31, %v31
    %v38 = vpack.c.bf16 %v32, %v32
    %v39 = vpack.c.bf16 %v33, %v33
    %v40 = vld [vmem:[%s1] sm:$0xf]
    %v41 = vld [vmem:[%s1 + $0x4] sm:$0xf]
    %v42 = vld [vmem:[%s1 + $0x8] sm:$0xf]
    %v43 = vld [vmem:[%s1 + $0xc] sm:$0xf]
    %v44 = vld [vmem:[%s1 + $0x10] sm:$0xf]
    %v45 = vld [vmem:[%s1 + $0x14] sm:$0xf]
    %v46 = vld [vmem:[%s1 + $0x18] sm:$0xf]
    %v47 = vld [vmem:[%s1 + $0x1c] sm:$0xf]
    %v48 = vld [vmem:[%s1 + $0x20] sm:$0xf]
    %v49 = vld [vmem:[%s1 + $0x24] sm:$0xf]
    %v50 = vld [vmem:[%s1 + $0x28] sm:$0xf]
    %v51 = vld [vmem:[%s1 + $0x2c] sm:$0xf]
    %v52 = vld [vmem:[%s1 + $0x30] sm:$0xf]
    %v53 = vld [vmem:[%s1 + $0x34] sm:$0xf]
    %v54 = vld [vmem:[%s1 + $0x38] sm:$0xf]
    %v55 = vld [vmem:[%s1 + $0x3c] sm:$0xf]
    %v56 = vld [vmem:[%s1 + $0x40] sm:$0xf]
    %v57 = vld [vmem:[%s1 + $0x44] sm:$0xf]
    %v58 = vld [vmem:[%s1 + $0x48] sm:$0xf]
    %v59 = vld [vmem:[%s1 + $0x4c] sm:$0xf]
    %v60 = vld [vmem:[%s1 + $0x50] sm:$0xf]
    %v61 = vld [vmem:[%s1 + $0x54] sm:$0xf]
    %v62 = vld [vmem:[%s1 + $0x58] sm:$0xf]
    %v63 = vld [vmem:[%s1 + $0x5c] sm:$0xf]
    %v64 = vld [vmem:[%s1 + $0x60] sm:$0xf]
    %v65 = vld [vmem:[%s1 + $0x64] sm:$0xf]
    %v66 = vld [vmem:[%s1 + $0x68] sm:$0xf]
    %v67 = vld [vmem:[%s1 + $0x6c] sm:$0xf]
    %v68 = vld [vmem:[%s1 + $0x70] sm:$0xf]
    %v69 = vld [vmem:[%s1 + $0x74] sm:$0xf]
    %v70 = vld [vmem:[%s1 + $0x78] sm:$0xf]
    %v71 = vld [vmem:[%s1 + $0x7c] sm:$0xf]
    %v72 = vld [vmem:[%s1 + $0x80] sm:$0xf]
    %v73 = vld [vmem:[%s1 + $0x84] sm:$0xf]
    %v74 = vld [vmem:[%s1 + $0x88] sm:$0xf]
    %v75 = vld [vmem:[%s1 + $0x8c] sm:$0xf]
    %v76 = vld [vmem:[%s1 + $0x90] sm:$0xf]
    %v77 = vld [vmem:[%s1 + $0x94] sm:$0xf]
    %v78 = vld [vmem:[%s1 + $0x98] sm:$0xf]
    %v79 = vld [vmem:[%s1 + $0x9c] sm:$0xf]
    %v80 = vld [vmem:[%s1 + $0xa0] sm:$0xf]
    %v81 = vld [vmem:[%s1 + $0xa4] sm:$0xf]
    %v82 = vld [vmem:[%s1 + $0xa8] sm:$0xf]
    %v83 = vld [vmem:[%s1 + $0xac] sm:$0xf]
    %v84 = vld [vmem:[%s1 + $0xb0] sm:$0xf]
    %v85 = vld [vmem:[%s1 + $0xb4] sm:$0xf]
    %v86 = vld [vmem:[%s1 + $0xb8] sm:$0xf]
    %v87 = vld [vmem:[%s1 + $0xbc] sm:$0xf]
    %v88 = vld [vmem:[%s1 + $0xc0] sm:$0xf]
    %v89 = vld [vmem:[%s1 + $0xc4] sm:$0xf]
    %v90 = vld [vmem:[%s1 + $0xc8] sm:$0xf]
    %v91 = vld [vmem:[%s1 + $0xcc] sm:$0xf]
    %v92 = vld [vmem:[%s1 + $0xd0] sm:$0xf]
    %v93 = vld [vmem:[%s1 + $0xd4] sm:$0xf]
    %v94 = vld [vmem:[%s1 + $0xd8] sm:$0xf]
    %v95 = vld [vmem:[%s1 + $0xdc] sm:$0xf]
    %v96 = vld [vmem:[%s1 + $0xe0] sm:$0xf]
    %v97 = vld [vmem:[%s1 + $0xe4] sm:$0xf]
    %v98 = vld [vmem:[%s1 + $0xe8] sm:$0xf]
    %v99 = vld [vmem:[%s1 + $0xec] sm:$0xf]
    %v100 = vld [vmem:[%s1 + $0xf0] sm:$0xf]
    %v101 = vld [vmem:[%s1 + $0xf4] sm:$0xf]
    %v102 = vld [vmem:[%s1 + $0xf8] sm:$0xf]
    %v103 = vld [vmem:[%s1 + $0xfc] sm:$0xf]
    %v104 = vld [vmem:[%s1 + $0x100] sm:$0xf]
    %v105 = vld [vmem:[%s1 + $0x104] sm:$0xf]
    %v106 = vld [vmem:[%s1 + $0x108] sm:$0xf]
    %v107 = vld [vmem:[%s1 + $0x10c] sm:$0xf]
    %v108 = vld [vmem:[%s1 + $0x110] sm:$0xf]
    %v109 = vld [vmem:[%s1 + $0x114] sm:$0xf]
    %v110 = vld [vmem:[%s1 + $0x118] sm:$0xf]
    %v111 = vld [vmem:[%s1 + $0x11c] sm:$0xf]
    %v112 = vld [vmem:[%s1 + $0x120] sm:$0xf]
    %v113 = vld [vmem:[%s1 + $0x124] sm:$0xf]
    %v114 = vld [vmem:[%s1 + $0x128] sm:$0xf]
    %v115 = vld [vmem:[%s1 + $0x12c] sm:$0xf]
    %v116 = vld [vmem:[%s1 + $0x130] sm:$0xf]
    %v117 = vld [vmem:[%s1 + $0x134] sm:$0xf]
    %v118 = vld [vmem:[%s1 + $0x138] sm:$0xf]
    %v119 = vld [vmem:[%s1 + $0x13c] sm:$0xf]
    %v120 = vld [vmem:[%s1 + $0x140] sm:$0xf]
    %v121 = vld [vmem:[%s1 + $0x144] sm:$0xf]
    %v122 = vld [vmem:[%s1 + $0x148] sm:$0xf]
    %v123 = vld [vmem:[%s1 + $0x14c] sm:$0xf]
    %v124 = vld [vmem:[%s1 + $0x150] sm:$0xf]
    %v125 = vld [vmem:[%s1 + $0x154] sm:$0xf]
    %v126 = vld [vmem:[%s1 + $0x158] sm:$0xf]
    %v127 = vld [vmem:[%s1 + $0x15c] sm:$0xf]
    %v128 = vld [vmem:[%s1 + $0x160] sm:$0xf]
    %v129 = vld [vmem:[%s1 + $0x164] sm:$0xf]
    %v130 = vld [vmem:[%s1 + $0x168] sm:$0xf]
    %v131 = vld [vmem:[%s1 + $0x16c] sm:$0xf]
    %v132 = vld [vmem:[%s1 + $0x170] sm:$0xf]
    %v133 = vld [vmem:[%s1 + $0x174] sm:$0xf]
    %v134 = vld [vmem:[%s1 + $0x178] sm:$0xf]
    %v135 = vld [vmem:[%s1 + $0x17c] sm:$0xf]
    %v232 = vunpack.c.l.b16 %v40
    %v233 = vunpack.c.l.b16 %v41
    %v234 = vunpack.c.l.b16 %v42
    %v235 = vunpack.c.l.b16 %v43
    %v236 = vunpack.c.l.b16 %v44
    %v237 = vunpack.c.l.b16 %v45
    %v238 = vunpack.c.l.b16 %v46
    %v239 = vunpack.c.l.b16 %v47
    %v240 = vunpack.c.l.b16 %v48
    %v241 = vunpack.c.l.b16 %v49
    %v242 = vunpack.c.l.b16 %v50
    %v243 = vunpack.c.l.b16 %v51
    %v244 = vunpack.c.l.b16 %v52
    %v245 = vunpack.c.l.b16 %v53
    %v246 = vunpack.c.l.b16 %v54
    %v247 = vunpack.c.l.b16 %v55
    %v248 = vunpack.c.l.b16 %v56
    %v249 = vunpack.c.l.b16 %v57
    %v250 = vunpack.c.l.b16 %v58
    %v251 = vunpack.c.l.b16 %v59
    %v252 = vunpack.c.l.b16 %v60
    %v253 = vunpack.c.l.b16 %v61
    %v254 = vunpack.c.l.b16 %v62
    %v255 = vunpack.c.l.b16 %v63
    %v256 = vunpack.c.l.b16 %v64
    %v257 = vunpack.c.l.b16 %v65
    %v258 = vunpack.c.l.b16 %v66
    %v259 = vunpack.c.l.b16 %v67
    %v260 = vunpack.c.l.b16 %v68
    %v261 = vunpack.c.l.b16 %v69
    %v262 = vunpack.c.l.b16 %v70
    %v263 = vunpack.c.l.b16 %v71
    %v264 = vunpack.c.l.b16 %v72
    %v265 = vunpack.c.l.b16 %v73
    %v266 = vunpack.c.l.b16 %v74
    %v267 = vunpack.c.l.b16 %v75
    %v268 = vunpack.c.l.b16 %v76
    %v269 = vunpack.c.l.b16 %v77
    %v270 = vunpack.c.l.b16 %v78
    %v271 = vunpack.c.l.b16 %v79
    %v272 = vunpack.c.l.b16 %v80
    %v273 = vunpack.c.l.b16 %v81
    %v274 = vunpack.c.l.b16 %v82
    %v275 = vunpack.c.l.b16 %v83
    %v276 = vunpack.c.l.b16 %v84
    %v277 = vunpack.c.l.b16 %v85
    %v278 = vunpack.c.l.b16 %v86
    %v279 = vunpack.c.l.b16 %v87
    %v280 = vunpack.c.l.b16 %v88
    %v281 = vunpack.c.l.b16 %v89
    %v282 = vunpack.c.l.b16 %v90
    %v283 = vunpack.c.l.b16 %v91
    %v284 = vunpack.c.l.b16 %v92
    %v285 = vunpack.c.l.b16 %v93
    %v286 = vunpack.c.l.b16 %v94
    %v287 = vunpack.c.l.b16 %v95
    %v288 = vunpack.c.l.b16 %v96
    %v289 = vunpack.c.l.b16 %v97
    %v290 = vunpack.c.l.b16 %v98
    %v291 = vunpack.c.l.b16 %v99
    %v292 = vunpack.c.l.b16 %v100
    %v293 = vunpack.c.l.b16 %v101
    %v294 = vunpack.c.l.b16 %v102
    %v295 = vunpack.c.l.b16 %v103
    %v296 = vunpack.c.l.b16 %v104
    %v297 = vunpack.c.l.b16 %v105
    %v298 = vunpack.c.l.b16 %v106
    %v299 = vunpack.c.l.b16 %v107
    %v300 = vunpack.c.l.b16 %v108
    %v301 = vunpack.c.l.b16 %v109
    %v302 = vunpack.c.l.b16 %v110
    %v303 = vunpack.c.l.b16 %v111
    %v304 = vunpack.c.l.b16 %v112
    %v305 = vunpack.c.l.b16 %v113
    %v306 = vunpack.c.l.b16 %v114
    %v307 = vunpack.c.l.b16 %v115
    %v308 = vunpack.c.l.b16 %v116
    %v309 = vunpack.c.l.b16 %v117
    %v310 = vunpack.c.l.b16 %v118
    %v311 = vunpack.c.l.b16 %v119
    %v312 = vunpack.c.l.b16 %v120
    %v313 = vunpack.c.l.b16 %v121
    %v314 = vunpack.c.l.b16 %v122
    %v315 = vunpack.c.l.b16 %v123
    %v316 = vunpack.c.l.b16 %v124
    %v317 = vunpack.c.l.b16 %v125
    %v318 = vunpack.c.l.b16 %v126
    %v319 = vunpack.c.l.b16 %v127
    %v320 = vunpack.c.l.b16 %v128
    %v321 = vunpack.c.l.b16 %v129
    %v322 = vunpack.c.l.b16 %v130
    %v323 = vunpack.c.l.b16 %v131
    %v324 = vunpack.c.l.b16 %v132
    %v325 = vunpack.c.l.b16 %v133
    %v326 = vunpack.c.l.b16 %v134
    %v327 = vunpack.c.l.b16 %v135
    %v328 = vpack.c.b16 %v233, %v232
    %v329 = vpack.c.b16 %v235, %v234
    %v330 = vpack.c.b16 %v237, %v236
    %v331 = vpack.c.b16 %v239, %v238
    %v332 = vpack.c.b16 %v241, %v240
    %v333 = vpack.c.b16 %v243, %v242
    %v334 = vpack.c.b16 %v245, %v244
    %v335 = vpack.c.b16 %v247, %v246
    %v336 = vpack.c.b16 %v249, %v248
    %v337 = vpack.c.b16 %v251, %v250
    %v338 = vpack.c.b16 %v253, %v252
    %v339 = vpack.c.b16 %v255, %v254
    %v340 = vpack.c.b16 %v257, %v256
    %v341 = vpack.c.b16 %v259, %v258
    %v342 = vpack.c.b16 %v261, %v260
    %v343 = vpack.c.b16 %v263, %v262
    %v344 = vpack.c.b16 %v265, %v264
    %v345 = vpack.c.b16 %v267, %v266
    %v346 = vpack.c.b16 %v269, %v268
    %v347 = vpack.c.b16 %v271, %v270
    %v348 = vpack.c.b16 %v273, %v272
    %v349 = vpack.c.b16 %v275, %v274
    %v350 = vpack.c.b16 %v277, %v276
    %v351 = vpack.c.b16 %v279, %v278
    %v352 = vpack.c.b16 %v281, %v280
    %v353 = vpack.c.b16 %v283, %v282
    %v354 = vpack.c.b16 %v285, %v284
    %v355 = vpack.c.b16 %v287, %v286
    %v356 = vpack.c.b16 %v289, %v288
    %v357 = vpack.c.b16 %v291, %v290
    %v358 = vpack.c.b16 %v293, %v292
    %v359 = vpack.c.b16 %v295, %v294
    %v360 = vpack.c.b16 %v297, %v296
    %v361 = vpack.c.b16 %v299, %v298
    %v362 = vpack.c.b16 %v301, %v300
    %v363 = vpack.c.b16 %v303, %v302
    %v364 = vpack.c.b16 %v305, %v304
    %v365 = vpack.c.b16 %v307, %v306
    %v366 = vpack.c.b16 %v309, %v308
    %v367 = vpack.c.b16 %v311, %v310
    %v368 = vpack.c.b16 %v313, %v312
    %v369 = vpack.c.b16 %v315, %v314
    %v370 = vpack.c.b16 %v317, %v316
    %v371 = vpack.c.b16 %v319, %v318
    %v372 = vpack.c.b16 %v321, %v320
    %v373 = vpack.c.b16 %v323, %v322
    %v374 = vpack.c.b16 %v325, %v324
    %v375 = vpack.c.b16 %v327, %v326
    %424 = vmatpush.bf16.msra.mxu0 %v335
    %425 = vmatpush.bf16.msra.mxu0 %v334
    %426 = vmatpush.bf16.msra.mxu0 %v333
    %427 = vmatpush.bf16.msra.mxu0 %v332
    %428 = vmatpush.bf16.msra.mxu0 %v331
    %429 = vmatpush.bf16.msra.mxu0 %v330
    %430 = vmatpush.bf16.msra.mxu0 %v329
    %431 = vmatpush.bf16.msra.mxu0 %v328
    %432 = vmatmul.bf16.gmra.mxu0 %v34
    %v433 = vpop.f32.mrf.mxu0
    %v434 = vadd.f32 0.0, %v433
    %v435 = vpop.f32.mrf.mxu0
    %436 = vdwg.mxu0
    %437 = vmatpush.bf16.msra.mxu0 %v343
    %438 = vmatpush.bf16.msra.mxu0 %v342
    %439 = vmatpush.bf16.msra.mxu0 %v341
    %440 = vmatpush.bf16.msra.mxu0 %v340
    %441 = vmatpush.bf16.msra.mxu0 %v339
    %442 = vmatpush.bf16.msra.mxu0 %v338
    %443 = vmatpush.bf16.msra.mxu0 %v337
    %444 = vmatpush.bf16.msra.mxu0 %v336
    %445 = vmatmul.bf16.gmra.mxu0 %v35
    %v446 = vpop.f32.mrf.mxu0
    %v447 = vadd.f32 %v434, %v446
    %v448 = vpop.f32.mrf.mxu0
    %449 = vdwg.mxu0
    %450 = vmatpush.bf16.msra.mxu0 %v351
    %451 = vmatpush.bf16.msra.mxu0 %v350
    %452 = vmatpush.bf16.msra.mxu0 %v349
    %453 = vmatpush.bf16.msra.mxu0 %v348
    %454 = vmatpush.bf16.msra.mxu0 %v347
    %455 = vmatpush.bf16.msra.mxu0 %v346
    %456 = vmatpush.bf16.msra.mxu0 %v345
    %457 = vmatpush.bf16.msra.mxu0 %v344
    %458 = vmatmul.bf16.gmra.mxu0 %v36
    %v459 = vpop.f32.mrf.mxu0
    %v460 = vadd.f32 %v447, %v459
    %v461 = vpop.f32.mrf.mxu0
    %462 = vdwg.mxu0
    %463 = vmatpush.bf16.msra.mxu0 %v359
    %464 = vmatpush.bf16.msra.mxu0 %v358
    %465 = vmatpush.bf16.msra.mxu0 %v357
    %466 = vmatpush.bf16.msra.mxu0 %v356
    %467 = vmatpush.bf16.msra.mxu0 %v355
    %468 = vmatpush.bf16.msra.mxu0 %v354
    %469 = vmatpush.bf16.msra.mxu0 %v353
    %470 = vmatpush.bf16.msra.mxu0 %v352
    %471 = vmatmul.bf16.gmra.mxu0 %v37
    %v472 = vpop.f32.mrf.mxu0
    %v473 = vadd.f32 %v460, %v472
    %v474 = vpop.f32.mrf.mxu0
    %475 = vdwg.mxu0
    %476 = vmatpush.bf16.msra.mxu0 %v367
    %477 = vmatpush.bf16.msra.mxu0 %v366
    %478 = vmatpush.bf16.msra.mxu0 %v365
    %479 = vmatpush.bf16.msra.mxu0 %v364
    %480 = vmatpush.bf16.msra.mxu0 %v363
    %481 = vmatpush.bf16.msra.mxu0 %v362
    %482 = vmatpush.bf16.msra.mxu0 %v361
    %483 = vmatpush.bf16.msra.mxu0 %v360
    %484 = vmatmul.bf16.gmra.mxu0 %v38
    %v485 = vpop.f32.mrf.mxu0
    %v486 = vadd.f32 %v473, %v485
    %v487 = vpop.f32.mrf.mxu0
    %488 = vdwg.mxu0
    %489 = vmatpush.bf16.msra.mxu0 %v375
    %490 = vmatpush.bf16.msra.mxu0 %v374
    %491 = vmatpush.bf16.msra.mxu0 %v373
    %492 = vmatpush.bf16.msra.mxu0 %v372
    %493 = vmatpush.bf16.msra.mxu0 %v371
    %494 = vmatpush.bf16.msra.mxu0 %v370
    %495 = vmatpush.bf16.msra.mxu0 %v369
    %496 = vmatpush.bf16.msra.mxu0 %v368
    %497 = vmatmul.bf16.gmra.mxu0 %v39
    %v498 = vpop.f32.mrf.mxu0
    %v499 = vadd.f32 %v486, %v498
    %v500 = vpop.f32.mrf.mxu0
    %501 = vdwg.mxu0
    %v502 = vld [vmem:[%s5] sm:$0x1f]
    %v504 = vrot.slane %v502, 1
    %v506 = vadd.f32 %v499, %v504
    %v507 = vrot.slane %v502, 5
    %v509 = vadd.f32 %v499, %v507
    %v511 = vrot.slane %v506, 7
    %v513 = vrot.slane %v502, 3
    %v516 = vrot.slane %v509, 6
    %vm518 = vcmask 1040384
    %v519 = vsel %vm518, %v502, %v511
    %vm520 = vcmask 1044480
    %v521 = vsel %vm520, %v519, %v513
    %vm522 = vcmask 1045504
    %v523 = vsel %vm522, %v521, %v516
    %v524 = vld [vmem:[%s2] sm:$0xff]
    %v525 = vld [vmem:[%s2 + $0x8] sm:$0xff]
    %v526 = vld [vmem:[%s2 + $0x10] sm:$0xff]
    %v527 = vld [vmem:[%s2 + $0x18] sm:$0xff]
    %v528 = vld [vmem:[%s2 + $0x20] sm:$0xff]
    %v529 = vld [vmem:[%s2 + $0x28] sm:$0xff]
    %v530 = vld [vmem:[%s2 + $0x30] sm:$0xff]
    %v531 = vld [vmem:[%s2 + $0x38] sm:$0xff]
    %v532 = vld [vmem:[%s5 + $0x5] ss:$0 sm:$0xff]
    %v533 = vld [vmem:[%s5 + $0x6] ss:$0 sm:$0xff]
    %vm534 = vcmask 523264
    %v535 = vsel %vm534, %v523, 0.0
    %536 = vadd.xlane.f32.xlu0 %v535
    %v537 = vpop.xlane.xlu0 %536
    %vm538 = vcmask 517120
    %v539 = vsel %vm538, %v516, 0.0
    %540 = vadd.xlane.f32.xlu0 %v539
    %v541 = vpop.xlane.xlu0 %540
    %v542 = vrcp.pop 64.0
    %v543 = vmul.f32 64.0, %v542
    %v544 = vsub.f32 1.0, %v543
    %v545 = vmul.f32 %v542, %v544
    %v546 = vadd.f32 %v542, %v545
    %vm547 = vweird.f32 %v542
    %v548 = vsel %vm547, %v542, %v546
    %v549 = vmul.f32 %v537, %v548
    %v550 = vmul.f32 %v541, %v548
    %v551 = vsub.f32 %v523, %v549
    %v552 = vsub.f32 %v516, %v550
    %v553 = vmul.f32 %v551, %v551
    %v554 = vmul.f32 %v552, %v552
    %v555 = vsel %vm534, %v553, 0.0
    %556 = vadd.xlane.f32.xlu0 %v555
    %v557 = vpop.xlane.xlu0 %556
    %v558 = vsel %vm538, %v554, 0.0
    %559 = vadd.xlane.f32.xlu0 %v558
    %v560 = vpop.xlane.xlu0 %559
    %v561 = vmul.f32 %v557, %v548
    %v562 = vmul.f32 %v560, %v548
    %v563 = vadd.f32 %v561, 1e-06
    %v564 = vadd.f32 %v562, 1e-06
    %v565 = vrsqrt.pop %v563
    %v566 = vmul.f32 %v565, %v563
    %v567 = vmul.f32 %v566, %v565
    %v568 = vmul.f32 0.5, %v567
    %v569 = vsub.f32 1.5, %v568
    %v570 = vmul.f32 %v565, %v569
    %vm571 = vweird.f32 %v563
    %vm572 = vweird.f32 %v565
    %vm573 = vmor %vm571, %vm572
    %v574 = vsel %vm573, %v565, %v570
    %v575 = vrsqrt.pop %v564
    %v576 = vmul.f32 %v575, %v564
    %v577 = vmul.f32 %v576, %v575
    %v578 = vmul.f32 0.5, %v577
    %v579 = vsub.f32 1.5, %v578
    %v580 = vmul.f32 %v575, %v579
    %vm581 = vweird.f32 %v564
    %vm582 = vweird.f32 %v575
    %vm583 = vmor %vm581, %vm582
    %v584 = vsel %vm583, %v575, %v580
    %v585 = vmul.f32 %v551, %v574
    %v586 = vmul.f32 %v552, %v584
    %v587 = vmul.f32 %v585, %v532
    %v588 = vmul.f32 %v586, %v532
    %v589 = vadd.f32 %v587, %v533
    %v590 = vadd.f32 %v588, %v533
    %v591 = vpack.c.bf16 %v590, %v589
    %s592 = scalar_lea.vmem %s5, 7
    %v593 = vld [vmem:[%s592] ss:$8 sm:$0x3]
    %v595 = vperm.slane %v593, 0
    %v596 = vperm.slane %v593, 1
    %v607 = vunpack.c.l.b16 %v524
    %v608 = vunpack.c.h.b16 %v524
    %v609 = vunpack.c.l.b16 %v525
    %v610 = vunpack.c.h.b16 %v525
    %v611 = vunpack.c.l.b16 %v526
    %v612 = vunpack.c.h.b16 %v526
    %v613 = vunpack.c.l.b16 %v527
    %v614 = vunpack.c.h.b16 %v527
    %v615 = vunpack.c.l.b16 %v528
    %v616 = vunpack.c.h.b16 %v528
    %v617 = vunpack.c.l.b16 %v529
    %v618 = vunpack.c.h.b16 %v529
    %v619 = vunpack.c.l.b16 %v530
    %v620 = vunpack.c.h.b16 %v530
    %v621 = vunpack.c.l.b16 %v531
    %v622 = vunpack.c.h.b16 %v531
    %v623 = vpack.c.b16 %v609, %v607
    %v624 = vpack.c.b16 %v610, %v608
    %v625 = vpack.c.b16 %v613, %v611
    %v626 = vpack.c.b16 %v614, %v612
    %v627 = vpack.c.b16 %v617, %v615
    %v628 = vpack.c.b16 %v618, %v616
    %v629 = vpack.c.b16 %v621, %v619
    %v630 = vpack.c.b16 %v622, %v620
    %v640 = vsel %vm534, %v591, 0
    %642 = vmatpush.bf16.msra.mxu0 0
    %643 = vmatpush.bf16.msra.mxu0 0
    %644 = vmatpush.bf16.msra.mxu0 0
    %645 = vmatpush.bf16.msra.mxu0 0
    %646 = vmatpush.bf16.msra.mxu0 %v629
    %647 = vmatpush.bf16.msra.mxu0 %v627
    %648 = vmatpush.bf16.msra.mxu0 %v625
    %649 = vmatpush.bf16.msra.mxu0 %v623
    %650 = vmatmul.bf16.gmra.mxu0 %v640
    %v651 = vpop.f32.mrf.mxu0
    %v652 = vadd.f32 %v595, %v651
    %v653 = vpop.f32.mrf.mxu0
    %v654 = vadd.f32 %v595, %v653
    %655 = vdwg.mxu0
    %656 = vmatpush.bf16.msra.mxu0 0
    %657 = vmatpush.bf16.msra.mxu0 0
    %658 = vmatpush.bf16.msra.mxu0 0
    %659 = vmatpush.bf16.msra.mxu0 0
    %660 = vmatpush.bf16.msra.mxu0 %v630
    %661 = vmatpush.bf16.msra.mxu0 %v628
    %662 = vmatpush.bf16.msra.mxu0 %v626
    %663 = vmatpush.bf16.msra.mxu0 %v624
    %664 = vmatmul.bf16.gmra.mxu0 %v640
    %v665 = vpop.f32.mrf.mxu0
    %v666 = vadd.f32 %v596, %v665
    %v667 = vpop.f32.mrf.mxu0
    %v668 = vadd.f32 %v596, %v667
    %669 = vdwg.mxu0
    %671 = vrot.lane.b32.xlu0 %v652, 64
    %v672 = vpop.permute.xlu0 %671
    %vm673 = vcmask 130048
    %v674 = vsel %vm673, %v652, 0
    %v676 = vsel %vm673, %v672, 0
    %678 = vmatpush.xpose.msra.mxu0 0.0
    %679 = vmatpush.xpose.msra.mxu0 0.0
    %680 = vmatpush.xpose.msra.mxu0 0.0
    %681 = vmatpush.xpose.msra.mxu0 0.0
    %682 = vmatpush.xpose.msra.mxu0 0.0
    %683 = vmatpush.xpose.msra.mxu0 0.0
    %684 = vmatpush.xpose.msra.mxu0 0.0
    %685 = vmatpush.xpose.msra.mxu0 0.0
    %686 = vmatpush.xpose.msra.mxu0 0.0
    %687 = vmatpush.xpose.msra.mxu0 0.0
    %688 = vmatpush.xpose.msra.mxu0 0.0
    %689 = vmatpush.xpose.msra.mxu0 0.0
    %690 = vmatpush.xpose.msra.mxu0 0.0
    %691 = vmatpush.xpose.msra.mxu0 0.0
    %692 = vmatpush.xpose.msra.mxu0 0.0
    %693 = vmatpush.xpose.msra.mxu0 %v676
    %694 = vmatmul.f32.gmra.mxu0 %v674
    %v695 = vpop.f32.mrf.mxu0
    %v696 = vadd.f32 0.0, %v695
    %697 = vdwg.mxu0
    %v698 = vmul.f32 %v696, 0.25
    %vm699 = vcmask 36864
    %v700 = vsel %vm699, %v698, -inf
    %701 = vmax.xlane.f32.xlu0 %v700
    %v702 = vpop.xlane.xlu0 %701
    %v703 = vsub.f32 %v698, %v702
    %v704 = vmul.f32 %v703, 1.442695
    %v705 = vpow.pop %v704
    %v706 = vsel %vm699, %v705, 0.0
    %707 = vadd.xlane.f32.xlu0 %v706
    %v708 = vpop.xlane.xlu0 %707
    %v709 = vrcp.pop %v708
    %v710 = vmul.f32 %v708, %v709
    %v711 = vsub.f32 1.0, %v710
    %v712 = vmul.f32 %v709, %v711
    %v713 = vadd.f32 %v709, %v712
    %vm714 = vweird.f32 %v708
    %vm715 = vweird.f32 %v709
    %vm716 = vmor %vm714, %vm715
    %v717 = vsel %vm716, %v709, %v713
    %v718 = vand.u32 2147483647, %v708
    %vm719 = vcmp.eq.f32.partialorder %v718, 8.507059e+37
    %v720 = vand.u32 %v708, 2147483648
    %v721 = vor.u32 1.1754944e-38, %v720
    %v722 = vsel %vm719, %v721, %v717
    %v723 = vmul.f32 %v705, %v722
    %vm724 = vcmask 39936
    %v726 = vsel %vm724, %v723, 0
    %v729 = vsel %vm520, %v666, 0
    %731 = vmatpush.msra.mxu0 0.0
    %732 = vmatpush.msra.mxu0 0.0
    %733 = vmatpush.msra.mxu0 0.0
    %734 = vmatpush.msra.mxu0 0.0
    %735 = vmatpush.msra.mxu0 0.0
    %736 = vmatpush.msra.mxu0 0.0
    %737 = vmatpush.msra.mxu0 0.0
    %738 = vmatpush.msra.mxu0 0.0
    %739 = vmatpush.msra.mxu0 0.0
    %740 = vmatpush.msra.mxu0 0.0
    %741 = vmatpush.msra.mxu0 0.0
    %742 = vmatpush.msra.mxu0 0.0
    %743 = vmatpush.msra.mxu0 0.0
    %744 = vmatpush.msra.mxu0 0.0
    %745 = vmatpush.msra.mxu0 0.0
    %746 = vmatpush.msra.mxu0 %v729
    %747 = vmatmul.f32.gmra.mxu0 %v726
    %v748 = vpop.f32.mrf.mxu0
    %v749 = vadd.f32 0.0, %v748
    %750 = vdwg.mxu0
    %751 = vrot.lane.b32.xlu0 %v652, 112
    %v752 = vpop.permute.xlu0 %751
    %753 = vrot.lane.b32.xlu0 %v652, 48
    %v754 = vpop.permute.xlu0 %753
    %v755 = vsel %vm673, %v752, 0
    %v757 = vsel %vm673, %v754, 0
    %759 = vmatpush.xpose.msra.mxu0 0.0
    %760 = vmatpush.xpose.msra.mxu0 0.0
    %761 = vmatpush.xpose.msra.mxu0 0.0
    %762 = vmatpush.xpose.msra.mxu0 0.0
    %763 = vmatpush.xpose.msra.mxu0 0.0
    %764 = vmatpush.xpose.msra.mxu0 0.0
    %765 = vmatpush.xpose.msra.mxu0 0.0
    %766 = vmatpush.xpose.msra.mxu0 0.0
    %767 = vmatpush.xpose.msra.mxu0 0.0
    %768 = vmatpush.xpose.msra.mxu0 0.0
    %769 = vmatpush.xpose.msra.mxu0 0.0
    %770 = vmatpush.xpose.msra.mxu0 0.0
    %771 = vmatpush.xpose.msra.mxu0 0.0
    %772 = vmatpush.xpose.msra.mxu0 0.0
    %773 = vmatpush.xpose.msra.mxu0 0.0
    %774 = vmatpush.xpose.msra.mxu0 %v757
    %775 = vmatmul.f32.gmra.mxu0 %v755
    %v776 = vpop.f32.mrf.mxu0
    %v777 = vadd.f32 0.0, %v776
    %778 = vdwg.mxu0
    %v779 = vmul.f32 %v777, 0.25
    %v780 = vsel %vm699, %v779, -inf
    %781 = vmax.xlane.f32.xlu0 %v780
    %v782 = vpop.xlane.xlu0 %781
    %v783 = vsub.f32 %v779, %v782
    %v784 = vmul.f32 %v783, 1.442695
    %v785 = vpow.pop %v784
    %v786 = vsel %vm699, %v785, 0.0
    %787 = vadd.xlane.f32.xlu0 %v786
    %v788 = vpop.xlane.xlu0 %787
    %v789 = vrcp.pop %v788
    %v790 = vmul.f32 %v788, %v789
    %v791 = vsub.f32 1.0, %v790
    %v792 = vmul.f32 %v789, %v791
    %v793 = vadd.f32 %v789, %v792
    %vm794 = vweird.f32 %v788
    %vm795 = vweird.f32 %v789
    %vm796 = vmor %vm794, %vm795
    %v797 = vsel %vm796, %v789, %v793
    %v798 = vand.u32 2147483647, %v788
    %vm799 = vcmp.eq.f32.partialorder %v798, 8.507059e+37
    %v800 = vand.u32 %v788, 2147483648
    %v801 = vor.u32 1.1754944e-38, %v800
    %v802 = vsel %vm799, %v801, %v797
    %v803 = vmul.f32 %v785, %v802
    %804 = vrot.lane.b32.xlu0 %v666, 112
    %v805 = vpop.permute.xlu0 %804
    %v807 = vsel %vm724, %v803, 0
    %v809 = vsel %vm520, %v805, 0
    %811 = vmatpush.msra.mxu0 0.0
    %812 = vmatpush.msra.mxu0 0.0
    %813 = vmatpush.msra.mxu0 0.0
    %814 = vmatpush.msra.mxu0 0.0
    %815 = vmatpush.msra.mxu0 0.0
    %816 = vmatpush.msra.mxu0 0.0
    %817 = vmatpush.msra.mxu0 0.0
    %818 = vmatpush.msra.mxu0 0.0
    %819 = vmatpush.msra.mxu0 0.0
    %820 = vmatpush.msra.mxu0 0.0
    %821 = vmatpush.msra.mxu0 0.0
    %822 = vmatpush.msra.mxu0 0.0
    %823 = vmatpush.msra.mxu0 0.0
    %824 = vmatpush.msra.mxu0 0.0
    %825 = vmatpush.msra.mxu0 0.0
    %826 = vmatpush.msra.mxu0 %v809
    %827 = vmatmul.f32.gmra.mxu0 %v807
    %v828 = vpop.f32.mrf.mxu0
    %v829 = vadd.f32 0.0, %v828
    %830 = vdwg.mxu0
    %831 = vrot.lane.b32.xlu0 %v652, 96
    %v832 = vpop.permute.xlu0 %831
    %833 = vrot.lane.b32.xlu0 %v652, 32
    %v834 = vpop.permute.xlu0 %833
    %v835 = vsel %vm673, %v832, 0
    %v837 = vsel %vm673, %v834, 0
    %839 = vmatpush.xpose.msra.mxu0 0.0
    %840 = vmatpush.xpose.msra.mxu0 0.0
    %841 = vmatpush.xpose.msra.mxu0 0.0
    %842 = vmatpush.xpose.msra.mxu0 0.0
    %843 = vmatpush.xpose.msra.mxu0 0.0
    %844 = vmatpush.xpose.msra.mxu0 0.0
    %845 = vmatpush.xpose.msra.mxu0 0.0
    %846 = vmatpush.xpose.msra.mxu0 0.0
    %847 = vmatpush.xpose.msra.mxu0 0.0
    %848 = vmatpush.xpose.msra.mxu0 0.0
    %849 = vmatpush.xpose.msra.mxu0 0.0
    %850 = vmatpush.xpose.msra.mxu0 0.0
    %851 = vmatpush.xpose.msra.mxu0 0.0
    %852 = vmatpush.xpose.msra.mxu0 0.0
    %853 = vmatpush.xpose.msra.mxu0 0.0
    %854 = vmatpush.xpose.msra.mxu0 %v837
    %855 = vmatmul.f32.gmra.mxu0 %v835
    %v856 = vpop.f32.mrf.mxu0
    %v857 = vadd.f32 0.0, %v856
    %858 = vdwg.mxu0
    %v859 = vmul.f32 %v857, 0.25
    %v860 = vsel %vm699, %v859, -inf
    %861 = vmax.xlane.f32.xlu0 %v860
    %v862 = vpop.xlane.xlu0 %861
    %v863 = vsub.f32 %v859, %v862
    %v864 = vmul.f32 %v863, 1.442695
    %v865 = vpow.pop %v864
    %v866 = vsel %vm699, %v865, 0.0
    %867 = vadd.xlane.f32.xlu0 %v866
    %v868 = vpop.xlane.xlu0 %867
    %v869 = vrcp.pop %v868
    %v870 = vmul.f32 %v868, %v869
    %v871 = vsub.f32 1.0, %v870
    %v872 = vmul.f32 %v869, %v871
    %v873 = vadd.f32 %v869, %v872
    %vm874 = vweird.f32 %v868
    %vm875 = vweird.f32 %v869
    %vm876 = vmor %vm874, %vm875
    %v877 = vsel %vm876, %v869, %v873
    %v878 = vand.u32 2147483647, %v868
    %vm879 = vcmp.eq.f32.partialorder %v878, 8.507059e+37
    %v880 = vand.u32 %v868, 2147483648
    %v881 = vor.u32 1.1754944e-38, %v880
    %v882 = vsel %vm879, %v881, %v877
    %v883 = vmul.f32 %v865, %v882
    %884 = vrot.lane.b32.xlu0 %v666, 96
    %v885 = vpop.permute.xlu0 %884
    %v887 = vsel %vm724, %v883, 0
    %v889 = vsel %vm520, %v885, 0
    %891 = vmatpush.msra.mxu0 0.0
    %892 = vmatpush.msra.mxu0 0.0
    %893 = vmatpush.msra.mxu0 0.0
    %894 = vmatpush.msra.mxu0 0.0
    %895 = vmatpush.msra.mxu0 0.0
    %896 = vmatpush.msra.mxu0 0.0
    %897 = vmatpush.msra.mxu0 0.0
    %898 = vmatpush.msra.mxu0 0.0
    %899 = vmatpush.msra.mxu0 0.0
    %900 = vmatpush.msra.mxu0 0.0
    %901 = vmatpush.msra.mxu0 0.0
    %902 = vmatpush.msra.mxu0 0.0
    %903 = vmatpush.msra.mxu0 0.0
    %904 = vmatpush.msra.mxu0 0.0
    %905 = vmatpush.msra.mxu0 0.0
    %906 = vmatpush.msra.mxu0 %v889
    %907 = vmatmul.f32.gmra.mxu0 %v887
    %v908 = vpop.f32.mrf.mxu0
    %v909 = vadd.f32 0.0, %v908
    %910 = vdwg.mxu0
    %911 = vrot.lane.b32.xlu0 %v652, 80
    %v912 = vpop.permute.xlu0 %911
    %913 = vrot.lane.b32.xlu0 %v652, 16
    %v914 = vpop.permute.xlu0 %913
    %v915 = vsel %vm673, %v912, 0
    %v917 = vsel %vm673, %v914, 0
    %919 = vmatpush.xpose.msra.mxu0 0.0
    %920 = vmatpush.xpose.msra.mxu0 0.0
    %921 = vmatpush.xpose.msra.mxu0 0.0
    %922 = vmatpush.xpose.msra.mxu0 0.0
    %923 = vmatpush.xpose.msra.mxu0 0.0
    %924 = vmatpush.xpose.msra.mxu0 0.0
    %925 = vmatpush.xpose.msra.mxu0 0.0
    %926 = vmatpush.xpose.msra.mxu0 0.0
    %927 = vmatpush.xpose.msra.mxu0 0.0
    %928 = vmatpush.xpose.msra.mxu0 0.0
    %929 = vmatpush.xpose.msra.mxu0 0.0
    %930 = vmatpush.xpose.msra.mxu0 0.0
    %931 = vmatpush.xpose.msra.mxu0 0.0
    %932 = vmatpush.xpose.msra.mxu0 0.0
    %933 = vmatpush.xpose.msra.mxu0 0.0
    %934 = vmatpush.xpose.msra.mxu0 %v917
    %935 = vmatmul.f32.gmra.mxu0 %v915
    %v936 = vpop.f32.mrf.mxu0
    %v937 = vadd.f32 0.0, %v936
    %938 = vdwg.mxu0
    %v939 = vmul.f32 %v937, 0.25
    %v940 = vsel %vm699, %v939, -inf
    %941 = vmax.xlane.f32.xlu0 %v940
    %v942 = vpop.xlane.xlu0 %941
    %v943 = vsub.f32 %v939, %v942
    %v944 = vmul.f32 %v943, 1.442695
    %v945 = vpow.pop %v944
    %v946 = vsel %vm699, %v945, 0.0
    %947 = vadd.xlane.f32.xlu0 %v946
    %v948 = vpop.xlane.xlu0 %947
    %v949 = vrcp.pop %v948
    %v950 = vmul.f32 %v948, %v949
    %v951 = vsub.f32 1.0, %v950
    %v952 = vmul.f32 %v949, %v951
    %v953 = vadd.f32 %v949, %v952
    %vm954 = vweird.f32 %v948
    %vm955 = vweird.f32 %v949
    %vm956 = vmor %vm954, %vm955
    %v957 = vsel %vm956, %v949, %v953
    %v958 = vand.u32 2147483647, %v948
    %vm959 = vcmp.eq.f32.partialorder %v958, 8.507059e+37
    %v960 = vand.u32 %v948, 2147483648
    %v961 = vor.u32 1.1754944e-38, %v960
    %v962 = vsel %vm959, %v961, %v957
    %v963 = vmul.f32 %v945, %v962
    %964 = vrot.lane.b32.xlu0 %v666, 80
    %v965 = vpop.permute.xlu0 %964
    %v967 = vsel %vm724, %v963, 0
    %v969 = vsel %vm520, %v965, 0
    %971 = vmatpush.msra.mxu0 0.0
    %972 = vmatpush.msra.mxu0 0.0
    %973 = vmatpush.msra.mxu0 0.0
    %974 = vmatpush.msra.mxu0 0.0
    %975 = vmatpush.msra.mxu0 0.0
    %976 = vmatpush.msra.mxu0 0.0
    %977 = vmatpush.msra.mxu0 0.0
    %978 = vmatpush.msra.mxu0 0.0
    %979 = vmatpush.msra.mxu0 0.0
    %980 = vmatpush.msra.mxu0 0.0
    %981 = vmatpush.msra.mxu0 0.0
    %982 = vmatpush.msra.mxu0 0.0
    %983 = vmatpush.msra.mxu0 0.0
    %984 = vmatpush.msra.mxu0 0.0
    %985 = vmatpush.msra.mxu0 0.0
    %986 = vmatpush.msra.mxu0 %v969
    %987 = vmatmul.f32.gmra.mxu0 %v967
    %v988 = vpop.f32.mrf.mxu0
    %v989 = vadd.f32 0.0, %v988
    %990 = vdwg.mxu0
    %992 = vrot.lane.b32.xlu0 %v829, 16
    %v993 = vpop.permute.xlu0 %992
    %996 = vrot.lane.b32.xlu0 %v909, 32
    %v997 = vpop.permute.xlu0 %996
    %1000 = vrot.lane.b32.xlu0 %v989, 48
    %v1001 = vpop.permute.xlu0 %1000
    %v1003 = vsel %vm673, %v749, %v993
    %vm1004 = vcmask 261120
    %v1005 = vsel %vm1004, %v1003, %v997
    %vm1006 = vcmask 392192
    %v1007 = vsel %vm1006, %v1005, %v1001
    %vm1009 = vcmask 1042432
    %v1010 = vrot.slane %v652, 5
    %v1011 = vrot.slane %v654, 5
    %v1012 = vsel %vm1009, %v1010, %v1011
    %1013 = vrot.lane.b32.xlu0 %v1012, 64
    %v1014 = vpop.permute.xlu0 %1013
    %v1015 = vsel %vm673, %v1012, 0
    %v1017 = vsel %vm673, %v1014, 0
    %1019 = vmatpush.xpose.msra.mxu0 0.0
    %1020 = vmatpush.xpose.msra.mxu0 0.0
    %1021 = vmatpush.xpose.msra.mxu0 0.0
    %1022 = vmatpush.xpose.msra.mxu0 0.0
    %1023 = vmatpush.xpose.msra.mxu0 0.0
    %1024 = vmatpush.xpose.msra.mxu0 0.0
    %1025 = vmatpush.xpose.msra.mxu0 0.0
    %1026 = vmatpush.xpose.msra.mxu0 0.0
    %1027 = vmatpush.xpose.msra.mxu0 0.0
    %1028 = vmatpush.xpose.msra.mxu0 0.0
    %1029 = vmatpush.xpose.msra.mxu0 0.0
    %1030 = vmatpush.xpose.msra.mxu0 0.0
    %1031 = vmatpush.xpose.msra.mxu0 0.0
    %1032 = vmatpush.xpose.msra.mxu0 0.0
    %1033 = vmatpush.xpose.msra.mxu0 0.0
    %1034 = vmatpush.xpose.msra.mxu0 %v1017
    %1035 = vmatmul.f32.gmra.mxu0 %v1015
    %v1036 = vpop.f32.mrf.mxu0
    %v1037 = vadd.f32 0.0, %v1036
    %1038 = vdwg.mxu0
    %v1039 = vmul.f32 %v1037, 0.25
    %v1040 = vsel %vm699, %v1039, -inf
    %1041 = vmax.xlane.f32.xlu0 %v1040
    %v1042 = vpop.xlane.xlu0 %1041
    %v1043 = vsub.f32 %v1039, %v1042
    %v1044 = vmul.f32 %v1043, 1.442695
    %v1045 = vpow.pop %v1044
    %v1046 = vsel %vm699, %v1045, 0.0
    %1047 = vadd.xlane.f32.xlu0 %v1046
    %v1048 = vpop.xlane.xlu0 %1047
    %v1049 = vrcp.pop %v1048
    %v1050 = vmul.f32 %v1048, %v1049
    %v1051 = vsub.f32 1.0, %v1050
    %v1052 = vmul.f32 %v1049, %v1051
    %v1053 = vadd.f32 %v1049, %v1052
    %vm1054 = vweird.f32 %v1048
    %vm1055 = vweird.f32 %v1049
    %vm1056 = vmor %vm1054, %vm1055
    %v1057 = vsel %vm1056, %v1049, %v1053
    %v1058 = vand.u32 2147483647, %v1048
    %vm1059 = vcmp.eq.f32.partialorder %v1058, 8.507059e+37
    %v1060 = vand.u32 %v1048, 2147483648
    %v1061 = vor.u32 1.1754944e-38, %v1060
    %v1062 = vsel %vm1059, %v1061, %v1057
    %v1063 = vmul.f32 %v1045, %v1062
    %v1065 = vrot.slane %v666, 5
    %v1066 = vrot.slane %v668, 5
    %v1067 = vsel %vm1009, %v1065, %v1066
    %v1069 = vsel %vm724, %v1063, 0
    %v1071 = vsel %vm520, %v1067, 0
    %1073 = vmatpush.msra.mxu0 0.0
    %1074 = vmatpush.msra.mxu0 0.0
    %1075 = vmatpush.msra.mxu0 0.0
    %1076 = vmatpush.msra.mxu0 0.0
    %1077 = vmatpush.msra.mxu0 0.0
    %1078 = vmatpush.msra.mxu0 0.0
    %1079 = vmatpush.msra.mxu0 0.0
    %1080 = vmatpush.msra.mxu0 0.0
    %1081 = vmatpush.msra.mxu0 0.0
    %1082 = vmatpush.msra.mxu0 0.0
    %1083 = vmatpush.msra.mxu0 0.0
    %1084 = vmatpush.msra.mxu0 0.0
    %1085 = vmatpush.msra.mxu0 0.0
    %1086 = vmatpush.msra.mxu0 0.0
    %1087 = vmatpush.msra.mxu0 0.0
    %1088 = vmatpush.msra.mxu0 %v1071
    %1089 = vmatmul.f32.gmra.mxu0 %v1069
    %v1090 = vpop.f32.mrf.mxu0
    %v1091 = vadd.f32 0.0, %v1090
    %1092 = vdwg.mxu0
    %1093 = vrot.lane.b32.xlu0 %v1012, 112
    %v1094 = vpop.permute.xlu0 %1093
    %1095 = vrot.lane.b32.xlu0 %v1012, 48
    %v1096 = vpop.permute.xlu0 %1095
    %v1097 = vsel %vm673, %v1094, 0
    %v1099 = vsel %vm673, %v1096, 0
    %1101 = vmatpush.xpose.msra.mxu0 0.0
    %1102 = vmatpush.xpose.msra.mxu0 0.0
    %1103 = vmatpush.xpose.msra.mxu0 0.0
    %1104 = vmatpush.xpose.msra.mxu0 0.0
    %1105 = vmatpush.xpose.msra.mxu0 0.0
    %1106 = vmatpush.xpose.msra.mxu0 0.0
    %1107 = vmatpush.xpose.msra.mxu0 0.0
    %1108 = vmatpush.xpose.msra.mxu0 0.0
    %1109 = vmatpush.xpose.msra.mxu0 0.0
    %1110 = vmatpush.xpose.msra.mxu0 0.0
    %1111 = vmatpush.xpose.msra.mxu0 0.0
    %1112 = vmatpush.xpose.msra.mxu0 0.0
    %1113 = vmatpush.xpose.msra.mxu0 0.0
    %1114 = vmatpush.xpose.msra.mxu0 0.0
    %1115 = vmatpush.xpose.msra.mxu0 0.0
    %1116 = vmatpush.xpose.msra.mxu0 %v1099
    %1117 = vmatmul.f32.gmra.mxu0 %v1097
    %v1118 = vpop.f32.mrf.mxu0
    %v1119 = vadd.f32 0.0, %v1118
    %1120 = vdwg.mxu0
    %v1121 = vmul.f32 %v1119, 0.25
    %v1122 = vsel %vm699, %v1121, -inf
    %1123 = vmax.xlane.f32.xlu0 %v1122
    %v1124 = vpop.xlane.xlu0 %1123
    %v1125 = vsub.f32 %v1121, %v1124
    %v1126 = vmul.f32 %v1125, 1.442695
    %v1127 = vpow.pop %v1126
    %v1128 = vsel %vm699, %v1127, 0.0
    %1129 = vadd.xlane.f32.xlu0 %v1128
    %v1130 = vpop.xlane.xlu0 %1129
    %v1131 = vrcp.pop %v1130
    %v1132 = vmul.f32 %v1130, %v1131
    %v1133 = vsub.f32 1.0, %v1132
    %v1134 = vmul.f32 %v1131, %v1133
    %v1135 = vadd.f32 %v1131, %v1134
    %vm1136 = vweird.f32 %v1130
    %vm1137 = vweird.f32 %v1131
    %vm1138 = vmor %vm1136, %vm1137
    %v1139 = vsel %vm1138, %v1131, %v1135
    %v1140 = vand.u32 2147483647, %v1130
    %vm1141 = vcmp.eq.f32.partialorder %v1140, 8.507059e+37
    %v1142 = vand.u32 %v1130, 2147483648
    %v1143 = vor.u32 1.1754944e-38, %v1142
    %v1144 = vsel %vm1141, %v1143, %v1139
    %v1145 = vmul.f32 %v1127, %v1144
    %1146 = vrot.lane.b32.xlu0 %v1067, 112
    %v1147 = vpop.permute.xlu0 %1146
    %v1149 = vsel %vm724, %v1145, 0
    %v1151 = vsel %vm520, %v1147, 0
    %1153 = vmatpush.msra.mxu0 0.0
    %1154 = vmatpush.msra.mxu0 0.0
    %1155 = vmatpush.msra.mxu0 0.0
    %1156 = vmatpush.msra.mxu0 0.0
    %1157 = vmatpush.msra.mxu0 0.0
    %1158 = vmatpush.msra.mxu0 0.0
    %1159 = vmatpush.msra.mxu0 0.0
    %1160 = vmatpush.msra.mxu0 0.0
    %1161 = vmatpush.msra.mxu0 0.0
    %1162 = vmatpush.msra.mxu0 0.0
    %1163 = vmatpush.msra.mxu0 0.0
    %1164 = vmatpush.msra.mxu0 0.0
    %1165 = vmatpush.msra.mxu0 0.0
    %1166 = vmatpush.msra.mxu0 0.0
    %1167 = vmatpush.msra.mxu0 0.0
    %1168 = vmatpush.msra.mxu0 %v1151
    %1169 = vmatmul.f32.gmra.mxu0 %v1149
    %v1170 = vpop.f32.mrf.mxu0
    %v1171 = vadd.f32 0.0, %v1170
    %1172 = vdwg.mxu0
    %1173 = vrot.lane.b32.xlu0 %v1012, 96
    %v1174 = vpop.permute.xlu0 %1173
    %1175 = vrot.lane.b32.xlu0 %v1012, 32
    %v1176 = vpop.permute.xlu0 %1175
    %v1177 = vsel %vm673, %v1174, 0
    %v1179 = vsel %vm673, %v1176, 0
    %1181 = vmatpush.xpose.msra.mxu0 0.0
    %1182 = vmatpush.xpose.msra.mxu0 0.0
    %1183 = vmatpush.xpose.msra.mxu0 0.0
    %1184 = vmatpush.xpose.msra.mxu0 0.0
    %1185 = vmatpush.xpose.msra.mxu0 0.0
    %1186 = vmatpush.xpose.msra.mxu0 0.0
    %1187 = vmatpush.xpose.msra.mxu0 0.0
    %1188 = vmatpush.xpose.msra.mxu0 0.0
    %1189 = vmatpush.xpose.msra.mxu0 0.0
    %1190 = vmatpush.xpose.msra.mxu0 0.0
    %1191 = vmatpush.xpose.msra.mxu0 0.0
    %1192 = vmatpush.xpose.msra.mxu0 0.0
    %1193 = vmatpush.xpose.msra.mxu0 0.0
    %1194 = vmatpush.xpose.msra.mxu0 0.0
    %1195 = vmatpush.xpose.msra.mxu0 0.0
    %1196 = vmatpush.xpose.msra.mxu0 %v1179
    %1197 = vmatmul.f32.gmra.mxu0 %v1177
    %v1198 = vpop.f32.mrf.mxu0
    %v1199 = vadd.f32 0.0, %v1198
    %1200 = vdwg.mxu0
    %v1201 = vmul.f32 %v1199, 0.25
    %v1202 = vsel %vm699, %v1201, -inf
    %1203 = vmax.xlane.f32.xlu0 %v1202
    %v1204 = vpop.xlane.xlu0 %1203
    %v1205 = vsub.f32 %v1201, %v1204
    %v1206 = vmul.f32 %v1205, 1.442695
    %v1207 = vpow.pop %v1206
    %v1208 = vsel %vm699, %v1207, 0.0
    %1209 = vadd.xlane.f32.xlu0 %v1208
    %v1210 = vpop.xlane.xlu0 %1209
    %v1211 = vrcp.pop %v1210
    %v1212 = vmul.f32 %v1210, %v1211
    %v1213 = vsub.f32 1.0, %v1212
    %v1214 = vmul.f32 %v1211, %v1213
    %v1215 = vadd.f32 %v1211, %v1214
    %vm1216 = vweird.f32 %v1210
    %vm1217 = vweird.f32 %v1211
    %vm1218 = vmor %vm1216, %vm1217
    %v1219 = vsel %vm1218, %v1211, %v1215
    %v1220 = vand.u32 2147483647, %v1210
    %vm1221 = vcmp.eq.f32.partialorder %v1220, 8.507059e+37
    %v1222 = vand.u32 %v1210, 2147483648
    %v1223 = vor.u32 1.1754944e-38, %v1222
    %v1224 = vsel %vm1221, %v1223, %v1219
    %v1225 = vmul.f32 %v1207, %v1224
    %1226 = vrot.lane.b32.xlu0 %v1067, 96
    %v1227 = vpop.permute.xlu0 %1226
    %v1229 = vsel %vm724, %v1225, 0
    %v1231 = vsel %vm520, %v1227, 0
    %1233 = vmatpush.msra.mxu0 0.0
    %1234 = vmatpush.msra.mxu0 0.0
    %1235 = vmatpush.msra.mxu0 0.0
    %1236 = vmatpush.msra.mxu0 0.0
    %1237 = vmatpush.msra.mxu0 0.0
    %1238 = vmatpush.msra.mxu0 0.0
    %1239 = vmatpush.msra.mxu0 0.0
    %1240 = vmatpush.msra.mxu0 0.0
    %1241 = vmatpush.msra.mxu0 0.0
    %1242 = vmatpush.msra.mxu0 0.0
    %1243 = vmatpush.msra.mxu0 0.0
    %1244 = vmatpush.msra.mxu0 0.0
    %1245 = vmatpush.msra.mxu0 0.0
    %1246 = vmatpush.msra.mxu0 0.0
    %1247 = vmatpush.msra.mxu0 0.0
    %1248 = vmatpush.msra.mxu0 %v1231
    %1249 = vmatmul.f32.gmra.mxu0 %v1229
    %v1250 = vpop.f32.mrf.mxu0
    %v1251 = vadd.f32 0.0, %v1250
    %1252 = vdwg.mxu0
    %1253 = vrot.lane.b32.xlu0 %v1012, 80
    %v1254 = vpop.permute.xlu0 %1253
    %1255 = vrot.lane.b32.xlu0 %v1012, 16
    %v1256 = vpop.permute.xlu0 %1255
    %v1257 = vsel %vm673, %v1254, 0
    %v1259 = vsel %vm673, %v1256, 0
    %1261 = vmatpush.xpose.msra.mxu0 0.0
    %1262 = vmatpush.xpose.msra.mxu0 0.0
    %1263 = vmatpush.xpose.msra.mxu0 0.0
    %1264 = vmatpush.xpose.msra.mxu0 0.0
    %1265 = vmatpush.xpose.msra.mxu0 0.0
    %1266 = vmatpush.xpose.msra.mxu0 0.0
    %1267 = vmatpush.xpose.msra.mxu0 0.0
    %1268 = vmatpush.xpose.msra.mxu0 0.0
    %1269 = vmatpush.xpose.msra.mxu0 0.0
    %1270 = vmatpush.xpose.msra.mxu0 0.0
    %1271 = vmatpush.xpose.msra.mxu0 0.0
    %1272 = vmatpush.xpose.msra.mxu0 0.0
    %1273 = vmatpush.xpose.msra.mxu0 0.0
    %1274 = vmatpush.xpose.msra.mxu0 0.0
    %1275 = vmatpush.xpose.msra.mxu0 0.0
    %1276 = vmatpush.xpose.msra.mxu0 %v1259
    %1277 = vmatmul.f32.gmra.mxu0 %v1257
    %v1278 = vpop.f32.mrf.mxu0
    %v1279 = vadd.f32 0.0, %v1278
    %1280 = vdwg.mxu0
    %v1281 = vmul.f32 %v1279, 0.25
    %v1282 = vsel %vm699, %v1281, -inf
    %1283 = vmax.xlane.f32.xlu0 %v1282
    %v1284 = vpop.xlane.xlu0 %1283
    %v1285 = vsub.f32 %v1281, %v1284
    %v1286 = vmul.f32 %v1285, 1.442695
    %v1287 = vpow.pop %v1286
    %v1288 = vsel %vm699, %v1287, 0.0
    %1289 = vadd.xlane.f32.xlu0 %v1288
    %v1290 = vpop.xlane.xlu0 %1289
    %v1291 = vrcp.pop %v1290
    %v1292 = vmul.f32 %v1290, %v1291
    %v1293 = vsub.f32 1.0, %v1292
    %v1294 = vmul.f32 %v1291, %v1293
    %v1295 = vadd.f32 %v1291, %v1294
    %vm1296 = vweird.f32 %v1290
    %vm1297 = vweird.f32 %v1291
    %vm1298 = vmor %vm1296, %vm1297
    %v1299 = vsel %vm1298, %v1291, %v1295
    %v1300 = vand.u32 2147483647, %v1290
    %vm1301 = vcmp.eq.f32.partialorder %v1300, 8.507059e+37
    %v1302 = vand.u32 %v1290, 2147483648
    %v1303 = vor.u32 1.1754944e-38, %v1302
    %v1304 = vsel %vm1301, %v1303, %v1299
    %v1305 = vmul.f32 %v1287, %v1304
    %1306 = vrot.lane.b32.xlu0 %v1067, 80
    %v1307 = vpop.permute.xlu0 %1306
    %v1309 = vsel %vm724, %v1305, 0
    %v1311 = vsel %vm520, %v1307, 0
    %1313 = vmatpush.msra.mxu0 0.0
    %1314 = vmatpush.msra.mxu0 0.0
    %1315 = vmatpush.msra.mxu0 0.0
    %1316 = vmatpush.msra.mxu0 0.0
    %1317 = vmatpush.msra.mxu0 0.0
    %1318 = vmatpush.msra.mxu0 0.0
    %1319 = vmatpush.msra.mxu0 0.0
    %1320 = vmatpush.msra.mxu0 0.0
    %1321 = vmatpush.msra.mxu0 0.0
    %1322 = vmatpush.msra.mxu0 0.0
    %1323 = vmatpush.msra.mxu0 0.0
    %1324 = vmatpush.msra.mxu0 0.0
    %1325 = vmatpush.msra.mxu0 0.0
    %1326 = vmatpush.msra.mxu0 0.0
    %1327 = vmatpush.msra.mxu0 0.0
    %1328 = vmatpush.msra.mxu0 %v1311
    %1329 = vmatmul.f32.gmra.mxu0 %v1309
    %v1330 = vpop.f32.mrf.mxu0
    %v1331 = vadd.f32 0.0, %v1330
    %1332 = vdwg.mxu0
    %1334 = vrot.lane.b32.xlu0 %v1171, 16
    %v1335 = vpop.permute.xlu0 %1334
    %1338 = vrot.lane.b32.xlu0 %v1251, 32
    %v1339 = vpop.permute.xlu0 %1338
    %1342 = vrot.lane.b32.xlu0 %v1331, 48
    %v1343 = vpop.permute.xlu0 %1342
    %v1345 = vsel %vm673, %v1091, %v1335
    %v1346 = vsel %vm1004, %v1345, %v1339
    %v1347 = vsel %vm1006, %v1346, %v1343
    %v1349 = vrot.slane %v1347, 3
    %v1351 = vsel %vm520, %v1007, %v1349
    %v1352 = vpack.c.bf16 %v1349, %v1351
    %v1353 = vld [vmem:[%s5 + $0x10] ss:$0 sm:$0xff]
    %1354 = vrot.lane.b32.xlu0 %v624, 64
    %v1355 = vpop.permute.xlu0 %1354
    %1356 = vrot.lane.b32.xlu0 %v626, 64
    %v1357 = vpop.permute.xlu0 %1356
    %1358 = vrot.lane.b32.xlu0 %v628, 64
    %v1359 = vpop.permute.xlu0 %1358
    %1360 = vrot.lane.b32.xlu0 %v630, 64
    %v1361 = vpop.permute.xlu0 %1360
    %v1367 = vsel %vm534, %v1352, 0
    %1369 = vmatpush.bf16.msra.mxu0 0
    %1370 = vmatpush.bf16.msra.mxu0 0
    %1371 = vmatpush.bf16.msra.mxu0 0
    %1372 = vmatpush.bf16.msra.mxu0 0
    %1373 = vmatpush.bf16.msra.mxu0 %v1361
    %1374 = vmatpush.bf16.msra.mxu0 %v1359
    %1375 = vmatpush.bf16.msra.mxu0 %v1357
    %1376 = vmatpush.bf16.msra.mxu0 %v1355
    %1377 = vmatmul.bf16.gmra.mxu0 %v1367
    %v1378 = vpop.f32.mrf.mxu0
    %v1379 = vadd.f32 %v1353, %v1378
    %v1380 = vpop.f32.mrf.mxu0
    %v1381 = vadd.f32 %v1353, %v1380
    %1382 = vdwg.mxu0
    %v1383 = vadd.f32 %v523, %v1379
    %v1384 = vadd.f32 %v516, %v1381
    %v1385 = vld [vmem:[%s5 + $0x11] ss:$0 sm:$0xff]
    %v1386 = vld [vmem:[%s5 + $0x12] ss:$0 sm:$0xff]
    %v1387 = vsel %vm534, %v1383, 0.0
    %1388 = vadd.xlane.f32.xlu0 %v1387
    %v1389 = vpop.xlane.xlu0 %1388
    %v1390 = vsel %vm538, %v1384, 0.0
    %1391 = vadd.xlane.f32.xlu0 %v1390
    %v1392 = vpop.xlane.xlu0 %1391
    %v1393 = vmul.f32 %v1389, %v548
    %v1394 = vmul.f32 %v1392, %v548
    %v1395 = vsub.f32 %v1383, %v1393
    %v1396 = vsub.f32 %v1384, %v1394
    %v1397 = vmul.f32 %v1395, %v1395
    %v1398 = vmul.f32 %v1396, %v1396
    %v1399 = vsel %vm534, %v1397, 0.0
    %1400 = vadd.xlane.f32.xlu0 %v1399
    %v1401 = vpop.xlane.xlu0 %1400
    %v1402 = vsel %vm538, %v1398, 0.0
    %1403 = vadd.xlane.f32.xlu0 %v1402
    %v1404 = vpop.xlane.xlu0 %1403
    %v1405 = vmul.f32 %v1401, %v548
    %v1406 = vmul.f32 %v1404, %v548
    %v1407 = vadd.f32 %v1405, 1e-06
    %v1408 = vadd.f32 %v1406, 1e-06
    %v1409 = vrsqrt.pop %v1407
    %v1410 = vmul.f32 %v1409, %v1407
    %v1411 = vmul.f32 %v1410, %v1409
    %v1412 = vmul.f32 0.5, %v1411
    %v1413 = vsub.f32 1.5, %v1412
    %v1414 = vmul.f32 %v1409, %v1413
    %vm1415 = vweird.f32 %v1407
    %vm1416 = vweird.f32 %v1409
    %vm1417 = vmor %vm1415, %vm1416
    %v1418 = vsel %vm1417, %v1409, %v1414
    %v1419 = vrsqrt.pop %v1408
    %v1420 = vmul.f32 %v1419, %v1408
    %v1421 = vmul.f32 %v1420, %v1419
    %v1422 = vmul.f32 0.5, %v1421
    %v1423 = vsub.f32 1.5, %v1422
    %v1424 = vmul.f32 %v1419, %v1423
    %vm1425 = vweird.f32 %v1408
    %vm1426 = vweird.f32 %v1419
    %vm1427 = vmor %vm1425, %vm1426
    %v1428 = vsel %vm1427, %v1419, %v1424
    %v1429 = vmul.f32 %v1395, %v1418
    %v1430 = vmul.f32 %v1396, %v1428
    %v1431 = vmul.f32 %v1429, %v1385
    %v1432 = vmul.f32 %v1430, %v1385
    %v1433 = vadd.f32 %v1431, %v1386
    %v1434 = vadd.f32 %v1432, %v1386
    %v1435 = vpack.c.bf16 %v1434, %v1433
    %v1436 = vld [vmem:[%s3] sm:$0xff]
    %v1437 = vld [vmem:[%s3 + $0x8] sm:$0xff]
    %v1438 = vld [vmem:[%s3 + $0x10] sm:$0xff]
    %v1439 = vld [vmem:[%s3 + $0x18] sm:$0xff]
    %v1440 = vld [vmem:[%s3 + $0x20] sm:$0xff]
    %v1441 = vld [vmem:[%s3 + $0x28] sm:$0xff]
    %v1442 = vld [vmem:[%s3 + $0x30] sm:$0xff]
    %v1443 = vld [vmem:[%s3 + $0x38] sm:$0xff]
    %s1444 = scalar_lea.vmem %s5, 19
    %v1445 = vld [vmem:[%s1444] ss:$8 sm:$0x3]
    %v1447 = vperm.slane %v1445, 0
    %v1448 = vperm.slane %v1445, 1
    %v1459 = vunpack.c.l.b16 %v1436
    %v1460 = vunpack.c.h.b16 %v1436
    %v1461 = vunpack.c.l.b16 %v1437
    %v1462 = vunpack.c.h.b16 %v1437
    %v1463 = vunpack.c.l.b16 %v1438
    %v1464 = vunpack.c.h.b16 %v1438
    %v1465 = vunpack.c.l.b16 %v1439
    %v1466 = vunpack.c.h.b16 %v1439
    %v1467 = vunpack.c.l.b16 %v1440
    %v1468 = vunpack.c.h.b16 %v1440
    %v1469 = vunpack.c.l.b16 %v1441
    %v1470 = vunpack.c.h.b16 %v1441
    %v1471 = vunpack.c.l.b16 %v1442
    %v1472 = vunpack.c.h.b16 %v1442
    %v1473 = vunpack.c.l.b16 %v1443
    %v1474 = vunpack.c.h.b16 %v1443
    %v1475 = vpack.c.b16 %v1461, %v1459
    %v1476 = vpack.c.b16 %v1462, %v1460
    %v1477 = vpack.c.b16 %v1465, %v1463
    %v1478 = vpack.c.b16 %v1466, %v1464
    %v1479 = vpack.c.b16 %v1469, %v1467
    %v1480 = vpack.c.b16 %v1470, %v1468
    %v1481 = vpack.c.b16 %v1473, %v1471
    %v1482 = vpack.c.b16 %v1474, %v1472
    %v1492 = vsel %vm534, %v1435, 0
    %1494 = vmatpush.bf16.msra.mxu0 0
    %1495 = vmatpush.bf16.msra.mxu0 0
    %1496 = vmatpush.bf16.msra.mxu0 0
    %1497 = vmatpush.bf16.msra.mxu0 0
    %1498 = vmatpush.bf16.msra.mxu0 %v1481
    %1499 = vmatpush.bf16.msra.mxu0 %v1479
    %1500 = vmatpush.bf16.msra.mxu0 %v1477
    %1501 = vmatpush.bf16.msra.mxu0 %v1475
    %1502 = vmatmul.bf16.gmra.mxu0 %v1492
    %v1503 = vpop.f32.mrf.mxu0
    %v1504 = vadd.f32 %v1447, %v1503
    %v1505 = vpop.f32.mrf.mxu0
    %v1506 = vadd.f32 %v1447, %v1505
    %1507 = vdwg.mxu0
    %1508 = vmatpush.bf16.msra.mxu0 0
    %1509 = vmatpush.bf16.msra.mxu0 0
    %1510 = vmatpush.bf16.msra.mxu0 0
    %1511 = vmatpush.bf16.msra.mxu0 0
    %1512 = vmatpush.bf16.msra.mxu0 %v1482
    %1513 = vmatpush.bf16.msra.mxu0 %v1480
    %1514 = vmatpush.bf16.msra.mxu0 %v1478
    %1515 = vmatpush.bf16.msra.mxu0 %v1476
    %1516 = vmatmul.bf16.gmra.mxu0 %v1492
    %v1517 = vpop.f32.mrf.mxu0
    %v1518 = vadd.f32 %v1448, %v1517
    %v1519 = vpop.f32.mrf.mxu0
    %v1520 = vadd.f32 %v1448, %v1519
    %1521 = vdwg.mxu0
    %v1522 = vmul.f32 %v1504, 0.5
    %v1523 = vmul.f32 %v1518, 0.5
    %v1524 = vmul.f32 %v1506, 0.5
    %v1525 = vmul.f32 %v1520, 0.5
    %v1526 = vmul.f32 %v1504, 0.044715
    %v1527 = vmul.f32 %v1518, 0.044715
    %v1528 = vmul.f32 %v1506, 0.044715
    %v1529 = vmul.f32 %v1520, 0.044715
    %v1530 = vmul.f32 %v1526, %v1504
    %v1531 = vmul.f32 %v1527, %v1518
    %v1532 = vmul.f32 %v1528, %v1506
    %v1533 = vmul.f32 %v1529, %v1520
    %v1534 = vmul.f32 %v1530, %v1504
    %v1535 = vmul.f32 %v1531, %v1518
    %v1536 = vmul.f32 %v1532, %v1506
    %v1537 = vmul.f32 %v1533, %v1520
    %v1538 = vadd.f32 %v1504, %v1534
    %v1539 = vadd.f32 %v1518, %v1535
    %v1540 = vadd.f32 %v1506, %v1536
    %v1541 = vadd.f32 %v1520, %v1537
    %v1542 = vmul.f32 %v1538, 0.7978846
    %v1543 = vmul.f32 %v1539, 0.7978846
    %v1544 = vmul.f32 %v1540, 0.7978846
    %v1545 = vmul.f32 %v1541, 0.7978846
    %v1546 = vtanh.pop %v1542
    %v1547 = vtanh.pop %v1543
    %v1548 = vtanh.pop %v1544
    %v1549 = vtanh.pop %v1545
    %v1550 = vadd.f32 %v1546, 1.0
    %v1551 = vadd.f32 %v1547, 1.0
    %v1552 = vadd.f32 %v1548, 1.0
    %v1553 = vadd.f32 %v1549, 1.0
    %v1554 = vmul.f32 %v1522, %v1550
    %v1555 = vmul.f32 %v1523, %v1551
    %v1556 = vmul.f32 %v1524, %v1552
    %v1557 = vmul.f32 %v1525, %v1553
    %v1558 = vpack.c.bf16 %v1556, %v1554
    %v1559 = vpack.c.bf16 %v1557, %v1555
    %v1560 = vld [vmem:[%s4] sm:$0xf]
    %v1561 = vld [vmem:[%s4 + $0x4] sm:$0xf]
    %v1562 = vld [vmem:[%s4 + $0x8] sm:$0xf]
    %v1563 = vld [vmem:[%s4 + $0xc] sm:$0xf]
    %v1564 = vld [vmem:[%s4 + $0x10] sm:$0xf]
    %v1565 = vld [vmem:[%s4 + $0x14] sm:$0xf]
    %v1566 = vld [vmem:[%s4 + $0x18] sm:$0xf]
    %v1567 = vld [vmem:[%s4 + $0x1c] sm:$0xf]
    %v1568 = vld [vmem:[%s4 + $0x20] sm:$0xf]
    %v1569 = vld [vmem:[%s4 + $0x24] sm:$0xf]
    %v1570 = vld [vmem:[%s4 + $0x28] sm:$0xf]
    %v1571 = vld [vmem:[%s4 + $0x2c] sm:$0xf]
    %v1572 = vld [vmem:[%s4 + $0x30] sm:$0xf]
    %v1573 = vld [vmem:[%s4 + $0x34] sm:$0xf]
    %v1574 = vld [vmem:[%s4 + $0x38] sm:$0xf]
    %v1575 = vld [vmem:[%s4 + $0x3c] sm:$0xf]
    %v1576 = vld [vmem:[%s4 + $0x40] sm:$0xf]
    %v1577 = vld [vmem:[%s4 + $0x44] sm:$0xf]
    %v1578 = vld [vmem:[%s4 + $0x48] sm:$0xf]
    %v1579 = vld [vmem:[%s4 + $0x4c] sm:$0xf]
    %v1580 = vld [vmem:[%s4 + $0x50] sm:$0xf]
    %v1581 = vld [vmem:[%s4 + $0x54] sm:$0xf]
    %v1582 = vld [vmem:[%s4 + $0x58] sm:$0xf]
    %v1583 = vld [vmem:[%s4 + $0x5c] sm:$0xf]
    %v1584 = vld [vmem:[%s4 + $0x60] sm:$0xf]
    %v1585 = vld [vmem:[%s4 + $0x64] sm:$0xf]
    %v1586 = vld [vmem:[%s4 + $0x68] sm:$0xf]
    %v1587 = vld [vmem:[%s4 + $0x6c] sm:$0xf]
    %v1588 = vld [vmem:[%s4 + $0x70] sm:$0xf]
    %v1589 = vld [vmem:[%s4 + $0x74] sm:$0xf]
    %v1590 = vld [vmem:[%s4 + $0x78] sm:$0xf]
    %v1591 = vld [vmem:[%s4 + $0x7c] sm:$0xf]
    %v1592 = vld [vmem:[%s5 + $0x14] ss:$0 sm:$0xff]
    %v1625 = vunpack.c.l.b16 %v1560
    %v1626 = vunpack.c.l.b16 %v1561
    %v1627 = vunpack.c.l.b16 %v1562
    %v1628 = vunpack.c.l.b16 %v1563
    %v1629 = vunpack.c.l.b16 %v1564
    %v1630 = vunpack.c.l.b16 %v1565
    %v1631 = vunpack.c.l.b16 %v1566
    %v1632 = vunpack.c.l.b16 %v1567
    %v1633 = vunpack.c.l.b16 %v1568
    %v1634 = vunpack.c.l.b16 %v1569
    %v1635 = vunpack.c.l.b16 %v1570
    %v1636 = vunpack.c.l.b16 %v1571
    %v1637 = vunpack.c.l.b16 %v1572
    %v1638 = vunpack.c.l.b16 %v1573
    %v1639 = vunpack.c.l.b16 %v1574
    %v1640 = vunpack.c.l.b16 %v1575
    %v1641 = vunpack.c.l.b16 %v1576
    %v1642 = vunpack.c.l.b16 %v1577
    %v1643 = vunpack.c.l.b16 %v1578
    %v1644 = vunpack.c.l.b16 %v1579
    %v1645 = vunpack.c.l.b16 %v1580
    %v1646 = vunpack.c.l.b16 %v1581
    %v1647 = vunpack.c.l.b16 %v1582
    %v1648 = vunpack.c.l.b16 %v1583
    %v1649 = vunpack.c.l.b16 %v1584
    %v1650 = vunpack.c.l.b16 %v1585
    %v1651 = vunpack.c.l.b16 %v1586
    %v1652 = vunpack.c.l.b16 %v1587
    %v1653 = vunpack.c.l.b16 %v1588
    %v1654 = vunpack.c.l.b16 %v1589
    %v1655 = vunpack.c.l.b16 %v1590
    %v1656 = vunpack.c.l.b16 %v1591
    %v1657 = vpack.c.b16 %v1626, %v1625
    %v1658 = vpack.c.b16 %v1628, %v1627
    %v1659 = vpack.c.b16 %v1630, %v1629
    %v1660 = vpack.c.b16 %v1632, %v1631
    %v1661 = vpack.c.b16 %v1634, %v1633
    %v1662 = vpack.c.b16 %v1636, %v1635
    %v1663 = vpack.c.b16 %v1638, %v1637
    %v1664 = vpack.c.b16 %v1640, %v1639
    %v1665 = vpack.c.b16 %v1642, %v1641
    %v1666 = vpack.c.b16 %v1644, %v1643
    %v1667 = vpack.c.b16 %v1646, %v1645
    %v1668 = vpack.c.b16 %v1648, %v1647
    %v1669 = vpack.c.b16 %v1650, %v1649
    %v1670 = vpack.c.b16 %v1652, %v1651
    %v1671 = vpack.c.b16 %v1654, %v1653
    %v1672 = vpack.c.b16 %v1656, %v1655
    %1689 = vmatpush.bf16.msra.mxu0 %v1664
    %1690 = vmatpush.bf16.msra.mxu0 %v1663
    %1691 = vmatpush.bf16.msra.mxu0 %v1662
    %1692 = vmatpush.bf16.msra.mxu0 %v1661
    %1693 = vmatpush.bf16.msra.mxu0 %v1660
    %1694 = vmatpush.bf16.msra.mxu0 %v1659
    %1695 = vmatpush.bf16.msra.mxu0 %v1658
    %1696 = vmatpush.bf16.msra.mxu0 %v1657
    %1697 = vmatmul.bf16.gmra.mxu0 %v1558
    %v1698 = vpop.f32.mrf.mxu0
    %v1699 = vadd.f32 %v1592, %v1698
    %v1700 = vpop.f32.mrf.mxu0
    %v1701 = vadd.f32 %v1592, %v1700
    %1702 = vdwg.mxu0
    %1703 = vmatpush.bf16.msra.mxu0 %v1672
    %1704 = vmatpush.bf16.msra.mxu0 %v1671
    %1705 = vmatpush.bf16.msra.mxu0 %v1670
    %1706 = vmatpush.bf16.msra.mxu0 %v1669
    %1707 = vmatpush.bf16.msra.mxu0 %v1668
    %1708 = vmatpush.bf16.msra.mxu0 %v1667
    %1709 = vmatpush.bf16.msra.mxu0 %v1666
    %1710 = vmatpush.bf16.msra.mxu0 %v1665
    %1711 = vmatmul.bf16.gmra.mxu0 %v1559
    %v1712 = vpop.f32.mrf.mxu0
    %v1713 = vadd.f32 %v1699, %v1712
    %v1714 = vpop.f32.mrf.mxu0
    %v1715 = vadd.f32 %v1701, %v1714
    %1716 = vdwg.mxu0
    %v1717 = vadd.f32 %v1383, %v1713
    %v1718 = vadd.f32 %v1384, %v1715
    %s1719 = scalar_lea.vmem %s2, 64
    %v1720 = vld [vmem:[%s1719] sm:$0xff]
    %v1721 = vld [vmem:[%s1719 + $0x8] sm:$0xff]
    %v1722 = vld [vmem:[%s1719 + $0x10] sm:$0xff]
    %v1723 = vld [vmem:[%s1719 + $0x18] sm:$0xff]
    %v1724 = vld [vmem:[%s1719 + $0x20] sm:$0xff]
    %v1725 = vld [vmem:[%s1719 + $0x28] sm:$0xff]
    %v1726 = vld [vmem:[%s1719 + $0x30] sm:$0xff]
    %v1727 = vld [vmem:[%s1719 + $0x38] sm:$0xff]
    %v1728 = vld [vmem:[%s5 + $0x15] ss:$0 sm:$0xff]
    %v1729 = vld [vmem:[%s5 + $0x16] ss:$0 sm:$0xff]
    %v1730 = vsel %vm534, %v1717, 0.0
    %1731 = vadd.xlane.f32.xlu0 %v1730
    %v1732 = vpop.xlane.xlu0 %1731
    %v1733 = vsel %vm538, %v1718, 0.0
    %1734 = vadd.xlane.f32.xlu0 %v1733
    %v1735 = vpop.xlane.xlu0 %1734
    %v1736 = vmul.f32 %v1732, %v548
    %v1737 = vmul.f32 %v1735, %v548
    %v1738 = vsub.f32 %v1717, %v1736
    %v1739 = vsub.f32 %v1718, %v1737
    %v1740 = vmul.f32 %v1738, %v1738
    %v1741 = vmul.f32 %v1739, %v1739
    %v1742 = vsel %vm534, %v1740, 0.0
    %1743 = vadd.xlane.f32.xlu0 %v1742
    %v1744 = vpop.xlane.xlu0 %1743
    %v1745 = vsel %vm538, %v1741, 0.0
    %1746 = vadd.xlane.f32.xlu0 %v1745
    %v1747 = vpop.xlane.xlu0 %1746
    %v1748 = vmul.f32 %v1744, %v548
    %v1749 = vmul.f32 %v1747, %v548
    %v1750 = vadd.f32 %v1748, 1e-06
    %v1751 = vadd.f32 %v1749, 1e-06
    %v1752 = vrsqrt.pop %v1750
    %v1753 = vmul.f32 %v1752, %v1750
    %v1754 = vmul.f32 %v1753, %v1752
    %v1755 = vmul.f32 0.5, %v1754
    %v1756 = vsub.f32 1.5, %v1755
    %v1757 = vmul.f32 %v1752, %v1756
    %vm1758 = vweird.f32 %v1750
    %vm1759 = vweird.f32 %v1752
    %vm1760 = vmor %vm1758, %vm1759
    %v1761 = vsel %vm1760, %v1752, %v1757
    %v1762 = vrsqrt.pop %v1751
    %v1763 = vmul.f32 %v1762, %v1751
    %v1764 = vmul.f32 %v1763, %v1762
    %v1765 = vmul.f32 0.5, %v1764
    %v1766 = vsub.f32 1.5, %v1765
    %v1767 = vmul.f32 %v1762, %v1766
    %vm1768 = vweird.f32 %v1751
    %vm1769 = vweird.f32 %v1762
    %vm1770 = vmor %vm1768, %vm1769
    %v1771 = vsel %vm1770, %v1762, %v1767
    %v1772 = vmul.f32 %v1738, %v1761
    %v1773 = vmul.f32 %v1739, %v1771
    %v1774 = vmul.f32 %v1772, %v1728
    %v1775 = vmul.f32 %v1773, %v1728
    %v1776 = vadd.f32 %v1774, %v1729
    %v1777 = vadd.f32 %v1775, %v1729
    %v1778 = vpack.c.bf16 %v1777, %v1776
    %s1779 = scalar_lea.vmem %s5, 23
    %v1780 = vld [vmem:[%s1779] ss:$8 sm:$0x3]
    %v1782 = vperm.slane %v1780, 0
    %v1783 = vperm.slane %v1780, 1
    %v1794 = vunpack.c.l.b16 %v1720
    %v1795 = vunpack.c.h.b16 %v1720
    %v1796 = vunpack.c.l.b16 %v1721
    %v1797 = vunpack.c.h.b16 %v1721
    %v1798 = vunpack.c.l.b16 %v1722
    %v1799 = vunpack.c.h.b16 %v1722
    %v1800 = vunpack.c.l.b16 %v1723
    %v1801 = vunpack.c.h.b16 %v1723
    %v1802 = vunpack.c.l.b16 %v1724
    %v1803 = vunpack.c.h.b16 %v1724
    %v1804 = vunpack.c.l.b16 %v1725
    %v1805 = vunpack.c.h.b16 %v1725
    %v1806 = vunpack.c.l.b16 %v1726
    %v1807 = vunpack.c.h.b16 %v1726
    %v1808 = vunpack.c.l.b16 %v1727
    %v1809 = vunpack.c.h.b16 %v1727
    %v1810 = vpack.c.b16 %v1796, %v1794
    %v1811 = vpack.c.b16 %v1797, %v1795
    %v1812 = vpack.c.b16 %v1800, %v1798
    %v1813 = vpack.c.b16 %v1801, %v1799
    %v1814 = vpack.c.b16 %v1804, %v1802
    %v1815 = vpack.c.b16 %v1805, %v1803
    %v1816 = vpack.c.b16 %v1808, %v1806
    %v1817 = vpack.c.b16 %v1809, %v1807
    %v1827 = vsel %vm534, %v1778, 0
    %1829 = vmatpush.bf16.msra.mxu0 0
    %1830 = vmatpush.bf16.msra.mxu0 0
    %1831 = vmatpush.bf16.msra.mxu0 0
    %1832 = vmatpush.bf16.msra.mxu0 0
    %1833 = vmatpush.bf16.msra.mxu0 %v1816
    %1834 = vmatpush.bf16.msra.mxu0 %v1814
    %1835 = vmatpush.bf16.msra.mxu0 %v1812
    %1836 = vmatpush.bf16.msra.mxu0 %v1810
    %1837 = vmatmul.bf16.gmra.mxu0 %v1827
    %v1838 = vpop.f32.mrf.mxu0
    %v1839 = vadd.f32 %v1782, %v1838
    %v1840 = vpop.f32.mrf.mxu0
    %v1841 = vadd.f32 %v1782, %v1840
    %1842 = vdwg.mxu0
    %1843 = vmatpush.bf16.msra.mxu0 0
    %1844 = vmatpush.bf16.msra.mxu0 0
    %1845 = vmatpush.bf16.msra.mxu0 0
    %1846 = vmatpush.bf16.msra.mxu0 0
    %1847 = vmatpush.bf16.msra.mxu0 %v1817
    %1848 = vmatpush.bf16.msra.mxu0 %v1815
    %1849 = vmatpush.bf16.msra.mxu0 %v1813
    %1850 = vmatpush.bf16.msra.mxu0 %v1811
    %1851 = vmatmul.bf16.gmra.mxu0 %v1827
    %v1852 = vpop.f32.mrf.mxu0
    %v1853 = vadd.f32 %v1783, %v1852
    %v1854 = vpop.f32.mrf.mxu0
    %v1855 = vadd.f32 %v1783, %v1854
    %1856 = vdwg.mxu0
    %1858 = vrot.lane.b32.xlu0 %v1839, 64
    %v1859 = vpop.permute.xlu0 %1858
    %v1860 = vsel %vm673, %v1839, 0
    %v1862 = vsel %vm673, %v1859, 0
    %1864 = vmatpush.xpose.msra.mxu0 0.0
    %1865 = vmatpush.xpose.msra.mxu0 0.0
    %1866 = vmatpush.xpose.msra.mxu0 0.0
    %1867 = vmatpush.xpose.msra.mxu0 0.0
    %1868 = vmatpush.xpose.msra.mxu0 0.0
    %1869 = vmatpush.xpose.msra.mxu0 0.0
    %1870 = vmatpush.xpose.msra.mxu0 0.0
    %1871 = vmatpush.xpose.msra.mxu0 0.0
    %1872 = vmatpush.xpose.msra.mxu0 0.0
    %1873 = vmatpush.xpose.msra.mxu0 0.0
    %1874 = vmatpush.xpose.msra.mxu0 0.0
    %1875 = vmatpush.xpose.msra.mxu0 0.0
    %1876 = vmatpush.xpose.msra.mxu0 0.0
    %1877 = vmatpush.xpose.msra.mxu0 0.0
    %1878 = vmatpush.xpose.msra.mxu0 0.0
    %1879 = vmatpush.xpose.msra.mxu0 %v1862
    %1880 = vmatmul.f32.gmra.mxu0 %v1860
    %v1881 = vpop.f32.mrf.mxu0
    %v1882 = vadd.f32 0.0, %v1881
    %1883 = vdwg.mxu0
    %v1884 = vmul.f32 %v1882, 0.25
    %v1885 = vsel %vm699, %v1884, -inf
    %1886 = vmax.xlane.f32.xlu0 %v1885
    %v1887 = vpop.xlane.xlu0 %1886
    %v1888 = vsub.f32 %v1884, %v1887
    %v1889 = vmul.f32 %v1888, 1.442695
    %v1890 = vpow.pop %v1889
    %v1891 = vsel %vm699, %v1890, 0.0
    %1892 = vadd.xlane.f32.xlu0 %v1891
    %v1893 = vpop.xlane.xlu0 %1892
    %v1894 = vrcp.pop %v1893
    %v1895 = vmul.f32 %v1893, %v1894
    %v1896 = vsub.f32 1.0, %v1895
    %v1897 = vmul.f32 %v1894, %v1896
    %v1898 = vadd.f32 %v1894, %v1897
    %vm1899 = vweird.f32 %v1893
    %vm1900 = vweird.f32 %v1894
    %vm1901 = vmor %vm1899, %vm1900
    %v1902 = vsel %vm1901, %v1894, %v1898
    %v1903 = vand.u32 2147483647, %v1893
    %vm1904 = vcmp.eq.f32.partialorder %v1903, 8.507059e+37
    %v1905 = vand.u32 %v1893, 2147483648
    %v1906 = vor.u32 1.1754944e-38, %v1905
    %v1907 = vsel %vm1904, %v1906, %v1902
    %v1908 = vmul.f32 %v1890, %v1907
    %v1910 = vsel %vm724, %v1908, 0
    %v1913 = vsel %vm520, %v1853, 0
    %1915 = vmatpush.msra.mxu0 0.0
    %1916 = vmatpush.msra.mxu0 0.0
    %1917 = vmatpush.msra.mxu0 0.0
    %1918 = vmatpush.msra.mxu0 0.0
    %1919 = vmatpush.msra.mxu0 0.0
    %1920 = vmatpush.msra.mxu0 0.0
    %1921 = vmatpush.msra.mxu0 0.0
    %1922 = vmatpush.msra.mxu0 0.0
    %1923 = vmatpush.msra.mxu0 0.0
    %1924 = vmatpush.msra.mxu0 0.0
    %1925 = vmatpush.msra.mxu0 0.0
    %1926 = vmatpush.msra.mxu0 0.0
    %1927 = vmatpush.msra.mxu0 0.0
    %1928 = vmatpush.msra.mxu0 0.0
    %1929 = vmatpush.msra.mxu0 0.0
    %1930 = vmatpush.msra.mxu0 %v1913
    %1931 = vmatmul.f32.gmra.mxu0 %v1910
    %v1932 = vpop.f32.mrf.mxu0
    %v1933 = vadd.f32 0.0, %v1932
    %1934 = vdwg.mxu0
    %1935 = vrot.lane.b32.xlu0 %v1839, 112
    %v1936 = vpop.permute.xlu0 %1935
    %1937 = vrot.lane.b32.xlu0 %v1839, 48
    %v1938 = vpop.permute.xlu0 %1937
    %v1939 = vsel %vm673, %v1936, 0
    %v1941 = vsel %vm673, %v1938, 0
    %1943 = vmatpush.xpose.msra.mxu0 0.0
    %1944 = vmatpush.xpose.msra.mxu0 0.0
    %1945 = vmatpush.xpose.msra.mxu0 0.0
    %1946 = vmatpush.xpose.msra.mxu0 0.0
    %1947 = vmatpush.xpose.msra.mxu0 0.0
    %1948 = vmatpush.xpose.msra.mxu0 0.0
    %1949 = vmatpush.xpose.msra.mxu0 0.0
    %1950 = vmatpush.xpose.msra.mxu0 0.0
    %1951 = vmatpush.xpose.msra.mxu0 0.0
    %1952 = vmatpush.xpose.msra.mxu0 0.0
    %1953 = vmatpush.xpose.msra.mxu0 0.0
    %1954 = vmatpush.xpose.msra.mxu0 0.0
    %1955 = vmatpush.xpose.msra.mxu0 0.0
    %1956 = vmatpush.xpose.msra.mxu0 0.0
    %1957 = vmatpush.xpose.msra.mxu0 0.0
    %1958 = vmatpush.xpose.msra.mxu0 %v1941
    %1959 = vmatmul.f32.gmra.mxu0 %v1939
    %v1960 = vpop.f32.mrf.mxu0
    %v1961 = vadd.f32 0.0, %v1960
    %1962 = vdwg.mxu0
    %v1963 = vmul.f32 %v1961, 0.25
    %v1964 = vsel %vm699, %v1963, -inf
    %1965 = vmax.xlane.f32.xlu0 %v1964
    %v1966 = vpop.xlane.xlu0 %1965
    %v1967 = vsub.f32 %v1963, %v1966
    %v1968 = vmul.f32 %v1967, 1.442695
    %v1969 = vpow.pop %v1968
    %v1970 = vsel %vm699, %v1969, 0.0
    %1971 = vadd.xlane.f32.xlu0 %v1970
    %v1972 = vpop.xlane.xlu0 %1971
    %v1973 = vrcp.pop %v1972
    %v1974 = vmul.f32 %v1972, %v1973
    %v1975 = vsub.f32 1.0, %v1974
    %v1976 = vmul.f32 %v1973, %v1975
    %v1977 = vadd.f32 %v1973, %v1976
    %vm1978 = vweird.f32 %v1972
    %vm1979 = vweird.f32 %v1973
    %vm1980 = vmor %vm1978, %vm1979
    %v1981 = vsel %vm1980, %v1973, %v1977
    %v1982 = vand.u32 2147483647, %v1972
    %vm1983 = vcmp.eq.f32.partialorder %v1982, 8.507059e+37
    %v1984 = vand.u32 %v1972, 2147483648
    %v1985 = vor.u32 1.1754944e-38, %v1984
    %v1986 = vsel %vm1983, %v1985, %v1981
    %v1987 = vmul.f32 %v1969, %v1986
    %1988 = vrot.lane.b32.xlu0 %v1853, 112
    %v1989 = vpop.permute.xlu0 %1988
    %v1991 = vsel %vm724, %v1987, 0
    %v1993 = vsel %vm520, %v1989, 0
    %1995 = vmatpush.msra.mxu0 0.0
    %1996 = vmatpush.msra.mxu0 0.0
    %1997 = vmatpush.msra.mxu0 0.0
    %1998 = vmatpush.msra.mxu0 0.0
    %1999 = vmatpush.msra.mxu0 0.0
    %2000 = vmatpush.msra.mxu0 0.0
    %2001 = vmatpush.msra.mxu0 0.0
    %2002 = vmatpush.msra.mxu0 0.0
    %2003 = vmatpush.msra.mxu0 0.0
    %2004 = vmatpush.msra.mxu0 0.0
    %2005 = vmatpush.msra.mxu0 0.0
    %2006 = vmatpush.msra.mxu0 0.0
    %2007 = vmatpush.msra.mxu0 0.0
    %2008 = vmatpush.msra.mxu0 0.0
    %2009 = vmatpush.msra.mxu0 0.0
    %2010 = vmatpush.msra.mxu0 %v1993
    %2011 = vmatmul.f32.gmra.mxu0 %v1991
    %v2012 = vpop.f32.mrf.mxu0
    %v2013 = vadd.f32 0.0, %v2012
    %2014 = vdwg.mxu0
    %2015 = vrot.lane.b32.xlu0 %v1839, 96
    %v2016 = vpop.permute.xlu0 %2015
    %2017 = vrot.lane.b32.xlu0 %v1839, 32
    %v2018 = vpop.permute.xlu0 %2017
    %v2019 = vsel %vm673, %v2016, 0
    %v2021 = vsel %vm673, %v2018, 0
    %2023 = vmatpush.xpose.msra.mxu0 0.0
    %2024 = vmatpush.xpose.msra.mxu0 0.0
    %2025 = vmatpush.xpose.msra.mxu0 0.0
    %2026 = vmatpush.xpose.msra.mxu0 0.0
    %2027 = vmatpush.xpose.msra.mxu0 0.0
    %2028 = vmatpush.xpose.msra.mxu0 0.0
    %2029 = vmatpush.xpose.msra.mxu0 0.0
    %2030 = vmatpush.xpose.msra.mxu0 0.0
    %2031 = vmatpush.xpose.msra.mxu0 0.0
    %2032 = vmatpush.xpose.msra.mxu0 0.0
    %2033 = vmatpush.xpose.msra.mxu0 0.0
    %2034 = vmatpush.xpose.msra.mxu0 0.0
    %2035 = vmatpush.xpose.msra.mxu0 0.0
    %2036 = vmatpush.xpose.msra.mxu0 0.0
    %2037 = vmatpush.xpose.msra.mxu0 0.0
    %2038 = vmatpush.xpose.msra.mxu0 %v2021
    %2039 = vmatmul.f32.gmra.mxu0 %v2019
    %v2040 = vpop.f32.mrf.mxu0
    %v2041 = vadd.f32 0.0, %v2040
    %2042 = vdwg.mxu0
    %v2043 = vmul.f32 %v2041, 0.25
    %v2044 = vsel %vm699, %v2043, -inf
    %2045 = vmax.xlane.f32.xlu0 %v2044
    %v2046 = vpop.xlane.xlu0 %2045
    %v2047 = vsub.f32 %v2043, %v2046
    %v2048 = vmul.f32 %v2047, 1.442695
    %v2049 = vpow.pop %v2048
    %v2050 = vsel %vm699, %v2049, 0.0
    %2051 = vadd.xlane.f32.xlu0 %v2050
    %v2052 = vpop.xlane.xlu0 %2051
    %v2053 = vrcp.pop %v2052
    %v2054 = vmul.f32 %v2052, %v2053
    %v2055 = vsub.f32 1.0, %v2054
    %v2056 = vmul.f32 %v2053, %v2055
    %v2057 = vadd.f32 %v2053, %v2056
    %vm2058 = vweird.f32 %v2052
    %vm2059 = vweird.f32 %v2053
    %vm2060 = vmor %vm2058, %vm2059
    %v2061 = vsel %vm2060, %v2053, %v2057
    %v2062 = vand.u32 2147483647, %v2052
    %vm2063 = vcmp.eq.f32.partialorder %v2062, 8.507059e+37
    %v2064 = vand.u32 %v2052, 2147483648
    %v2065 = vor.u32 1.1754944e-38, %v2064
    %v2066 = vsel %vm2063, %v2065, %v2061
    %v2067 = vmul.f32 %v2049, %v2066
    %2068 = vrot.lane.b32.xlu0 %v1853, 96
    %v2069 = vpop.permute.xlu0 %2068
    %v2071 = vsel %vm724, %v2067, 0
    %v2073 = vsel %vm520, %v2069, 0
    %2075 = vmatpush.msra.mxu0 0.0
    %2076 = vmatpush.msra.mxu0 0.0
    %2077 = vmatpush.msra.mxu0 0.0
    %2078 = vmatpush.msra.mxu0 0.0
    %2079 = vmatpush.msra.mxu0 0.0
    %2080 = vmatpush.msra.mxu0 0.0
    %2081 = vmatpush.msra.mxu0 0.0
    %2082 = vmatpush.msra.mxu0 0.0
    %2083 = vmatpush.msra.mxu0 0.0
    %2084 = vmatpush.msra.mxu0 0.0
    %2085 = vmatpush.msra.mxu0 0.0
    %2086 = vmatpush.msra.mxu0 0.0
    %2087 = vmatpush.msra.mxu0 0.0
    %2088 = vmatpush.msra.mxu0 0.0
    %2089 = vmatpush.msra.mxu0 0.0
    %2090 = vmatpush.msra.mxu0 %v2073
    %2091 = vmatmul.f32.gmra.mxu0 %v2071
    %v2092 = vpop.f32.mrf.mxu0
    %v2093 = vadd.f32 0.0, %v2092
    %2094 = vdwg.mxu0
    %2095 = vrot.lane.b32.xlu0 %v1839, 80
    %v2096 = vpop.permute.xlu0 %2095
    %2097 = vrot.lane.b32.xlu0 %v1839, 16
    %v2098 = vpop.permute.xlu0 %2097
    %v2099 = vsel %vm673, %v2096, 0
    %v2101 = vsel %vm673, %v2098, 0
    %2103 = vmatpush.xpose.msra.mxu0 0.0
    %2104 = vmatpush.xpose.msra.mxu0 0.0
    %2105 = vmatpush.xpose.msra.mxu0 0.0
    %2106 = vmatpush.xpose.msra.mxu0 0.0
    %2107 = vmatpush.xpose.msra.mxu0 0.0
    %2108 = vmatpush.xpose.msra.mxu0 0.0
    %2109 = vmatpush.xpose.msra.mxu0 0.0
    %2110 = vmatpush.xpose.msra.mxu0 0.0
    %2111 = vmatpush.xpose.msra.mxu0 0.0
    %2112 = vmatpush.xpose.msra.mxu0 0.0
    %2113 = vmatpush.xpose.msra.mxu0 0.0
    %2114 = vmatpush.xpose.msra.mxu0 0.0
    %2115 = vmatpush.xpose.msra.mxu0 0.0
    %2116 = vmatpush.xpose.msra.mxu0 0.0
    %2117 = vmatpush.xpose.msra.mxu0 0.0
    %2118 = vmatpush.xpose.msra.mxu0 %v2101
    %2119 = vmatmul.f32.gmra.mxu0 %v2099
    %v2120 = vpop.f32.mrf.mxu0
    %v2121 = vadd.f32 0.0, %v2120
    %2122 = vdwg.mxu0
    %v2123 = vmul.f32 %v2121, 0.25
    %v2124 = vsel %vm699, %v2123, -inf
    %2125 = vmax.xlane.f32.xlu0 %v2124
    %v2126 = vpop.xlane.xlu0 %2125
    %v2127 = vsub.f32 %v2123, %v2126
    %v2128 = vmul.f32 %v2127, 1.442695
    %v2129 = vpow.pop %v2128
    %v2130 = vsel %vm699, %v2129, 0.0
    %2131 = vadd.xlane.f32.xlu0 %v2130
    %v2132 = vpop.xlane.xlu0 %2131
    %v2133 = vrcp.pop %v2132
    %v2134 = vmul.f32 %v2132, %v2133
    %v2135 = vsub.f32 1.0, %v2134
    %v2136 = vmul.f32 %v2133, %v2135
    %v2137 = vadd.f32 %v2133, %v2136
    %vm2138 = vweird.f32 %v2132
    %vm2139 = vweird.f32 %v2133
    %vm2140 = vmor %vm2138, %vm2139
    %v2141 = vsel %vm2140, %v2133, %v2137
    %v2142 = vand.u32 2147483647, %v2132
    %vm2143 = vcmp.eq.f32.partialorder %v2142, 8.507059e+37
    %v2144 = vand.u32 %v2132, 2147483648
    %v2145 = vor.u32 1.1754944e-38, %v2144
    %v2146 = vsel %vm2143, %v2145, %v2141
    %v2147 = vmul.f32 %v2129, %v2146
    %2148 = vrot.lane.b32.xlu0 %v1853, 80
    %v2149 = vpop.permute.xlu0 %2148
    %v2151 = vsel %vm724, %v2147, 0
    %v2153 = vsel %vm520, %v2149, 0
    %2155 = vmatpush.msra.mxu0 0.0
    %2156 = vmatpush.msra.mxu0 0.0
    %2157 = vmatpush.msra.mxu0 0.0
    %2158 = vmatpush.msra.mxu0 0.0
    %2159 = vmatpush.msra.mxu0 0.0
    %2160 = vmatpush.msra.mxu0 0.0
    %2161 = vmatpush.msra.mxu0 0.0
    %2162 = vmatpush.msra.mxu0 0.0
    %2163 = vmatpush.msra.mxu0 0.0
    %2164 = vmatpush.msra.mxu0 0.0
    %2165 = vmatpush.msra.mxu0 0.0
    %2166 = vmatpush.msra.mxu0 0.0
    %2167 = vmatpush.msra.mxu0 0.0
    %2168 = vmatpush.msra.mxu0 0.0
    %2169 = vmatpush.msra.mxu0 0.0
    %2170 = vmatpush.msra.mxu0 %v2153
    %2171 = vmatmul.f32.gmra.mxu0 %v2151
    %v2172 = vpop.f32.mrf.mxu0
    %v2173 = vadd.f32 0.0, %v2172
    %2174 = vdwg.mxu0
    %2176 = vrot.lane.b32.xlu0 %v2013, 16
    %v2177 = vpop.permute.xlu0 %2176
    %2180 = vrot.lane.b32.xlu0 %v2093, 32
    %v2181 = vpop.permute.xlu0 %2180
    %2184 = vrot.lane.b32.xlu0 %v2173, 48
    %v2185 = vpop.permute.xlu0 %2184
    %v2187 = vsel %vm673, %v1933, %v2177
    %v2188 = vsel %vm1004, %v2187, %v2181
    %v2189 = vsel %vm1006, %v2188, %v2185
    %v2191 = vrot.slane %v1839, 5
    %v2192 = vrot.slane %v1841, 5
    %v2193 = vsel %vm1009, %v2191, %v2192
    %2194 = vrot.lane.b32.xlu0 %v2193, 64
    %v2195 = vpop.permute.xlu0 %2194
    %v2196 = vsel %vm673, %v2193, 0
    %v2198 = vsel %vm673, %v2195, 0
    %2200 = vmatpush.xpose.msra.mxu0 0.0
    %2201 = vmatpush.xpose.msra.mxu0 0.0
    %2202 = vmatpush.xpose.msra.mxu0 0.0
    %2203 = vmatpush.xpose.msra.mxu0 0.0
    %2204 = vmatpush.xpose.msra.mxu0 0.0
    %2205 = vmatpush.xpose.msra.mxu0 0.0
    %2206 = vmatpush.xpose.msra.mxu0 0.0
    %2207 = vmatpush.xpose.msra.mxu0 0.0
    %2208 = vmatpush.xpose.msra.mxu0 0.0
    %2209 = vmatpush.xpose.msra.mxu0 0.0
    %2210 = vmatpush.xpose.msra.mxu0 0.0
    %2211 = vmatpush.xpose.msra.mxu0 0.0
    %2212 = vmatpush.xpose.msra.mxu0 0.0
    %2213 = vmatpush.xpose.msra.mxu0 0.0
    %2214 = vmatpush.xpose.msra.mxu0 0.0
    %2215 = vmatpush.xpose.msra.mxu0 %v2198
    %2216 = vmatmul.f32.gmra.mxu0 %v2196
    %v2217 = vpop.f32.mrf.mxu0
    %v2218 = vadd.f32 0.0, %v2217
    %2219 = vdwg.mxu0
    %v2220 = vmul.f32 %v2218, 0.25
    %v2221 = vsel %vm699, %v2220, -inf
    %2222 = vmax.xlane.f32.xlu0 %v2221
    %v2223 = vpop.xlane.xlu0 %2222
    %v2224 = vsub.f32 %v2220, %v2223
    %v2225 = vmul.f32 %v2224, 1.442695
    %v2226 = vpow.pop %v2225
    %v2227 = vsel %vm699, %v2226, 0.0
    %2228 = vadd.xlane.f32.xlu0 %v2227
    %v2229 = vpop.xlane.xlu0 %2228
    %v2230 = vrcp.pop %v2229
    %v2231 = vmul.f32 %v2229, %v2230
    %v2232 = vsub.f32 1.0, %v2231
    %v2233 = vmul.f32 %v2230, %v2232
    %v2234 = vadd.f32 %v2230, %v2233
    %vm2235 = vweird.f32 %v2229
    %vm2236 = vweird.f32 %v2230
    %vm2237 = vmor %vm2235, %vm2236
    %v2238 = vsel %vm2237, %v2230, %v2234
    %v2239 = vand.u32 2147483647, %v2229
    %vm2240 = vcmp.eq.f32.partialorder %v2239, 8.507059e+37
    %v2241 = vand.u32 %v2229, 2147483648
    %v2242 = vor.u32 1.1754944e-38, %v2241
    %v2243 = vsel %vm2240, %v2242, %v2238
    %v2244 = vmul.f32 %v2226, %v2243
    %v2246 = vrot.slane %v1853, 5
    %v2247 = vrot.slane %v1855, 5
    %v2248 = vsel %vm1009, %v2246, %v2247
    %v2250 = vsel %vm724, %v2244, 0
    %v2252 = vsel %vm520, %v2248, 0
    %2254 = vmatpush.msra.mxu0 0.0
    %2255 = vmatpush.msra.mxu0 0.0
    %2256 = vmatpush.msra.mxu0 0.0
    %2257 = vmatpush.msra.mxu0 0.0
    %2258 = vmatpush.msra.mxu0 0.0
    %2259 = vmatpush.msra.mxu0 0.0
    %2260 = vmatpush.msra.mxu0 0.0
    %2261 = vmatpush.msra.mxu0 0.0
    %2262 = vmatpush.msra.mxu0 0.0
    %2263 = vmatpush.msra.mxu0 0.0
    %2264 = vmatpush.msra.mxu0 0.0
    %2265 = vmatpush.msra.mxu0 0.0
    %2266 = vmatpush.msra.mxu0 0.0
    %2267 = vmatpush.msra.mxu0 0.0
    %2268 = vmatpush.msra.mxu0 0.0
    %2269 = vmatpush.msra.mxu0 %v2252
    %2270 = vmatmul.f32.gmra.mxu0 %v2250
    %v2271 = vpop.f32.mrf.mxu0
    %v2272 = vadd.f32 0.0, %v2271
    %2273 = vdwg.mxu0
    %2274 = vrot.lane.b32.xlu0 %v2193, 112
    %v2275 = vpop.permute.xlu0 %2274
    %2276 = vrot.lane.b32.xlu0 %v2193, 48
    %v2277 = vpop.permute.xlu0 %2276
    %v2278 = vsel %vm673, %v2275, 0
    %v2280 = vsel %vm673, %v2277, 0
    %2282 = vmatpush.xpose.msra.mxu0 0.0
    %2283 = vmatpush.xpose.msra.mxu0 0.0
    %2284 = vmatpush.xpose.msra.mxu0 0.0
    %2285 = vmatpush.xpose.msra.mxu0 0.0
    %2286 = vmatpush.xpose.msra.mxu0 0.0
    %2287 = vmatpush.xpose.msra.mxu0 0.0
    %2288 = vmatpush.xpose.msra.mxu0 0.0
    %2289 = vmatpush.xpose.msra.mxu0 0.0
    %2290 = vmatpush.xpose.msra.mxu0 0.0
    %2291 = vmatpush.xpose.msra.mxu0 0.0
    %2292 = vmatpush.xpose.msra.mxu0 0.0
    %2293 = vmatpush.xpose.msra.mxu0 0.0
    %2294 = vmatpush.xpose.msra.mxu0 0.0
    %2295 = vmatpush.xpose.msra.mxu0 0.0
    %2296 = vmatpush.xpose.msra.mxu0 0.0
    %2297 = vmatpush.xpose.msra.mxu0 %v2280
    %2298 = vmatmul.f32.gmra.mxu0 %v2278
    %v2299 = vpop.f32.mrf.mxu0
    %v2300 = vadd.f32 0.0, %v2299
    %2301 = vdwg.mxu0
    %v2302 = vmul.f32 %v2300, 0.25
    %v2303 = vsel %vm699, %v2302, -inf
    %2304 = vmax.xlane.f32.xlu0 %v2303
    %v2305 = vpop.xlane.xlu0 %2304
    %v2306 = vsub.f32 %v2302, %v2305
    %v2307 = vmul.f32 %v2306, 1.442695
    %v2308 = vpow.pop %v2307
    %v2309 = vsel %vm699, %v2308, 0.0
    %2310 = vadd.xlane.f32.xlu0 %v2309
    %v2311 = vpop.xlane.xlu0 %2310
    %v2312 = vrcp.pop %v2311
    %v2313 = vmul.f32 %v2311, %v2312
    %v2314 = vsub.f32 1.0, %v2313
    %v2315 = vmul.f32 %v2312, %v2314
    %v2316 = vadd.f32 %v2312, %v2315
    %vm2317 = vweird.f32 %v2311
    %vm2318 = vweird.f32 %v2312
    %vm2319 = vmor %vm2317, %vm2318
    %v2320 = vsel %vm2319, %v2312, %v2316
    %v2321 = vand.u32 2147483647, %v2311
    %vm2322 = vcmp.eq.f32.partialorder %v2321, 8.507059e+37
    %v2323 = vand.u32 %v2311, 2147483648
    %v2324 = vor.u32 1.1754944e-38, %v2323
    %v2325 = vsel %vm2322, %v2324, %v2320
    %v2326 = vmul.f32 %v2308, %v2325
    %2327 = vrot.lane.b32.xlu0 %v2248, 112
    %v2328 = vpop.permute.xlu0 %2327
    %v2330 = vsel %vm724, %v2326, 0
    %v2332 = vsel %vm520, %v2328, 0
    %2334 = vmatpush.msra.mxu0 0.0
    %2335 = vmatpush.msra.mxu0 0.0
    %2336 = vmatpush.msra.mxu0 0.0
    %2337 = vmatpush.msra.mxu0 0.0
    %2338 = vmatpush.msra.mxu0 0.0
    %2339 = vmatpush.msra.mxu0 0.0
    %2340 = vmatpush.msra.mxu0 0.0
    %2341 = vmatpush.msra.mxu0 0.0
    %2342 = vmatpush.msra.mxu0 0.0
    %2343 = vmatpush.msra.mxu0 0.0
    %2344 = vmatpush.msra.mxu0 0.0
    %2345 = vmatpush.msra.mxu0 0.0
    %2346 = vmatpush.msra.mxu0 0.0
    %2347 = vmatpush.msra.mxu0 0.0
    %2348 = vmatpush.msra.mxu0 0.0
    %2349 = vmatpush.msra.mxu0 %v2332
    %2350 = vmatmul.f32.gmra.mxu0 %v2330
    %v2351 = vpop.f32.mrf.mxu0
    %v2352 = vadd.f32 0.0, %v2351
    %2353 = vdwg.mxu0
    %2354 = vrot.lane.b32.xlu0 %v2193, 96
    %v2355 = vpop.permute.xlu0 %2354
    %2356 = vrot.lane.b32.xlu0 %v2193, 32
    %v2357 = vpop.permute.xlu0 %2356
    %v2358 = vsel %vm673, %v2355, 0
    %v2360 = vsel %vm673, %v2357, 0
    %2362 = vmatpush.xpose.msra.mxu0 0.0
    %2363 = vmatpush.xpose.msra.mxu0 0.0
    %2364 = vmatpush.xpose.msra.mxu0 0.0
    %2365 = vmatpush.xpose.msra.mxu0 0.0
    %2366 = vmatpush.xpose.msra.mxu0 0.0
    %2367 = vmatpush.xpose.msra.mxu0 0.0
    %2368 = vmatpush.xpose.msra.mxu0 0.0
    %2369 = vmatpush.xpose.msra.mxu0 0.0
    %2370 = vmatpush.xpose.msra.mxu0 0.0
    %2371 = vmatpush.xpose.msra.mxu0 0.0
    %2372 = vmatpush.xpose.msra.mxu0 0.0
    %2373 = vmatpush.xpose.msra.mxu0 0.0
    %2374 = vmatpush.xpose.msra.mxu0 0.0
    %2375 = vmatpush.xpose.msra.mxu0 0.0
    %2376 = vmatpush.xpose.msra.mxu0 0.0
    %2377 = vmatpush.xpose.msra.mxu0 %v2360
    %2378 = vmatmul.f32.gmra.mxu0 %v2358
    %v2379 = vpop.f32.mrf.mxu0
    %v2380 = vadd.f32 0.0, %v2379
    %2381 = vdwg.mxu0
    %v2382 = vmul.f32 %v2380, 0.25
    %v2383 = vsel %vm699, %v2382, -inf
    %2384 = vmax.xlane.f32.xlu0 %v2383
    %v2385 = vpop.xlane.xlu0 %2384
    %v2386 = vsub.f32 %v2382, %v2385
    %v2387 = vmul.f32 %v2386, 1.442695
    %v2388 = vpow.pop %v2387
    %v2389 = vsel %vm699, %v2388, 0.0
    %2390 = vadd.xlane.f32.xlu0 %v2389
    %v2391 = vpop.xlane.xlu0 %2390
    %v2392 = vrcp.pop %v2391
    %v2393 = vmul.f32 %v2391, %v2392
    %v2394 = vsub.f32 1.0, %v2393
    %v2395 = vmul.f32 %v2392, %v2394
    %v2396 = vadd.f32 %v2392, %v2395
    %vm2397 = vweird.f32 %v2391
    %vm2398 = vweird.f32 %v2392
    %vm2399 = vmor %vm2397, %vm2398
    %v2400 = vsel %vm2399, %v2392, %v2396
    %v2401 = vand.u32 2147483647, %v2391
    %vm2402 = vcmp.eq.f32.partialorder %v2401, 8.507059e+37
    %v2403 = vand.u32 %v2391, 2147483648
    %v2404 = vor.u32 1.1754944e-38, %v2403
    %v2405 = vsel %vm2402, %v2404, %v2400
    %v2406 = vmul.f32 %v2388, %v2405
    %2407 = vrot.lane.b32.xlu0 %v2248, 96
    %v2408 = vpop.permute.xlu0 %2407
    %v2410 = vsel %vm724, %v2406, 0
    %v2412 = vsel %vm520, %v2408, 0
    %2414 = vmatpush.msra.mxu0 0.0
    %2415 = vmatpush.msra.mxu0 0.0
    %2416 = vmatpush.msra.mxu0 0.0
    %2417 = vmatpush.msra.mxu0 0.0
    %2418 = vmatpush.msra.mxu0 0.0
    %2419 = vmatpush.msra.mxu0 0.0
    %2420 = vmatpush.msra.mxu0 0.0
    %2421 = vmatpush.msra.mxu0 0.0
    %2422 = vmatpush.msra.mxu0 0.0
    %2423 = vmatpush.msra.mxu0 0.0
    %2424 = vmatpush.msra.mxu0 0.0
    %2425 = vmatpush.msra.mxu0 0.0
    %2426 = vmatpush.msra.mxu0 0.0
    %2427 = vmatpush.msra.mxu0 0.0
    %2428 = vmatpush.msra.mxu0 0.0
    %2429 = vmatpush.msra.mxu0 %v2412
    %2430 = vmatmul.f32.gmra.mxu0 %v2410
    %v2431 = vpop.f32.mrf.mxu0
    %v2432 = vadd.f32 0.0, %v2431
    %2433 = vdwg.mxu0
    %2434 = vrot.lane.b32.xlu0 %v2193, 80
    %v2435 = vpop.permute.xlu0 %2434
    %2436 = vrot.lane.b32.xlu0 %v2193, 16
    %v2437 = vpop.permute.xlu0 %2436
    %v2438 = vsel %vm673, %v2435, 0
    %v2440 = vsel %vm673, %v2437, 0
    %2442 = vmatpush.xpose.msra.mxu0 0.0
    %2443 = vmatpush.xpose.msra.mxu0 0.0
    %2444 = vmatpush.xpose.msra.mxu0 0.0
    %2445 = vmatpush.xpose.msra.mxu0 0.0
    %2446 = vmatpush.xpose.msra.mxu0 0.0
    %2447 = vmatpush.xpose.msra.mxu0 0.0
    %2448 = vmatpush.xpose.msra.mxu0 0.0
    %2449 = vmatpush.xpose.msra.mxu0 0.0
    %2450 = vmatpush.xpose.msra.mxu0 0.0
    %2451 = vmatpush.xpose.msra.mxu0 0.0
    %2452 = vmatpush.xpose.msra.mxu0 0.0
    %2453 = vmatpush.xpose.msra.mxu0 0.0
    %2454 = vmatpush.xpose.msra.mxu0 0.0
    %2455 = vmatpush.xpose.msra.mxu0 0.0
    %2456 = vmatpush.xpose.msra.mxu0 0.0
    %2457 = vmatpush.xpose.msra.mxu0 %v2440
    %2458 = vmatmul.f32.gmra.mxu0 %v2438
    %v2459 = vpop.f32.mrf.mxu0
    %v2460 = vadd.f32 0.0, %v2459
    %2461 = vdwg.mxu0
    %v2462 = vmul.f32 %v2460, 0.25
    %v2463 = vsel %vm699, %v2462, -inf
    %2464 = vmax.xlane.f32.xlu0 %v2463
    %v2465 = vpop.xlane.xlu0 %2464
    %v2466 = vsub.f32 %v2462, %v2465
    %v2467 = vmul.f32 %v2466, 1.442695
    %v2468 = vpow.pop %v2467
    %v2469 = vsel %vm699, %v2468, 0.0
    %2470 = vadd.xlane.f32.xlu0 %v2469
    %v2471 = vpop.xlane.xlu0 %2470
    %v2472 = vrcp.pop %v2471
    %v2473 = vmul.f32 %v2471, %v2472
    %v2474 = vsub.f32 1.0, %v2473
    %v2475 = vmul.f32 %v2472, %v2474
    %v2476 = vadd.f32 %v2472, %v2475
    %vm2477 = vweird.f32 %v2471
    %vm2478 = vweird.f32 %v2472
    %vm2479 = vmor %vm2477, %vm2478
    %v2480 = vsel %vm2479, %v2472, %v2476
    %v2481 = vand.u32 2147483647, %v2471
    %vm2482 = vcmp.eq.f32.partialorder %v2481, 8.507059e+37
    %v2483 = vand.u32 %v2471, 2147483648
    %v2484 = vor.u32 1.1754944e-38, %v2483
    %v2485 = vsel %vm2482, %v2484, %v2480
    %v2486 = vmul.f32 %v2468, %v2485
    %2487 = vrot.lane.b32.xlu0 %v2248, 80
    %v2488 = vpop.permute.xlu0 %2487
    %v2490 = vsel %vm724, %v2486, 0
    %v2492 = vsel %vm520, %v2488, 0
    %2494 = vmatpush.msra.mxu0 0.0
    %2495 = vmatpush.msra.mxu0 0.0
    %2496 = vmatpush.msra.mxu0 0.0
    %2497 = vmatpush.msra.mxu0 0.0
    %2498 = vmatpush.msra.mxu0 0.0
    %2499 = vmatpush.msra.mxu0 0.0
    %2500 = vmatpush.msra.mxu0 0.0
    %2501 = vmatpush.msra.mxu0 0.0
    %2502 = vmatpush.msra.mxu0 0.0
    %2503 = vmatpush.msra.mxu0 0.0
    %2504 = vmatpush.msra.mxu0 0.0
    %2505 = vmatpush.msra.mxu0 0.0
    %2506 = vmatpush.msra.mxu0 0.0
    %2507 = vmatpush.msra.mxu0 0.0
    %2508 = vmatpush.msra.mxu0 0.0
    %2509 = vmatpush.msra.mxu0 %v2492
    %2510 = vmatmul.f32.gmra.mxu0 %v2490
    %v2511 = vpop.f32.mrf.mxu0
    %v2512 = vadd.f32 0.0, %v2511
    %2513 = vdwg.mxu0
    %2515 = vrot.lane.b32.xlu0 %v2352, 16
    %v2516 = vpop.permute.xlu0 %2515
    %2519 = vrot.lane.b32.xlu0 %v2432, 32
    %v2520 = vpop.permute.xlu0 %2519
    %2523 = vrot.lane.b32.xlu0 %v2512, 48
    %v2524 = vpop.permute.xlu0 %2523
    %v2526 = vsel %vm673, %v2272, %v2516
    %v2527 = vsel %vm1004, %v2526, %v2520
    %v2528 = vsel %vm1006, %v2527, %v2524
    %v2530 = vrot.slane %v2528, 3
    %v2532 = vsel %vm520, %v2189, %v2530
    %v2533 = vpack.c.bf16 %v2530, %v2532
    %v2534 = vld [vmem:[%s5 + $0x20] ss:$0 sm:$0xff]
    %2535 = vrot.lane.b32.xlu0 %v1811, 64
    %v2536 = vpop.permute.xlu0 %2535
    %2537 = vrot.lane.b32.xlu0 %v1813, 64
    %v2538 = vpop.permute.xlu0 %2537
    %2539 = vrot.lane.b32.xlu0 %v1815, 64
    %v2540 = vpop.permute.xlu0 %2539
    %2541 = vrot.lane.b32.xlu0 %v1817, 64
    %v2542 = vpop.permute.xlu0 %2541
    %v2548 = vsel %vm534, %v2533, 0
    %2550 = vmatpush.bf16.msra.mxu0 0
    %2551 = vmatpush.bf16.msra.mxu0 0
    %2552 = vmatpush.bf16.msra.mxu0 0
    %2553 = vmatpush.bf16.msra.mxu0 0
    %2554 = vmatpush.bf16.msra.mxu0 %v2542
    %2555 = vmatpush.bf16.msra.mxu0 %v2540
    %2556 = vmatpush.bf16.msra.mxu0 %v2538
    %2557 = vmatpush.bf16.msra.mxu0 %v2536
    %2558 = vmatmul.bf16.gmra.mxu0 %v2548
    %v2559 = vpop.f32.mrf.mxu0
    %v2560 = vadd.f32 %v2534, %v2559
    %v2561 = vpop.f32.mrf.mxu0
    %v2562 = vadd.f32 %v2534, %v2561
    %2563 = vdwg.mxu0
    %v2564 = vadd.f32 %v1717, %v2560
    %v2565 = vadd.f32 %v1718, %v2562
    %v2566 = vld [vmem:[%s5 + $0x21] ss:$0 sm:$0xff]
    %v2567 = vld [vmem:[%s5 + $0x22] ss:$0 sm:$0xff]
    %v2568 = vsel %vm534, %v2564, 0.0
    %2569 = vadd.xlane.f32.xlu0 %v2568
    %v2570 = vpop.xlane.xlu0 %2569
    %v2571 = vsel %vm538, %v2565, 0.0
    %2572 = vadd.xlane.f32.xlu0 %v2571
    %v2573 = vpop.xlane.xlu0 %2572
    %v2574 = vmul.f32 %v2570, %v548
    %v2575 = vmul.f32 %v2573, %v548
    %v2576 = vsub.f32 %v2564, %v2574
    %v2577 = vsub.f32 %v2565, %v2575
    %v2578 = vmul.f32 %v2576, %v2576
    %v2579 = vmul.f32 %v2577, %v2577
    %v2580 = vsel %vm534, %v2578, 0.0
    %2581 = vadd.xlane.f32.xlu0 %v2580
    %v2582 = vpop.xlane.xlu0 %2581
    %v2583 = vsel %vm538, %v2579, 0.0
    %2584 = vadd.xlane.f32.xlu0 %v2583
    %v2585 = vpop.xlane.xlu0 %2584
    %v2586 = vmul.f32 %v2582, %v548
    %v2587 = vmul.f32 %v2585, %v548
    %v2588 = vadd.f32 %v2586, 1e-06
    %v2589 = vadd.f32 %v2587, 1e-06
    %v2590 = vrsqrt.pop %v2588
    %v2591 = vmul.f32 %v2590, %v2588
    %v2592 = vmul.f32 %v2591, %v2590
    %v2593 = vmul.f32 0.5, %v2592
    %v2594 = vsub.f32 1.5, %v2593
    %v2595 = vmul.f32 %v2590, %v2594
    %vm2596 = vweird.f32 %v2588
    %vm2597 = vweird.f32 %v2590
    %vm2598 = vmor %vm2596, %vm2597
    %v2599 = vsel %vm2598, %v2590, %v2595
    %v2600 = vrsqrt.pop %v2589
    %v2601 = vmul.f32 %v2600, %v2589
    %v2602 = vmul.f32 %v2601, %v2600
    %v2603 = vmul.f32 0.5, %v2602
    %v2604 = vsub.f32 1.5, %v2603
    %v2605 = vmul.f32 %v2600, %v2604
    %vm2606 = vweird.f32 %v2589
    %vm2607 = vweird.f32 %v2600
    %vm2608 = vmor %vm2606, %vm2607
    %v2609 = vsel %vm2608, %v2600, %v2605
    %v2610 = vmul.f32 %v2576, %v2599
    %v2611 = vmul.f32 %v2577, %v2609
    %v2612 = vmul.f32 %v2610, %v2566
    %v2613 = vmul.f32 %v2611, %v2566
    %v2614 = vadd.f32 %v2612, %v2567
    %v2615 = vadd.f32 %v2613, %v2567
    %v2616 = vpack.c.bf16 %v2615, %v2614
    %s2617 = scalar_lea.vmem %s3, 64
    %v2618 = vld [vmem:[%s2617] sm:$0xff]
    %v2619 = vld [vmem:[%s2617 + $0x8] sm:$0xff]
    %v2620 = vld [vmem:[%s2617 + $0x10] sm:$0xff]
    %v2621 = vld [vmem:[%s2617 + $0x18] sm:$0xff]
    %v2622 = vld [vmem:[%s2617 + $0x20] sm:$0xff]
    %v2623 = vld [vmem:[%s2617 + $0x28] sm:$0xff]
    %v2624 = vld [vmem:[%s2617 + $0x30] sm:$0xff]
    %v2625 = vld [vmem:[%s2617 + $0x38] sm:$0xff]
    %s2626 = scalar_lea.vmem %s5, 35
    %v2627 = vld [vmem:[%s2626] ss:$8 sm:$0x3]
    %v2629 = vperm.slane %v2627, 0
    %v2630 = vperm.slane %v2627, 1
    %v2641 = vunpack.c.l.b16 %v2618
    %v2642 = vunpack.c.h.b16 %v2618
    %v2643 = vunpack.c.l.b16 %v2619
    %v2644 = vunpack.c.h.b16 %v2619
    %v2645 = vunpack.c.l.b16 %v2620
    %v2646 = vunpack.c.h.b16 %v2620
    %v2647 = vunpack.c.l.b16 %v2621
    %v2648 = vunpack.c.h.b16 %v2621
    %v2649 = vunpack.c.l.b16 %v2622
    %v2650 = vunpack.c.h.b16 %v2622
    %v2651 = vunpack.c.l.b16 %v2623
    %v2652 = vunpack.c.h.b16 %v2623
    %v2653 = vunpack.c.l.b16 %v2624
    %v2654 = vunpack.c.h.b16 %v2624
    %v2655 = vunpack.c.l.b16 %v2625
    %v2656 = vunpack.c.h.b16 %v2625
    %v2657 = vpack.c.b16 %v2643, %v2641
    %v2658 = vpack.c.b16 %v2644, %v2642
    %v2659 = vpack.c.b16 %v2647, %v2645
    %v2660 = vpack.c.b16 %v2648, %v2646
    %v2661 = vpack.c.b16 %v2651, %v2649
    %v2662 = vpack.c.b16 %v2652, %v2650
    %v2663 = vpack.c.b16 %v2655, %v2653
    %v2664 = vpack.c.b16 %v2656, %v2654
    %v2674 = vsel %vm534, %v2616, 0
    %2676 = vmatpush.bf16.msra.mxu0 0
    %2677 = vmatpush.bf16.msra.mxu0 0
    %2678 = vmatpush.bf16.msra.mxu0 0
    %2679 = vmatpush.bf16.msra.mxu0 0
    %2680 = vmatpush.bf16.msra.mxu0 %v2663
    %2681 = vmatpush.bf16.msra.mxu0 %v2661
    %2682 = vmatpush.bf16.msra.mxu0 %v2659
    %2683 = vmatpush.bf16.msra.mxu0 %v2657
    %2684 = vmatmul.bf16.gmra.mxu0 %v2674
    %v2685 = vpop.f32.mrf.mxu0
    %v2686 = vadd.f32 %v2629, %v2685
    %v2687 = vpop.f32.mrf.mxu0
    %v2688 = vadd.f32 %v2629, %v2687
    %2689 = vdwg.mxu0
    %2690 = vmatpush.bf16.msra.mxu0 0
    %2691 = vmatpush.bf16.msra.mxu0 0
    %2692 = vmatpush.bf16.msra.mxu0 0
    %2693 = vmatpush.bf16.msra.mxu0 0
    %2694 = vmatpush.bf16.msra.mxu0 %v2664
    %2695 = vmatpush.bf16.msra.mxu0 %v2662
    %2696 = vmatpush.bf16.msra.mxu0 %v2660
    %2697 = vmatpush.bf16.msra.mxu0 %v2658
    %2698 = vmatmul.bf16.gmra.mxu0 %v2674
    %v2699 = vpop.f32.mrf.mxu0
    %v2700 = vadd.f32 %v2630, %v2699
    %v2701 = vpop.f32.mrf.mxu0
    %v2702 = vadd.f32 %v2630, %v2701
    %2703 = vdwg.mxu0
    %v2704 = vmul.f32 %v2686, 0.5
    %v2705 = vmul.f32 %v2700, 0.5
    %v2706 = vmul.f32 %v2688, 0.5
    %v2707 = vmul.f32 %v2702, 0.5
    %v2708 = vmul.f32 %v2686, 0.044715
    %v2709 = vmul.f32 %v2700, 0.044715
    %v2710 = vmul.f32 %v2688, 0.044715
    %v2711 = vmul.f32 %v2702, 0.044715
    %v2712 = vmul.f32 %v2708, %v2686
    %v2713 = vmul.f32 %v2709, %v2700
    %v2714 = vmul.f32 %v2710, %v2688
    %v2715 = vmul.f32 %v2711, %v2702
    %v2716 = vmul.f32 %v2712, %v2686
    %v2717 = vmul.f32 %v2713, %v2700
    %v2718 = vmul.f32 %v2714, %v2688
    %v2719 = vmul.f32 %v2715, %v2702
    %v2720 = vadd.f32 %v2686, %v2716
    %v2721 = vadd.f32 %v2700, %v2717
    %v2722 = vadd.f32 %v2688, %v2718
    %v2723 = vadd.f32 %v2702, %v2719
    %v2724 = vmul.f32 %v2720, 0.7978846
    %v2725 = vmul.f32 %v2721, 0.7978846
    %v2726 = vmul.f32 %v2722, 0.7978846
    %v2727 = vmul.f32 %v2723, 0.7978846
    %v2728 = vtanh.pop %v2724
    %v2729 = vtanh.pop %v2725
    %v2730 = vtanh.pop %v2726
    %v2731 = vtanh.pop %v2727
    %v2732 = vadd.f32 %v2728, 1.0
    %v2733 = vadd.f32 %v2729, 1.0
    %v2734 = vadd.f32 %v2730, 1.0
    %v2735 = vadd.f32 %v2731, 1.0
    %v2736 = vmul.f32 %v2704, %v2732
    %v2737 = vmul.f32 %v2705, %v2733
    %v2738 = vmul.f32 %v2706, %v2734
    %v2739 = vmul.f32 %v2707, %v2735
    %v2740 = vpack.c.bf16 %v2738, %v2736
    %v2741 = vpack.c.bf16 %v2739, %v2737
    %s2742 = scalar_lea.vmem %s4, 128
    %v2743 = vld [vmem:[%s2742] sm:$0xf]
    %v2744 = vld [vmem:[%s2742 + $0x4] sm:$0xf]
    %v2745 = vld [vmem:[%s2742 + $0x8] sm:$0xf]
    %v2746 = vld [vmem:[%s2742 + $0xc] sm:$0xf]
    %v2747 = vld [vmem:[%s2742 + $0x10] sm:$0xf]
    %v2748 = vld [vmem:[%s2742 + $0x14] sm:$0xf]
    %v2749 = vld [vmem:[%s2742 + $0x18] sm:$0xf]
    %v2750 = vld [vmem:[%s2742 + $0x1c] sm:$0xf]
    %v2751 = vld [vmem:[%s2742 + $0x20] sm:$0xf]
    %v2752 = vld [vmem:[%s2742 + $0x24] sm:$0xf]
    %v2753 = vld [vmem:[%s2742 + $0x28] sm:$0xf]
    %v2754 = vld [vmem:[%s2742 + $0x2c] sm:$0xf]
    %v2755 = vld [vmem:[%s2742 + $0x30] sm:$0xf]
    %v2756 = vld [vmem:[%s2742 + $0x34] sm:$0xf]
    %v2757 = vld [vmem:[%s2742 + $0x38] sm:$0xf]
    %v2758 = vld [vmem:[%s2742 + $0x3c] sm:$0xf]
    %v2759 = vld [vmem:[%s2742 + $0x40] sm:$0xf]
    %v2760 = vld [vmem:[%s2742 + $0x44] sm:$0xf]
    %v2761 = vld [vmem:[%s2742 + $0x48] sm:$0xf]
    %v2762 = vld [vmem:[%s2742 + $0x4c] sm:$0xf]
    %v2763 = vld [vmem:[%s2742 + $0x50] sm:$0xf]
    %v2764 = vld [vmem:[%s2742 + $0x54] sm:$0xf]
    %v2765 = vld [vmem:[%s2742 + $0x58] sm:$0xf]
    %v2766 = vld [vmem:[%s2742 + $0x5c] sm:$0xf]
    %v2767 = vld [vmem:[%s2742 + $0x60] sm:$0xf]
    %v2768 = vld [vmem:[%s2742 + $0x64] sm:$0xf]
    %v2769 = vld [vmem:[%s2742 + $0x68] sm:$0xf]
    %v2770 = vld [vmem:[%s2742 + $0x6c] sm:$0xf]
    %v2771 = vld [vmem:[%s2742 + $0x70] sm:$0xf]
    %v2772 = vld [vmem:[%s2742 + $0x74] sm:$0xf]
    %v2773 = vld [vmem:[%s2742 + $0x78] sm:$0xf]
    %v2774 = vld [vmem:[%s2742 + $0x7c] sm:$0xf]
    %v2775 = vld [vmem:[%s5 + $0x24] ss:$0 sm:$0xff]
    %v2808 = vunpack.c.l.b16 %v2743
    %v2809 = vunpack.c.l.b16 %v2744
    %v2810 = vunpack.c.l.b16 %v2745
    %v2811 = vunpack.c.l.b16 %v2746
    %v2812 = vunpack.c.l.b16 %v2747
    %v2813 = vunpack.c.l.b16 %v2748
    %v2814 = vunpack.c.l.b16 %v2749
    %v2815 = vunpack.c.l.b16 %v2750
    %v2816 = vunpack.c.l.b16 %v2751
    %v2817 = vunpack.c.l.b16 %v2752
    %v2818 = vunpack.c.l.b16 %v2753
    %v2819 = vunpack.c.l.b16 %v2754
    %v2820 = vunpack.c.l.b16 %v2755
    %v2821 = vunpack.c.l.b16 %v2756
    %v2822 = vunpack.c.l.b16 %v2757
    %v2823 = vunpack.c.l.b16 %v2758
    %v2824 = vunpack.c.l.b16 %v2759
    %v2825 = vunpack.c.l.b16 %v2760
    %v2826 = vunpack.c.l.b16 %v2761
    %v2827 = vunpack.c.l.b16 %v2762
    %v2828 = vunpack.c.l.b16 %v2763
    %v2829 = vunpack.c.l.b16 %v2764
    %v2830 = vunpack.c.l.b16 %v2765
    %v2831 = vunpack.c.l.b16 %v2766
    %v2832 = vunpack.c.l.b16 %v2767
    %v2833 = vunpack.c.l.b16 %v2768
    %v2834 = vunpack.c.l.b16 %v2769
    %v2835 = vunpack.c.l.b16 %v2770
    %v2836 = vunpack.c.l.b16 %v2771
    %v2837 = vunpack.c.l.b16 %v2772
    %v2838 = vunpack.c.l.b16 %v2773
    %v2839 = vunpack.c.l.b16 %v2774
    %v2840 = vpack.c.b16 %v2809, %v2808
    %v2841 = vpack.c.b16 %v2811, %v2810
    %v2842 = vpack.c.b16 %v2813, %v2812
    %v2843 = vpack.c.b16 %v2815, %v2814
    %v2844 = vpack.c.b16 %v2817, %v2816
    %v2845 = vpack.c.b16 %v2819, %v2818
    %v2846 = vpack.c.b16 %v2821, %v2820
    %v2847 = vpack.c.b16 %v2823, %v2822
    %v2848 = vpack.c.b16 %v2825, %v2824
    %v2849 = vpack.c.b16 %v2827, %v2826
    %v2850 = vpack.c.b16 %v2829, %v2828
    %v2851 = vpack.c.b16 %v2831, %v2830
    %v2852 = vpack.c.b16 %v2833, %v2832
    %v2853 = vpack.c.b16 %v2835, %v2834
    %v2854 = vpack.c.b16 %v2837, %v2836
    %v2855 = vpack.c.b16 %v2839, %v2838
    %2872 = vmatpush.bf16.msra.mxu0 %v2847
    %2873 = vmatpush.bf16.msra.mxu0 %v2846
    %2874 = vmatpush.bf16.msra.mxu0 %v2845
    %2875 = vmatpush.bf16.msra.mxu0 %v2844
    %2876 = vmatpush.bf16.msra.mxu0 %v2843
    %2877 = vmatpush.bf16.msra.mxu0 %v2842
    %2878 = vmatpush.bf16.msra.mxu0 %v2841
    %2879 = vmatpush.bf16.msra.mxu0 %v2840
    %2880 = vmatmul.bf16.gmra.mxu0 %v2740
    %v2881 = vpop.f32.mrf.mxu0
    %v2882 = vadd.f32 %v2775, %v2881
    %v2883 = vpop.f32.mrf.mxu0
    %2884 = vdwg.mxu0
    %2885 = vmatpush.bf16.msra.mxu0 %v2855
    %2886 = vmatpush.bf16.msra.mxu0 %v2854
    %2887 = vmatpush.bf16.msra.mxu0 %v2853
    %2888 = vmatpush.bf16.msra.mxu0 %v2852
    %2889 = vmatpush.bf16.msra.mxu0 %v2851
    %2890 = vmatpush.bf16.msra.mxu0 %v2850
    %2891 = vmatpush.bf16.msra.mxu0 %v2849
    %2892 = vmatpush.bf16.msra.mxu0 %v2848
    %2893 = vmatmul.bf16.gmra.mxu0 %v2741
    %v2894 = vpop.f32.mrf.mxu0
    %v2895 = vadd.f32 %v2882, %v2894
    %v2896 = vpop.f32.mrf.mxu0
    %2897 = vdwg.mxu0
    %v2898 = vadd.f32 %v2564, %v2895
    %v2899 = vld [vmem:[%s5 + $0x25] ss:$0 sm:$0xff]
    %v2900 = vld [vmem:[%s5 + $0x26] ss:$0 sm:$0xff]
    %v2901 = vsel %vm534, %v2898, 0.0
    %2902 = vadd.xlane.f32.xlu0 %v2901
    %v2903 = vpop.xlane.xlu0 %2902
    %v2904 = vmul.f32 %v2903, %v548
    %v2905 = vsub.f32 %v2898, %v2904
    %v2906 = vmul.f32 %v2905, %v2905
    %v2907 = vsel %vm534, %v2906, 0.0
    %2908 = vadd.xlane.f32.xlu0 %v2907
    %v2909 = vpop.xlane.xlu0 %2908
    %v2910 = vmul.f32 %v2909, %v548
    %v2911 = vadd.f32 %v2910, 1e-06
    %v2912 = vrsqrt.pop %v2911
    %v2913 = vmul.f32 %v2912, %v2911
    %v2914 = vmul.f32 %v2913, %v2912
    %v2915 = vmul.f32 0.5, %v2914
    %v2916 = vsub.f32 1.5, %v2915
    %v2917 = vmul.f32 %v2912, %v2916
    %vm2918 = vweird.f32 %v2911
    %vm2919 = vweird.f32 %v2912
    %vm2920 = vmor %vm2918, %vm2919
    %v2921 = vsel %vm2920, %v2912, %v2917
    %v2922 = vmul.f32 %v2905, %v2921
    %v2923 = vmul.f32 %v2922, %v2899
    %v2924 = vadd.f32 %v2923, %v2900
    %v2926 = vrot.slane %v2924, 4
    %v2928 = vsel %vm518, %v2924, %v2926
    %v2929 = vld [vmem:[%s6] sm:$0xff]
    %v2930 = vld [vmem:[%s6 + $0x8] sm:$0xff]
    %v2931 = vld [vmem:[%s6 + $0x10] sm:$0xff]
    %v2932 = vld [vmem:[%s6 + $0x18] sm:$0xff]
    %v2933 = vld [vmem:[%s6 + $0x20] sm:$0xff]
    %v2934 = vld [vmem:[%s6 + $0x28] sm:$0xff]
    %v2935 = vld [vmem:[%s6 + $0x30] sm:$0xff]
    %v2936 = vld [vmem:[%s6 + $0x38] sm:$0xff]
    %v2937 = vld [vmem:[%s5 + $0x27] ss:$0 sm:$0xff]
    %v2939 = vsel %vm534, %v2928, 0
    %2941 = vmatpush.msra.mxu0 0.0
    %2942 = vmatpush.msra.mxu0 0.0
    %2943 = vmatpush.msra.mxu0 0.0
    %2944 = vmatpush.msra.mxu0 0.0
    %2945 = vmatpush.msra.mxu0 0.0
    %2946 = vmatpush.msra.mxu0 0.0
    %2947 = vmatpush.msra.mxu0 0.0
    %2948 = vmatpush.msra.mxu0 0.0
    %2949 = vmatpush.msra.mxu0 %v2936
    %2950 = vmatpush.msra.mxu0 %v2935
    %2951 = vmatpush.msra.mxu0 %v2934
    %2952 = vmatpush.msra.mxu0 %v2933
    %2953 = vmatpush.msra.mxu0 %v2932
    %2954 = vmatpush.msra.mxu0 %v2931
    %2955 = vmatpush.msra.mxu0 %v2930
    %2956 = vmatpush.msra.mxu0 %v2929
    %2957 = vmatmul.f32.gmra.mxu0 %v2939
    %v2958 = vpop.f32.mrf.mxu0
    %v2959 = vadd.f32 %v2937, %v2958
    %2960 = vdwg.mxu0
    %v2961 = vsub.f32 0.0, %v2959
    %v2962 = vmul.f32 %v2961, 1.442695
    %v2963 = vpow.pop %v2962
    %v2964 = vadd.f32 %v2963, 1.0
    %v2965 = vrcp.pop %v2964
    %v2966 = vmul.f32 %v2964, %v2965
    %v2967 = vsub.f32 1.0, %v2966
    %v2968 = vmul.f32 %v2965, %v2967
    %v2969 = vadd.f32 %v2965, %v2968
    %vm2970 = vweird.f32 %v2964
    %vm2971 = vweird.f32 %v2965
    %vm2972 = vmor %vm2970, %vm2971
    %v2973 = vsel %vm2972, %v2965, %v2969
    %v2974 = vand.u32 2147483647, %v2964
    %vm2975 = vcmp.eq.f32.partialorder %v2974, 8.507059e+37
    %v2976 = vand.u32 %v2964, 2147483648
    %v2977 = vor.u32 1.1754944e-38, %v2976
    %v2978 = vsel %vm2975, %v2977, %v2973
    %v2979 = vmul.f32 1.0, %v2978
    %v2980 = vld [vmem:[%s6 + $0x40] sm:$0xff]
    %v2981 = vld [vmem:[%s6 + $0x48] sm:$0xff]
    %v2982 = vld [vmem:[%s6 + $0x50] sm:$0xff]
    %v2983 = vld [vmem:[%s6 + $0x58] sm:$0xff]
    %v2984 = vld [vmem:[%s5 + $0x30] ss:$0 sm:$0xff]
    %v2986 = vsel %vm1004, %v2979, 0
    %2988 = vmatpush.msra.mxu0 0.0
    %2989 = vmatpush.msra.mxu0 0.0
    %2990 = vmatpush.msra.mxu0 0.0
    %2991 = vmatpush.msra.mxu0 0.0
    %2992 = vmatpush.msra.mxu0 0.0
    %2993 = vmatpush.msra.mxu0 0.0
    %2994 = vmatpush.msra.mxu0 0.0
    %2995 = vmatpush.msra.mxu0 0.0
    %2996 = vmatpush.msra.mxu0 0.0
    %2997 = vmatpush.msra.mxu0 0.0
    %2998 = vmatpush.msra.mxu0 0.0
    %2999 = vmatpush.msra.mxu0 0.0
    %3000 = vmatpush.msra.mxu0 %v2983
    %3001 = vmatpush.msra.mxu0 %v2982
    %3002 = vmatpush.msra.mxu0 %v2981
    %3003 = vmatpush.msra.mxu0 %v2980
    %3004 = vmatmul.f32.gmra.mxu0 %v2986
    %v3005 = vpop.f32.mrf.mxu0
    %v3006 = vadd.f32 %v2984, %v3005
    %3007 = vdwg.mxu0
    %vm3008 = vcmask 58368
    %3009 = vst.msk [vmem:[#allocation2] sm:$0x3] %vm3008, %v3006
    // Predicated region
    $region30: #{vit_feature_extractor.1} parent=1 // pred_check
      _
    $region31: #{vit_feature_extractor.1} parent=1 // pred_check_branch
      %3011 = sbr.rel (0) target = $region33
    $region32: #{vit_feature_extractor.1} parent=1 // pred_region
      %3013 = vsyncadd [#allocation3], 0
      %s3015 = sshll.u32 [#allocation2], 4
      %s3016 = int_to_ptr.vmem [resolvable:$true] %s3015
      %s3017 = sshll.u32 %s7, 4
      %s3018 = int_to_ptr.hbm [resolvable:$true] %s3017
      %3020 = dma.vmem_to_hbm [thread:$0]  %s3016, 32, %s3018, [#allocation3]
    $region33: #{vit_feature_extractor.1} parent=1 // pred_fallthru
      _
    // Predicated region
    $region34: #{vit_feature_extractor.1} parent=1 // pred_check
      _
    $region35: #{vit_feature_extractor.1} parent=1 // pred_check_branch
      %3022 = sbr.rel (0) target = $region37
    $region36: #{vit_feature_extractor.1} parent=1 // pred_region
      %3024 = dma.done [#allocation3], 32
    $region37: #{vit_feature_extractor.1} parent=1 // pred_fallthru
      _
    %3025 = vsyncpa [#allocation3], 1

</llo_original>
